<compile_context>
chip_gen: v7x
topology: tpu7x:2x2x1
jax: 0.10.0
libtpu: 0.0.40
codegen_flags: <defaults>
</compile_context>

<pallas_src>
import functools

import jax
import jax.numpy as jnp
from jax.experimental import pallas as pl
from jax.experimental.pallas import tpu as pltpu

# ---- small, module-consistent config ----
B = 2            # batch
T = 8            # sequence_length
X = 2            # crops per frame -> num_features = embed_size * 2
C, H, W = 3, 16, 16
EMBED = 64       # embed_size (scaled down from 512)
NF = EMBED * X   # num_features = 128
POSE = 106       # pose feature size (from "106 + num_features")
NCLS = 29        # num_classes
LANE = 128


# --------------------------- fused forward kernel ---------------------------
def _lstm_hcp_kernel(imgs_ref, pose_ref,
                     w_fe_ref, b_fe_ref,
                     w_bm_z_ref, w_bm_p_ref, b_bm_ref,
                     w_ih_ref, w_hh_ref, b_ih_ref, b_hh_ref,
                     w_cls_ref, b_cls_ref,
                     o_ref,
                     gx_ref,
                     *, d_norm):
    batch, seq, gdim = gx_ref.shape
    nf = w_hh_ref.shape[0]

    # 1) feature extractor (stand-in linear), lane-dense (B*T, X*EMBED).
    # TODO(synk): the pretrained ResNet-34 FeatureExtractor is not defined in
    # the reference source; replaced by a per-image linear projection.
    z = (jnp.dot(imgs_ref[...], w_fe_ref[...],
                 preferred_element_type=jnp.float32)
         + b_fe_ref[...])                                    # (B*T, NF)

    # 2) MMTensor(-1) over the virtual concat [z | pose] + bottle_mm + ReLU.
    # pose is zero-padded on the lane dim; padded columns contribute 0 to the
    # sums and hit zero rows of w_bm_p, so numerics match the true concat.
    pose = pose_ref[...]                                     # (B*T, POSE_PAD)
    s = (jnp.sum(z, axis=-1, keepdims=True)
         + jnp.sum(pose, axis=-1, keepdims=True))
    sq = (jnp.sum(z * z, axis=-1, keepdims=True)
          + jnp.sum(pose * pose, axis=-1, keepdims=True))
    mean = s / d_norm
    var = (sq - d_norm * mean * mean) / (d_norm - 1.0)       # unbiased (torch.std)
    inv_std = jax.lax.rsqrt(var + 1e-12)                     # EUP rsqrt; eps guards var==0
    zn = (z - mean) * inv_std
    pn = (pose - mean) * inv_std
    h_in = (jnp.dot(zn, w_bm_z_ref[...], preferred_element_type=jnp.float32)
            + jnp.dot(pn, w_bm_p_ref[...], preferred_element_type=jnp.float32)
            + b_bm_ref[...])
    h_in = jnp.maximum(h_in, 0.0)                            # (B*T, NF)

    # 3) LSTM — hoist the input projection out of the recurrence.
    gates_x = (jnp.dot(h_in, w_ih_ref[...], preferred_element_type=jnp.float32)
               + b_ih_ref[...] + b_hh_ref[...])              # (B*T, 4*NF)
    gx_ref[...] = gates_x.reshape(batch, seq, gdim)          # tile-aligned split

    h = jnp.zeros((batch, nf), jnp.float32)
    c = jnp.zeros((batch, nf), jnp.float32)
    for t in range(seq):                                     # static unroll over time
        gates = gx_ref[:, t, :] + jnp.dot(h, w_hh_ref[...],
                                          preferred_element_type=jnp.float32)
        # PyTorch LSTM gate order: i, f, g, o
        i = jax.nn.sigmoid(gates[:, 0 * nf:1 * nf])
        f = jax.nn.sigmoid(gates[:, 1 * nf:2 * nf])
        g = jnp.tanh(gates[:, 2 * nf:3 * nf])
        o = jax.nn.sigmoid(gates[:, 3 * nf:4 * nf])
        c = f * c + i * g
        h = o * jnp.tanh(c)

    # 4) classifier on last hidden (dropout=0 -> identity); lane-padded output.
    o_ref[...] = (jnp.dot(h, w_cls_ref[...], preferred_element_type=jnp.float32)
                  + b_cls_ref[...])


# ------------------------- one-time weight packing --------------------------
def pack_params(params, num_crops, lane=LANE):
    """Repack raw (in, out)-layout weights into kernel-ready lane-aligned form."""
    w_fe = params["w_fe"]                      # (CHW, EMBED)
    b_fe = params["b_fe"].reshape(1, -1)       # (1, EMBED)
    nf = num_crops * w_fe.shape[1]
    # Block-diagonal feature weight: a single (B*T, X*CHW) x (X*CHW, X*EMBED)
    # matmul writes per-frame crop features lane-dense, no in-kernel reshape.
    w_fe_blk = jnp.kron(jnp.eye(num_crops, dtype=w_fe.dtype), w_fe)
    b_fe_blk = jnp.tile(b_fe, (1, num_crops))

    w_bm = params["w_bm"]                      # (NF + POSE, NF)
    pose_dim = w_bm.shape[0] - nf
    pose_pad = ((pose_dim + lane - 1) // lane) * lane
    w_bm_z = w_bm[:nf]
    w_bm_p = jnp.zeros((pose_pad, w_bm.shape[1]), w_bm.dtype)
    w_bm_p = w_bm_p.at[:pose_dim].set(w_bm[nf:])

    w_cls = params["w_cls"]                    # (NF, NCLS)
    ncls = w_cls.shape[1]
    ncls_pad = ((ncls + lane - 1) // lane) * lane
    w_cls_pad = jnp.zeros((w_cls.shape[0], ncls_pad), w_cls.dtype)
    w_cls_pad = w_cls_pad.at[:, :ncls].set(w_cls)
    b_cls_pad = jnp.zeros((1, ncls_pad), w_cls.dtype)
    b_cls_pad = b_cls_pad.at[:, :ncls].set(params["b_cls"].reshape(1, -1))

    return {
        "w_fe": w_fe_blk, "b_fe": b_fe_blk,
        "w_bm_z": w_bm_z, "w_bm_p": w_bm_p,
        "b_bm": params["b_bm"].reshape(1, -1),
        "w_ih": params["w_ih"], "w_hh": params["w_hh"],
        "b_ih": params["b_ih"].reshape(1, -1),
        "b_hh": params["b_hh"].reshape(1, -1),
        "w_cls": w_cls_pad, "b_cls": b_cls_pad,
    }


# ------------------------------ forward glue --------------------------------
@functools.partial(jax.jit, static_argnames=("num_classes",))
def lstm_hcp_forward(rgb_clip, pose_clip, packed, num_classes):
    b, t, x, c, hh, ww = rgb_clip.shape
    nf = packed["w_hh"].shape[0]
    ncls_pad = packed["w_cls"].shape[1]
    pose_pad = packed["w_bm_p"].shape[0]
    pose_dim = pose_clip.shape[-1]
    d_norm = float(nf + pose_dim)              # true (unpadded) concat width

    # rgb_clip.view(b, t*x, c, h, w): rows ordered (b, t), crops on the lane dim
    imgs = rgb_clip.reshape(b * t, x * c * hh * ww)          # (B*T, X*CHW)
    pose = pose_clip.reshape(b * t, pose_dim)
    if pose_pad != pose_dim:
        pose = jnp.pad(pose, ((0, 0), (0, pose_pad - pose_dim)))

    kernel = functools.partial(_lstm_hcp_kernel, d_norm=d_norm)
    vmem = lambda: pl.BlockSpec(memory_space=pltpu.MemorySpace.VMEM)

    y_pad = pl.pallas_call(
        kernel,
        out_shape=jax.ShapeDtypeStruct((b, ncls_pad), jnp.float32),
        in_specs=[vmem() for _ in range(13)],
        out_specs=vmem(),
        scratch_shapes=[pltpu.VMEM((b, t, 4 * nf), jnp.float32)],
    )(imgs, pose,
      packed["w_fe"], packed["b_fe"],
      packed["w_bm_z"], packed["w_bm_p"], packed["b_bm"],
      packed["w_ih"], packed["w_hh"], packed["b_ih"], packed["b_hh"],
      packed["w_cls"], packed["b_cls"])

    return y_pad[:, :num_classes]              # drop classifier lane padding


if __name__ == "__main__":
    key = jax.random.PRNGKey(0)
    ks = jax.random.split(key, 12)

    rgb_clip = jax.random.normal(ks[0], (B, T, X, C, H, W), jnp.float32)
    pose_clip = jax.random.normal(ks[1], (B, T, POSE), jnp.float32)

    CHW = C * H * W
    DIN = NF + POSE
    params = {
        "w_fe": jax.random.normal(ks[2], (CHW, EMBED), jnp.float32)
        / jnp.sqrt(CHW),
        "b_fe": jax.random.normal(ks[3], (1, EMBED), jnp.float32) * 0.01,
        "w_bm": jax.random.normal(ks[4], (DIN, NF), jnp.float32)
        / jnp.sqrt(DIN),
        "b_bm": jax.random.normal(ks[5], (1, NF), jnp.float32) * 0.01,
        "w_ih": jax.random.normal(ks[6], (NF, 4 * NF), jnp.float32)
        / jnp.sqrt(NF),
        "w_hh": jax.random.normal(ks[7], (NF, 4 * NF), jnp.float32)
        / jnp.sqrt(NF),
        "b_ih": jax.random.normal(ks[8], (1, 4 * NF), jnp.float32) * 0.01,
        "b_hh": jax.random.normal(ks[9], (1, 4 * NF), jnp.float32) * 0.01,
        "w_cls": jax.random.normal(ks[10], (NF, NCLS), jnp.float32)
        / jnp.sqrt(NF),
        "b_cls": jax.random.normal(ks[11], (1, NCLS), jnp.float32) * 0.01,
    }

    packed = pack_params(params, num_crops=X)
    y = lstm_hcp_forward(rgb_clip, pose_clip, packed, num_classes=NCLS)
    jax.block_until_ready(y)
    assert y.shape == (B, NCLS) and y.dtype == jnp.float32
    print("KERNEL_OK")
</pallas_src>

<mosaic_0001>
module attributes {stable_mosaic.version = 11 : i64} {
  func.func @_lstm_hcp_kernel(%arg0: memref<16x1536xf32, #tpu.memory_space<vmem>>, %arg1: memref<16x128xf32, #tpu.memory_space<vmem>>, %arg2: memref<1536x128xf32, #tpu.memory_space<vmem>>, %arg3: memref<1x128xf32, #tpu.memory_space<vmem>>, %arg4: memref<128x128xf32, #tpu.memory_space<vmem>>, %arg5: memref<128x128xf32, #tpu.memory_space<vmem>>, %arg6: memref<1x128xf32, #tpu.memory_space<vmem>>, %arg7: memref<128x512xf32, #tpu.memory_space<vmem>>, %arg8: memref<128x512xf32, #tpu.memory_space<vmem>>, %arg9: memref<1x512xf32, #tpu.memory_space<vmem>>, %arg10: memref<1x512xf32, #tpu.memory_space<vmem>>, %arg11: memref<128x128xf32, #tpu.memory_space<vmem>>, %arg12: memref<1x128xf32, #tpu.memory_space<vmem>>, %arg13: memref<2x128xf32, #tpu.memory_space<vmem>>, %arg14: memref<2x8x512xf32, #tpu.memory_space<vmem>>) attributes {dimension_semantics = [], scalar_prefetch = 0 : i64, scratch_operands = 1 : i64, tpu.core_type = #tpu.core_type<tc>} {
    %c0 = arith.constant 0 : index
    %c0_0 = arith.constant 0 : index
    %0 = vector.load %arg0[%c0, %c0_0] : memref<16x1536xf32, #tpu.memory_space<vmem>>, vector<16x1536xf32>
    %c0_1 = arith.constant 0 : index
    %c0_2 = arith.constant 0 : index
    %1 = vector.load %arg2[%c0_1, %c0_2] : memref<1536x128xf32, #tpu.memory_space<vmem>>, vector<1536x128xf32>
    %cst = arith.constant dense<0.000000e+00> : vector<16x128xf32>
    %2 = tpu.matmul %0, %1, %cst {dimension_numbers = #tpu.dot_dimension_numbers<[1], [0], [0], [1], [0, 0, 1, 1], [], []>} : vector<16x1536xf32>, vector<1536x128xf32>, vector<16x128xf32> -> vector<16x128xf32>
    %c0_3 = arith.constant 0 : index
    %c0_4 = arith.constant 0 : index
    %3 = vector.load %arg3[%c0_3, %c0_4] : memref<1x128xf32, #tpu.memory_space<vmem>>, vector<1x128xf32>
    %4 = vector.broadcast %3 : vector<1x128xf32> to vector<16x128xf32>
    %5 = arith.addf %2, %4 : vector<16x128xf32>
    %c0_5 = arith.constant 0 : index
    %c0_6 = arith.constant 0 : index
    %6 = vector.load %arg1[%c0_5, %c0_6] : memref<16x128xf32, #tpu.memory_space<vmem>>, vector<16x128xf32>
    %cst_7 = arith.constant dense<0.000000e+00> : vector<16xf32>
    %7 = vector.multi_reduction <add>, %5, %cst_7 [1] : vector<16x128xf32> to vector<16xf32>
    %8 = vector.shape_cast %7 : vector<16xf32> to vector<16x1xf32>
    %cst_8 = arith.constant dense<0.000000e+00> : vector<16xf32>
    %9 = vector.multi_reduction <add>, %6, %cst_8 [1] : vector<16x128xf32> to vector<16xf32>
    %10 = vector.shape_cast %9 : vector<16xf32> to vector<16x1xf32>
    %11 = arith.addf %8, %10 : vector<16x1xf32>
    %12 = arith.mulf %5, %5 : vector<16x128xf32>
    %cst_9 = arith.constant dense<0.000000e+00> : vector<16xf32>
    %13 = vector.multi_reduction <add>, %12, %cst_9 [1] : vector<16x128xf32> to vector<16xf32>
    %14 = vector.shape_cast %13 : vector<16xf32> to vector<16x1xf32>
    %15 = arith.mulf %6, %6 : vector<16x128xf32>
    %cst_10 = arith.constant dense<0.000000e+00> : vector<16xf32>
    %16 = vector.multi_reduction <add>, %15, %cst_10 [1] : vector<16x128xf32> to vector<16xf32>
    %17 = vector.shape_cast %16 : vector<16xf32> to vector<16x1xf32>
    %18 = arith.addf %14, %17 : vector<16x1xf32>
    %cst_11 = arith.constant 2.340000e+02 : f32
    %19 = vector.broadcast %cst_11 : f32 to vector<16x1xf32>
    %20 = arith.divf %11, %19 : vector<16x1xf32>
    %cst_12 = arith.constant 2.340000e+02 : f32
    %21 = vector.broadcast %cst_12 : f32 to vector<16x1xf32>
    %22 = arith.mulf %21, %20 : vector<16x1xf32>
    %23 = arith.mulf %22, %20 : vector<16x1xf32>
    %24 = arith.subf %18, %23 : vector<16x1xf32>
    %cst_13 = arith.constant 2.330000e+02 : f32
    %25 = vector.broadcast %cst_13 : f32 to vector<16x1xf32>
    %26 = arith.divf %24, %25 : vector<16x1xf32>
    %cst_14 = arith.constant 9.99999996E-13 : f32
    %27 = vector.broadcast %cst_14 : f32 to vector<16x1xf32>
    %28 = arith.addf %26, %27 : vector<16x1xf32>
    %29 = math.rsqrt %28 : vector<16x1xf32>
    %30 = vector.broadcast %20 : vector<16x1xf32> to vector<16x128xf32>
    %31 = arith.subf %5, %30 : vector<16x128xf32>
    %32 = vector.broadcast %29 : vector<16x1xf32> to vector<16x128xf32>
    %33 = arith.mulf %31, %32 : vector<16x128xf32>
    %34 = vector.broadcast %20 : vector<16x1xf32> to vector<16x128xf32>
    %35 = arith.subf %6, %34 : vector<16x128xf32>
    %36 = vector.broadcast %29 : vector<16x1xf32> to vector<16x128xf32>
    %37 = arith.mulf %35, %36 : vector<16x128xf32>
    %c0_15 = arith.constant 0 : index
    %c0_16 = arith.constant 0 : index
    %38 = vector.load %arg4[%c0_15, %c0_16] : memref<128x128xf32, #tpu.memory_space<vmem>>, vector<128x128xf32>
    %cst_17 = arith.constant dense<0.000000e+00> : vector<16x128xf32>
    %39 = tpu.matmul %33, %38, %cst_17 {dimension_numbers = #tpu.dot_dimension_numbers<[1], [0], [0], [1], [0, 0, 1, 1], [], []>} : vector<16x128xf32>, vector<128x128xf32>, vector<16x128xf32> -> vector<16x128xf32>
    %c0_18 = arith.constant 0 : index
    %c0_19 = arith.constant 0 : index
    %40 = vector.load %arg5[%c0_18, %c0_19] : memref<128x128xf32, #tpu.memory_space<vmem>>, vector<128x128xf32>
    %cst_20 = arith.constant dense<0.000000e+00> : vector<16x128xf32>
    %41 = tpu.matmul %37, %40, %cst_20 {dimension_numbers = #tpu.dot_dimension_numbers<[1], [0], [0], [1], [0, 0, 1, 1], [], []>} : vector<16x128xf32>, vector<128x128xf32>, vector<16x128xf32> -> vector<16x128xf32>
    %42 = arith.addf %39, %41 : vector<16x128xf32>
    %c0_21 = arith.constant 0 : index
    %c0_22 = arith.constant 0 : index
    %43 = vector.load %arg6[%c0_21, %c0_22] : memref<1x128xf32, #tpu.memory_space<vmem>>, vector<1x128xf32>
    %44 = vector.broadcast %43 : vector<1x128xf32> to vector<16x128xf32>
    %45 = arith.addf %42, %44 : vector<16x128xf32>
    %cst_23 = arith.constant 0.000000e+00 : f32
    %46 = vector.broadcast %cst_23 : f32 to vector<16x128xf32>
    %47 = arith.maximumf %45, %46 : vector<16x128xf32>
    %c0_24 = arith.constant 0 : index
    %c0_25 = arith.constant 0 : index
    %48 = vector.load %arg7[%c0_24, %c0_25] : memref<128x512xf32, #tpu.memory_space<vmem>>, vector<128x512xf32>
    %cst_26 = arith.constant dense<0.000000e+00> : vector<16x512xf32>
    %49 = tpu.matmul %47, %48, %cst_26 {dimension_numbers = #tpu.dot_dimension_numbers<[1], [0], [0], [1], [0, 0, 1, 1], [], []>} : vector<16x128xf32>, vector<128x512xf32>, vector<16x512xf32> -> vector<16x512xf32>
    %c0_27 = arith.constant 0 : index
    %c0_28 = arith.constant 0 : index
    %50 = vector.load %arg9[%c0_27, %c0_28] : memref<1x512xf32, #tpu.memory_space<vmem>>, vector<1x512xf32>
    %51 = vector.broadcast %50 : vector<1x512xf32> to vector<16x512xf32>
    %52 = arith.addf %49, %51 : vector<16x512xf32>
    %c0_29 = arith.constant 0 : index
    %c0_30 = arith.constant 0 : index
    %53 = vector.load %arg10[%c0_29, %c0_30] : memref<1x512xf32, #tpu.memory_space<vmem>>, vector<1x512xf32>
    %54 = vector.broadcast %53 : vector<1x512xf32> to vector<16x512xf32>
    %55 = arith.addf %52, %54 : vector<16x512xf32>
    %56 = vector.shape_cast %55 : vector<16x512xf32> to vector<2x8x512xf32>
    %c0_31 = arith.constant 0 : index
    %c0_32 = arith.constant 0 : index
    %c0_33 = arith.constant 0 : index
    %57 = vector.load %arg14[%c0_31, %c0_32, %c0_33] : memref<2x8x512xf32, #tpu.memory_space<vmem>>, vector<2x8x512xf32>
    tpu.vector_store %arg14[%c0_31, %c0_32, %c0_33], %56 {strides = array<i32>} : memref<2x8x512xf32, #tpu.memory_space<vmem>>, vector<2x8x512xf32>,
    %cst_34 = arith.constant 0.000000e+00 : f32
    %58 = vector.broadcast %cst_34 : f32 to vector<2x128xf32>
    %cst_35 = arith.constant 0.000000e+00 : f32
    %59 = vector.broadcast %cst_35 : f32 to vector<2x128xf32>
    %c0_36 = arith.constant 0 : index
    %c0_37 = arith.constant 0 : index
    %c0_38 = arith.constant 0 : index
    %60 = vector.load %arg14[%c0_36, %c0_37, %c0_38] : memref<2x8x512xf32, #tpu.memory_space<vmem>>, vector<2x1x512xf32>
    %61 = vector.shape_cast %60 : vector<2x1x512xf32> to vector<2x512xf32>
    %c0_39 = arith.constant 0 : index
    %c0_40 = arith.constant 0 : index
    %62 = vector.load %arg8[%c0_39, %c0_40] : memref<128x512xf32, #tpu.memory_space<vmem>>, vector<128x512xf32>
    %cst_41 = arith.constant dense<0.000000e+00> : vector<2x512xf32>
    %63 = tpu.matmul %58, %62, %cst_41 {dimension_numbers = #tpu.dot_dimension_numbers<[1], [0], [0], [1], [0, 0, 1, 1], [], []>} : vector<2x128xf32>, vector<128x512xf32>, vector<2x512xf32> -> vector<2x512xf32>
    %64 = arith.addf %61, %63 : vector<2x512xf32>
    %65 = vector.extract_strided_slice %64 {offsets = [0, 0], sizes = [2, 128], strides = [1, 1]} : vector<2x512xf32> to vector<2x128xf32>
    %66 = arith.negf %65 : vector<2x128xf32>
    %67 = math.exp %66 : vector<2x128xf32>
    %cst_42 = arith.constant 1.000000e+00 : f32
    %68 = vector.broadcast %cst_42 : f32 to vector<2x128xf32>
    %69 = arith.addf %68, %67 : vector<2x128xf32>
    %70 = arith.divf %68, %69 : vector<2x128xf32>
    %71 = vector.extract_strided_slice %64 {offsets = [0, 128], sizes = [2, 128], strides = [1, 1]} : vector<2x512xf32> to vector<2x128xf32>
    %72 = arith.negf %71 : vector<2x128xf32>
    %73 = math.exp %72 : vector<2x128xf32>
    %cst_43 = arith.constant 1.000000e+00 : f32
    %74 = vector.broadcast %cst_43 : f32 to vector<2x128xf32>
    %75 = arith.addf %74, %73 : vector<2x128xf32>
    %76 = arith.divf %74, %75 : vector<2x128xf32>
    %77 = vector.extract_strided_slice %64 {offsets = [0, 256], sizes = [2, 128], strides = [1, 1]} : vector<2x512xf32> to vector<2x128xf32>
    %78 = math.tanh %77 : vector<2x128xf32>
    %79 = vector.extract_strided_slice %64 {offsets = [0, 384], sizes = [2, 128], strides = [1, 1]} : vector<2x512xf32> to vector<2x128xf32>
    %80 = arith.negf %79 : vector<2x128xf32>
    %81 = math.exp %80 : vector<2x128xf32>
    %cst_44 = arith.constant 1.000000e+00 : f32
    %82 = vector.broadcast %cst_44 : f32 to vector<2x128xf32>
    %83 = arith.addf %82, %81 : vector<2x128xf32>
    %84 = arith.divf %82, %83 : vector<2x128xf32>
    %85 = arith.mulf %76, %59 : vector<2x128xf32>
    %86 = arith.mulf %70, %78 : vector<2x128xf32>
    %87 = arith.addf %85, %86 : vector<2x128xf32>
    %88 = math.tanh %87 : vector<2x128xf32>
    %89 = arith.mulf %84, %88 : vector<2x128xf32>
    %c0_45 = arith.constant 0 : index
    %c1 = arith.constant 1 : index
    %c0_46 = arith.constant 0 : index
    %90 = vector.load %arg14[%c0_45, %c1, %c0_46] : memref<2x8x512xf32, #tpu.memory_space<vmem>>, vector<2x1x512xf32>
    %91 = vector.shape_cast %90 : vector<2x1x512xf32> to vector<2x512xf32>
    %c0_47 = arith.constant 0 : index
    %c0_48 = arith.constant 0 : index
    %92 = vector.load %arg8[%c0_47, %c0_48] : memref<128x512xf32, #tpu.memory_space<vmem>>, vector<128x512xf32>
    %cst_49 = arith.constant dense<0.000000e+00> : vector<2x512xf32>
    %93 = tpu.matmul %89, %92, %cst_49 {dimension_numbers = #tpu.dot_dimension_numbers<[1], [0], [0], [1], [0, 0, 1, 1], [], []>} : vector<2x128xf32>, vector<128x512xf32>, vector<2x512xf32> -> vector<2x512xf32>
    %94 = arith.addf %91, %93 : vector<2x512xf32>
    %95 = vector.extract_strided_slice %94 {offsets = [0, 0], sizes = [2, 128], strides = [1, 1]} : vector<2x512xf32> to vector<2x128xf32>
    %96 = arith.negf %95 : vector<2x128xf32>
    %97 = math.exp %96 : vector<2x128xf32>
    %cst_50 = arith.constant 1.000000e+00 : f32
    %98 = vector.broadcast %cst_50 : f32 to vector<2x128xf32>
    %99 = arith.addf %98, %97 : vector<2x128xf32>
    %100 = arith.divf %98, %99 : vector<2x128xf32>
    %101 = vector.extract_strided_slice %94 {offsets = [0, 128], sizes = [2, 128], strides = [1, 1]} : vector<2x512xf32> to vector<2x128xf32>
    %102 = arith.negf %101 : vector<2x128xf32>
    %103 = math.exp %102 : vector<2x128xf32>
    %cst_51 = arith.constant 1.000000e+00 : f32
    %104 = vector.broadcast %cst_51 : f32 to vector<2x128xf32>
    %105 = arith.addf %104, %103 : vector<2x128xf32>
    %106 = arith.divf %104, %105 : vector<2x128xf32>
    %107 = vector.extract_strided_slice %94 {offsets = [0, 256], sizes = [2, 128], strides = [1, 1]} : vector<2x512xf32> to vector<2x128xf32>
    %108 = math.tanh %107 : vector<2x128xf32>
    %109 = vector.extract_strided_slice %94 {offsets = [0, 384], sizes = [2, 128], strides = [1, 1]} : vector<2x512xf32> to vector<2x128xf32>
    %110 = arith.negf %109 : vector<2x128xf32>
    %111 = math.exp %110 : vector<2x128xf32>
    %cst_52 = arith.constant 1.000000e+00 : f32
    %112 = vector.broadcast %cst_52 : f32 to vector<2x128xf32>
    %113 = arith.addf %112, %111 : vector<2x128xf32>
    %114 = arith.divf %112, %113 : vector<2x128xf32>
    %115 = arith.mulf %106, %87 : vector<2x128xf32>
    %116 = arith.mulf %100, %108 : vector<2x128xf32>
    %117 = arith.addf %115, %116 : vector<2x128xf32>
    %118 = math.tanh %117 : vector<2x128xf32>
    %119 = arith.mulf %114, %118 : vector<2x128xf32>
    %c0_53 = arith.constant 0 : index
    %c2 = arith.constant 2 : index
    %c0_54 = arith.constant 0 : index
    %120 = vector.load %arg14[%c0_53, %c2, %c0_54] : memref<2x8x512xf32, #tpu.memory_space<vmem>>, vector<2x1x512xf32>
    %121 = vector.shape_cast %120 : vector<2x1x512xf32> to vector<2x512xf32>
    %c0_55 = arith.constant 0 : index
    %c0_56 = arith.constant 0 : index
    %122 = vector.load %arg8[%c0_55, %c0_56] : memref<128x512xf32, #tpu.memory_space<vmem>>, vector<128x512xf32>
    %cst_57 = arith.constant dense<0.000000e+00> : vector<2x512xf32>
    %123 = tpu.matmul %119, %122, %cst_57 {dimension_numbers = #tpu.dot_dimension_numbers<[1], [0], [0], [1], [0, 0, 1, 1], [], []>} : vector<2x128xf32>, vector<128x512xf32>, vector<2x512xf32> -> vector<2x512xf32>
    %124 = arith.addf %121, %123 : vector<2x512xf32>
    %125 = vector.extract_strided_slice %124 {offsets = [0, 0], sizes = [2, 128], strides = [1, 1]} : vector<2x512xf32> to vector<2x128xf32>
    %126 = arith.negf %125 : vector<2x128xf32>
    %127 = math.exp %126 : vector<2x128xf32>
    %cst_58 = arith.constant 1.000000e+00 : f32
    %128 = vector.broadcast %cst_58 : f32 to vector<2x128xf32>
    %129 = arith.addf %128, %127 : vector<2x128xf32>
    %130 = arith.divf %128, %129 : vector<2x128xf32>
    %131 = vector.extract_strided_slice %124 {offsets = [0, 128], sizes = [2, 128], strides = [1, 1]} : vector<2x512xf32> to vector<2x128xf32>
    %132 = arith.negf %131 : vector<2x128xf32>
    %133 = math.exp %132 : vector<2x128xf32>
    %cst_59 = arith.constant 1.000000e+00 : f32
    %134 = vector.broadcast %cst_59 : f32 to vector<2x128xf32>
    %135 = arith.addf %134, %133 : vector<2x128xf32>
    %136 = arith.divf %134, %135 : vector<2x128xf32>
    %137 = vector.extract_strided_slice %124 {offsets = [0, 256], sizes = [2, 128], strides = [1, 1]} : vector<2x512xf32> to vector<2x128xf32>
    %138 = math.tanh %137 : vector<2x128xf32>
    %139 = vector.extract_strided_slice %124 {offsets = [0, 384], sizes = [2, 128], strides = [1, 1]} : vector<2x512xf32> to vector<2x128xf32>
    %140 = arith.negf %139 : vector<2x128xf32>
    %141 = math.exp %140 : vector<2x128xf32>
    %cst_60 = arith.constant 1.000000e+00 : f32
    %142 = vector.broadcast %cst_60 : f32 to vector<2x128xf32>
    %143 = arith.addf %142, %141 : vector<2x128xf32>
    %144 = arith.divf %142, %143 : vector<2x128xf32>
    %145 = arith.mulf %136, %117 : vector<2x128xf32>
    %146 = arith.mulf %130, %138 : vector<2x128xf32>
    %147 = arith.addf %145, %146 : vector<2x128xf32>
    %148 = math.tanh %147 : vector<2x128xf32>
    %149 = arith.mulf %144, %148 : vector<2x128xf32>
    %c0_61 = arith.constant 0 : index
    %c3 = arith.constant 3 : index
    %c0_62 = arith.constant 0 : index
    %150 = vector.load %arg14[%c0_61, %c3, %c0_62] : memref<2x8x512xf32, #tpu.memory_space<vmem>>, vector<2x1x512xf32>
    %151 = vector.shape_cast %150 : vector<2x1x512xf32> to vector<2x512xf32>
    %c0_63 = arith.constant 0 : index
    %c0_64 = arith.constant 0 : index
    %152 = vector.load %arg8[%c0_63, %c0_64] : memref<128x512xf32, #tpu.memory_space<vmem>>, vector<128x512xf32>
    %cst_65 = arith.constant dense<0.000000e+00> : vector<2x512xf32>
    %153 = tpu.matmul %149, %152, %cst_65 {dimension_numbers = #tpu.dot_dimension_numbers<[1], [0], [0], [1], [0, 0, 1, 1], [], []>} : vector<2x128xf32>, vector<128x512xf32>, vector<2x512xf32> -> vector<2x512xf32>
    %154 = arith.addf %151, %153 : vector<2x512xf32>
    %155 = vector.extract_strided_slice %154 {offsets = [0, 0], sizes = [2, 128], strides = [1, 1]} : vector<2x512xf32> to vector<2x128xf32>
    %156 = arith.negf %155 : vector<2x128xf32>
    %157 = math.exp %156 : vector<2x128xf32>
    %cst_66 = arith.constant 1.000000e+00 : f32
    %158 = vector.broadcast %cst_66 : f32 to vector<2x128xf32>
    %159 = arith.addf %158, %157 : vector<2x128xf32>
    %160 = arith.divf %158, %159 : vector<2x128xf32>
    %161 = vector.extract_strided_slice %154 {offsets = [0, 128], sizes = [2, 128], strides = [1, 1]} : vector<2x512xf32> to vector<2x128xf32>
    %162 = arith.negf %161 : vector<2x128xf32>
    %163 = math.exp %162 : vector<2x128xf32>
    %cst_67 = arith.constant 1.000000e+00 : f32
    %164 = vector.broadcast %cst_67 : f32 to vector<2x128xf32>
    %165 = arith.addf %164, %163 : vector<2x128xf32>
    %166 = arith.divf %164, %165 : vector<2x128xf32>
    %167 = vector.extract_strided_slice %154 {offsets = [0, 256], sizes = [2, 128], strides = [1, 1]} : vector<2x512xf32> to vector<2x128xf32>
    %168 = math.tanh %167 : vector<2x128xf32>
    %169 = vector.extract_strided_slice %154 {offsets = [0, 384], sizes = [2, 128], strides = [1, 1]} : vector<2x512xf32> to vector<2x128xf32>
    %170 = arith.negf %169 : vector<2x128xf32>
    %171 = math.exp %170 : vector<2x128xf32>
    %cst_68 = arith.constant 1.000000e+00 : f32
    %172 = vector.broadcast %cst_68 : f32 to vector<2x128xf32>
    %173 = arith.addf %172, %171 : vector<2x128xf32>
    %174 = arith.divf %172, %173 : vector<2x128xf32>
    %175 = arith.mulf %166, %147 : vector<2x128xf32>
    %176 = arith.mulf %160, %168 : vector<2x128xf32>
    %177 = arith.addf %175, %176 : vector<2x128xf32>
    %178 = math.tanh %177 : vector<2x128xf32>
    %179 = arith.mulf %174, %178 : vector<2x128xf32>
    %c0_69 = arith.constant 0 : index
    %c4 = arith.constant 4 : index
    %c0_70 = arith.constant 0 : index
    %180 = vector.load %arg14[%c0_69, %c4, %c0_70] : memref<2x8x512xf32, #tpu.memory_space<vmem>>, vector<2x1x512xf32>
    %181 = vector.shape_cast %180 : vector<2x1x512xf32> to vector<2x512xf32>
    %c0_71 = arith.constant 0 : index
    %c0_72 = arith.constant 0 : index
    %182 = vector.load %arg8[%c0_71, %c0_72] : memref<128x512xf32, #tpu.memory_space<vmem>>, vector<128x512xf32>
    %cst_73 = arith.constant dense<0.000000e+00> : vector<2x512xf32>
    %183 = tpu.matmul %179, %182, %cst_73 {dimension_numbers = #tpu.dot_dimension_numbers<[1], [0], [0], [1], [0, 0, 1, 1], [], []>} : vector<2x128xf32>, vector<128x512xf32>, vector<2x512xf32> -> vector<2x512xf32>
    %184 = arith.addf %181, %183 : vector<2x512xf32>
    %185 = vector.extract_strided_slice %184 {offsets = [0, 0], sizes = [2, 128], strides = [1, 1]} : vector<2x512xf32> to vector<2x128xf32>
    %186 = arith.negf %185 : vector<2x128xf32>
    %187 = math.exp %186 : vector<2x128xf32>
    %cst_74 = arith.constant 1.000000e+00 : f32
    %188 = vector.broadcast %cst_74 : f32 to vector<2x128xf32>
    %189 = arith.addf %188, %187 : vector<2x128xf32>
    %190 = arith.divf %188, %189 : vector<2x128xf32>
    %191 = vector.extract_strided_slice %184 {offsets = [0, 128], sizes = [2, 128], strides = [1, 1]} : vector<2x512xf32> to vector<2x128xf32>
    %192 = arith.negf %191 : vector<2x128xf32>
    %193 = math.exp %192 : vector<2x128xf32>
    %cst_75 = arith.constant 1.000000e+00 : f32
    %194 = vector.broadcast %cst_75 : f32 to vector<2x128xf32>
    %195 = arith.addf %194, %193 : vector<2x128xf32>
    %196 = arith.divf %194, %195 : vector<2x128xf32>
    %197 = vector.extract_strided_slice %184 {offsets = [0, 256], sizes = [2, 128], strides = [1, 1]} : vector<2x512xf32> to vector<2x128xf32>
    %198 = math.tanh %197 : vector<2x128xf32>
    %199 = vector.extract_strided_slice %184 {offsets = [0, 384], sizes = [2, 128], strides = [1, 1]} : vector<2x512xf32> to vector<2x128xf32>
    %200 = arith.negf %199 : vector<2x128xf32>
    %201 = math.exp %200 : vector<2x128xf32>
    %cst_76 = arith.constant 1.000000e+00 : f32
    %202 = vector.broadcast %cst_76 : f32 to vector<2x128xf32>
    %203 = arith.addf %202, %201 : vector<2x128xf32>
    %204 = arith.divf %202, %203 : vector<2x128xf32>
    %205 = arith.mulf %196, %177 : vector<2x128xf32>
    %206 = arith.mulf %190, %198 : vector<2x128xf32>
    %207 = arith.addf %205, %206 : vector<2x128xf32>
    %208 = math.tanh %207 : vector<2x128xf32>
    %209 = arith.mulf %204, %208 : vector<2x128xf32>
    %c0_77 = arith.constant 0 : index
    %c5 = arith.constant 5 : index
    %c0_78 = arith.constant 0 : index
    %210 = vector.load %arg14[%c0_77, %c5, %c0_78] : memref<2x8x512xf32, #tpu.memory_space<vmem>>, vector<2x1x512xf32>
    %211 = vector.shape_cast %210 : vector<2x1x512xf32> to vector<2x512xf32>
    %c0_79 = arith.constant 0 : index
    %c0_80 = arith.constant 0 : index
    %212 = vector.load %arg8[%c0_79, %c0_80] : memref<128x512xf32, #tpu.memory_space<vmem>>, vector<128x512xf32>
    %cst_81 = arith.constant dense<0.000000e+00> : vector<2x512xf32>
    %213 = tpu.matmul %209, %212, %cst_81 {dimension_numbers = #tpu.dot_dimension_numbers<[1], [0], [0], [1], [0, 0, 1, 1], [], []>} : vector<2x128xf32>, vector<128x512xf32>, vector<2x512xf32> -> vector<2x512xf32>
    %214 = arith.addf %211, %213 : vector<2x512xf32>
    %215 = vector.extract_strided_slice %214 {offsets = [0, 0], sizes = [2, 128], strides = [1, 1]} : vector<2x512xf32> to vector<2x128xf32>
    %216 = arith.negf %215 : vector<2x128xf32>
    %217 = math.exp %216 : vector<2x128xf32>
    %cst_82 = arith.constant 1.000000e+00 : f32
    %218 = vector.broadcast %cst_82 : f32 to vector<2x128xf32>
    %219 = arith.addf %218, %217 : vector<2x128xf32>
    %220 = arith.divf %218, %219 : vector<2x128xf32>
    %221 = vector.extract_strided_slice %214 {offsets = [0, 128], sizes = [2, 128], strides = [1, 1]} : vector<2x512xf32> to vector<2x128xf32>
    %222 = arith.negf %221 : vector<2x128xf32>
    %223 = math.exp %222 : vector<2x128xf32>
    %cst_83 = arith.constant 1.000000e+00 : f32
    %224 = vector.broadcast %cst_83 : f32 to vector<2x128xf32>
    %225 = arith.addf %224, %223 : vector<2x128xf32>
    %226 = arith.divf %224, %225 : vector<2x128xf32>
    %227 = vector.extract_strided_slice %214 {offsets = [0, 256], sizes = [2, 128], strides = [1, 1]} : vector<2x512xf32> to vector<2x128xf32>
    %228 = math.tanh %227 : vector<2x128xf32>
    %229 = vector.extract_strided_slice %214 {offsets = [0, 384], sizes = [2, 128], strides = [1, 1]} : vector<2x512xf32> to vector<2x128xf32>
    %230 = arith.negf %229 : vector<2x128xf32>
    %231 = math.exp %230 : vector<2x128xf32>
    %cst_84 = arith.constant 1.000000e+00 : f32
    %232 = vector.broadcast %cst_84 : f32 to vector<2x128xf32>
    %233 = arith.addf %232, %231 : vector<2x128xf32>
    %234 = arith.divf %232, %233 : vector<2x128xf32>
    %235 = arith.mulf %226, %207 : vector<2x128xf32>
    %236 = arith.mulf %220, %228 : vector<2x128xf32>
    %237 = arith.addf %235, %236 : vector<2x128xf32>
    %238 = math.tanh %237 : vector<2x128xf32>
    %239 = arith.mulf %234, %238 : vector<2x128xf32>
    %c0_85 = arith.constant 0 : index
    %c6 = arith.constant 6 : index
    %c0_86 = arith.constant 0 : index
    %240 = vector.load %arg14[%c0_85, %c6, %c0_86] : memref<2x8x512xf32, #tpu.memory_space<vmem>>, vector<2x1x512xf32>
    %241 = vector.shape_cast %240 : vector<2x1x512xf32> to vector<2x512xf32>
    %c0_87 = arith.constant 0 : index
    %c0_88 = arith.constant 0 : index
    %242 = vector.load %arg8[%c0_87, %c0_88] : memref<128x512xf32, #tpu.memory_space<vmem>>, vector<128x512xf32>
    %cst_89 = arith.constant dense<0.000000e+00> : vector<2x512xf32>
    %243 = tpu.matmul %239, %242, %cst_89 {dimension_numbers = #tpu.dot_dimension_numbers<[1], [0], [0], [1], [0, 0, 1, 1], [], []>} : vector<2x128xf32>, vector<128x512xf32>, vector<2x512xf32> -> vector<2x512xf32>
    %244 = arith.addf %241, %243 : vector<2x512xf32>
    %245 = vector.extract_strided_slice %244 {offsets = [0, 0], sizes = [2, 128], strides = [1, 1]} : vector<2x512xf32> to vector<2x128xf32>
    %246 = arith.negf %245 : vector<2x128xf32>
    %247 = math.exp %246 : vector<2x128xf32>
    %cst_90 = arith.constant 1.000000e+00 : f32
    %248 = vector.broadcast %cst_90 : f32 to vector<2x128xf32>
    %249 = arith.addf %248, %247 : vector<2x128xf32>
    %250 = arith.divf %248, %249 : vector<2x128xf32>
    %251 = vector.extract_strided_slice %244 {offsets = [0, 128], sizes = [2, 128], strides = [1, 1]} : vector<2x512xf32> to vector<2x128xf32>
    %252 = arith.negf %251 : vector<2x128xf32>
    %253 = math.exp %252 : vector<2x128xf32>
    %cst_91 = arith.constant 1.000000e+00 : f32
    %254 = vector.broadcast %cst_91 : f32 to vector<2x128xf32>
    %255 = arith.addf %254, %253 : vector<2x128xf32>
    %256 = arith.divf %254, %255 : vector<2x128xf32>
    %257 = vector.extract_strided_slice %244 {offsets = [0, 256], sizes = [2, 128], strides = [1, 1]} : vector<2x512xf32> to vector<2x128xf32>
    %258 = math.tanh %257 : vector<2x128xf32>
    %259 = vector.extract_strided_slice %244 {offsets = [0, 384], sizes = [2, 128], strides = [1, 1]} : vector<2x512xf32> to vector<2x128xf32>
    %260 = arith.negf %259 : vector<2x128xf32>
    %261 = math.exp %260 : vector<2x128xf32>
    %cst_92 = arith.constant 1.000000e+00 : f32
    %262 = vector.broadcast %cst_92 : f32 to vector<2x128xf32>
    %263 = arith.addf %262, %261 : vector<2x128xf32>
    %264 = arith.divf %262, %263 : vector<2x128xf32>
    %265 = arith.mulf %256, %237 : vector<2x128xf32>
    %266 = arith.mulf %250, %258 : vector<2x128xf32>
    %267 = arith.addf %265, %266 : vector<2x128xf32>
    %268 = math.tanh %267 : vector<2x128xf32>
    %269 = arith.mulf %264, %268 : vector<2x128xf32>
    %c0_93 = arith.constant 0 : index
    %c7 = arith.constant 7 : index
    %c0_94 = arith.constant 0 : index
    %270 = vector.load %arg14[%c0_93, %c7, %c0_94] : memref<2x8x512xf32, #tpu.memory_space<vmem>>, vector<2x1x512xf32>
    %271 = vector.shape_cast %270 : vector<2x1x512xf32> to vector<2x512xf32>
    %c0_95 = arith.constant 0 : index
    %c0_96 = arith.constant 0 : index
    %272 = vector.load %arg8[%c0_95, %c0_96] : memref<128x512xf32, #tpu.memory_space<vmem>>, vector<128x512xf32>
    %cst_97 = arith.constant dense<0.000000e+00> : vector<2x512xf32>
    %273 = tpu.matmul %269, %272, %cst_97 {dimension_numbers = #tpu.dot_dimension_numbers<[1], [0], [0], [1], [0, 0, 1, 1], [], []>} : vector<2x128xf32>, vector<128x512xf32>, vector<2x512xf32> -> vector<2x512xf32>
    %274 = arith.addf %271, %273 : vector<2x512xf32>
    %275 = vector.extract_strided_slice %274 {offsets = [0, 0], sizes = [2, 128], strides = [1, 1]} : vector<2x512xf32> to vector<2x128xf32>
    %276 = arith.negf %275 : vector<2x128xf32>
    %277 = math.exp %276 : vector<2x128xf32>
    %cst_98 = arith.constant 1.000000e+00 : f32
    %278 = vector.broadcast %cst_98 : f32 to vector<2x128xf32>
    %279 = arith.addf %278, %277 : vector<2x128xf32>
    %280 = arith.divf %278, %279 : vector<2x128xf32>
    %281 = vector.extract_strided_slice %274 {offsets = [0, 128], sizes = [2, 128], strides = [1, 1]} : vector<2x512xf32> to vector<2x128xf32>
    %282 = arith.negf %281 : vector<2x128xf32>
    %283 = math.exp %282 : vector<2x128xf32>
    %cst_99 = arith.constant 1.000000e+00 : f32
    %284 = vector.broadcast %cst_99 : f32 to vector<2x128xf32>
    %285 = arith.addf %284, %283 : vector<2x128xf32>
    %286 = arith.divf %284, %285 : vector<2x128xf32>
    %287 = vector.extract_strided_slice %274 {offsets = [0, 256], sizes = [2, 128], strides = [1, 1]} : vector<2x512xf32> to vector<2x128xf32>
    %288 = math.tanh %287 : vector<2x128xf32>
    %289 = vector.extract_strided_slice %274 {offsets = [0, 384], sizes = [2, 128], strides = [1, 1]} : vector<2x512xf32> to vector<2x128xf32>
    %290 = arith.negf %289 : vector<2x128xf32>
    %291 = math.exp %290 : vector<2x128xf32>
    %cst_100 = arith.constant 1.000000e+00 : f32
    %292 = vector.broadcast %cst_100 : f32 to vector<2x128xf32>
    %293 = arith.addf %292, %291 : vector<2x128xf32>
    %294 = arith.divf %292, %293 : vector<2x128xf32>
    %295 = arith.mulf %286, %267 : vector<2x128xf32>
    %296 = arith.mulf %280, %288 : vector<2x128xf32>
    %297 = arith.addf %295, %296 : vector<2x128xf32>
    %298 = math.tanh %297 : vector<2x128xf32>
    %299 = arith.mulf %294, %298 : vector<2x128xf32>
    %c0_101 = arith.constant 0 : index
    %c0_102 = arith.constant 0 : index
    %300 = vector.load %arg11[%c0_101, %c0_102] : memref<128x128xf32, #tpu.memory_space<vmem>>, vector<128x128xf32>
    %cst_103 = arith.constant dense<0.000000e+00> : vector<2x128xf32>
    %301 = tpu.matmul %299, %300, %cst_103 {dimension_numbers = #tpu.dot_dimension_numbers<[1], [0], [0], [1], [0, 0, 1, 1], [], []>} : vector<2x128xf32>, vector<128x128xf32>, vector<2x128xf32> -> vector<2x128xf32>
    %c0_104 = arith.constant 0 : index
    %c0_105 = arith.constant 0 : index
    %302 = vector.load %arg12[%c0_104, %c0_105] : memref<1x128xf32, #tpu.memory_space<vmem>>, vector<1x128xf32>
    %303 = vector.broadcast %302 : vector<1x128xf32> to vector<2x128xf32>
    %304 = arith.addf %301, %303 : vector<2x128xf32>
    %c0_106 = arith.constant 0 : index
    %c0_107 = arith.constant 0 : index
    %305 = vector.load %arg13[%c0_106, %c0_107] : memref<2x128xf32, #tpu.memory_space<vmem>>, vector<2x128xf32>
    tpu.vector_store %arg13[%c0_106, %c0_107], %304 {strides = array<i32>} : memref<2x128xf32, #tpu.memory_space<vmem>>, vector<2x128xf32>,
    return
  }
}

</mosaic_0001>

<llo_original>
// kernel: lstm_hcp_forward.1
$region0: #{lstm_hcp_forward.1}
  #allocation0 [shape = 'u32[]', space=smem, size = 0x4, offset = 0x4, fixed_abs, tag = 'smem constant byte address 0x4 - core index']
  #allocation1 [shape = 'u32[144,128]{1,0:T(1,128)}', space=vmem, size = 0x12000, scoped, tag = 'internal scratch']
  #allocation2 [shape = 'f32[2,8,512]{2,1,0:T(8,128)}', space=vmem, size = 0x8000, scoped, tag = 'scratch operand']
  %s0 = inlined_call_operand.vmem [shape: f32[16,1536], index: 0, kind: input, shape index: {}]
  %s1 = inlined_call_operand.vmem [shape: f32[16,128], index: 1, kind: input, shape index: {}]
  %s2 = inlined_call_operand.vmem [shape: f32[1536,128], index: 2, kind: input, shape index: {}]
  %s3 = inlined_call_operand.vmem [shape: f32[1,128], index: 3, kind: input, shape index: {}]
  %s4 = inlined_call_operand.vmem [shape: f32[128,128], index: 4, kind: input, shape index: {}]
  %s5 = inlined_call_operand.vmem [shape: f32[128,128], index: 5, kind: input, shape index: {}]
  %s6 = inlined_call_operand.vmem [shape: f32[1,128], index: 6, kind: input, shape index: {}]
  %s7 = inlined_call_operand.hbm [shape: f32[128,512], index: 7, kind: input, shape index: {}]
  %s8 = inlined_call_operand.hbm [shape: f32[128,512], index: 8, kind: input, shape index: {}]
  %s9 = inlined_call_operand.vmem [shape: f32[1,512], index: 9, kind: input, shape index: {}]
  %s10 = inlined_call_operand.vmem [shape: f32[1,512], index: 10, kind: input, shape index: {}]
  %s11 = inlined_call_operand.hbm [shape: f32[128,128], index: 11, kind: input, shape index: {}]
  %s12 = inlined_call_operand.hbm [shape: f32[1,128], index: 12, kind: input, shape index: {}]
  %s13 = inlined_call_operand.hbm [shape: f32[2,128], index: 13, kind: output, shape index: {}]
  %s14 = sld [smem:[#allocation0]]
  $region78: #{lstm_hcp_forward.1} parent=0
    _
  %s16 = ssub.s32 1, %s14
  %s17 = scalar_select 0, %s16, %s14
  $region1: #{lstm_hcp_forward.1} parent=0
    #allocation3 [shape = 'u8[262144]{0}', space=vmem, size = 0x40000, scoped, tag = 'input window, operand 7, single buffered']
    #allocation4 [shape = 's32[1]{0}', space=sflag, size = 0x4, scoped, tag = 'scoped memory for lstm_hcp_forward.1']
    #allocation5 [shape = 's32[1]{0}', space=sflag, size = 0x4, scoped, tag = 'scoped memory for lstm_hcp_forward.1']
    #allocation6 [shape = 'u8[262144]{0}', space=vmem, size = 0x40000, scoped, tag = 'input window, operand 8, single buffered']
    #allocation7 [shape = 's32[1]{0}', space=sflag, size = 0x4, scoped, tag = 'scoped memory for lstm_hcp_forward.1']
    #allocation8 [shape = 'u8[65536]{0}', space=vmem, size = 0x10000, scoped, tag = 'input window, operand 11, single buffered']
    #allocation9 [shape = 'u8[512]{0}', space=vmem, size = 0x400, scoped, tag = 'input window, operand 12, single buffered']
    #allocation10 [shape = 's32[1]{0}', space=sflag, size = 0x4, scoped, tag = 'scoped memory for lstm_hcp_forward.1']
    #allocation11 [shape = 'u8[1024]{0}', space=vmem, size = 0x400, scoped, tag = 'output window, operand 0, single buffered']
    %18 = vsyncpa [#allocation4], 0
    %19 = vsyncpa [#allocation7], 0
    %20 = vsyncpa [#allocation10], 0
    %21 = vsyncpa [#allocation5], 0
    // Predicated region
    $region2: #{lstm_hcp_forward.1} parent=1 // pred_check
      _
    $region3: #{lstm_hcp_forward.1} parent=1 // pred_check_branch
      %23 = sbr.rel (0) target = $region5
    $region4: #{lstm_hcp_forward.1} parent=1 // pred_region
      _
    $region5: #{lstm_hcp_forward.1} parent=1 // pred_fallthru
      _
    // Predicated region
    $region6: #{lstm_hcp_forward.1} parent=1 // pred_check
      _
    $region7: #{lstm_hcp_forward.1} parent=1 // pred_check_branch
      %25 = sbr.rel (0) target = $region9
    $region8: #{lstm_hcp_forward.1} parent=1 // pred_region
      _
    $region9: #{lstm_hcp_forward.1} parent=1 // pred_fallthru
      _
    // Predicated region
    $region10: #{lstm_hcp_forward.1} parent=1 // pred_check
      _
    $region11: #{lstm_hcp_forward.1} parent=1 // pred_check_branch
      %27 = sbr.rel (0) target = $region13
    $region12: #{lstm_hcp_forward.1} parent=1 // pred_region
      _
    $region13: #{lstm_hcp_forward.1} parent=1 // pred_fallthru
      _
    // Predicated region
    $region14: #{lstm_hcp_forward.1} parent=1 // pred_check
      _
    $region15: #{lstm_hcp_forward.1} parent=1 // pred_check_branch
      %29 = sbr.rel (0) target = $region17
    $region16: #{lstm_hcp_forward.1} parent=1 // pred_region
      _
    $region17: #{lstm_hcp_forward.1} parent=1 // pred_fallthru
      _
    // Predicated region
    $region18: #{lstm_hcp_forward.1} parent=1 // pred_check
      _
    $region19: #{lstm_hcp_forward.1} parent=1 // pred_check_branch
      %31 = sbr.rel (0) target = $region21
    $region20: #{lstm_hcp_forward.1} parent=1 // pred_region
      _
    $region21: #{lstm_hcp_forward.1} parent=1 // pred_fallthru
      _
    // Predicated region
    $region22: #{lstm_hcp_forward.1} parent=1 // pred_check
      _
    $region23: #{lstm_hcp_forward.1} parent=1 // pred_check_branch
      %33 = sbr.rel (0) target = $region25
    $region24: #{lstm_hcp_forward.1} parent=1 // pred_region
      _
    $region25: #{lstm_hcp_forward.1} parent=1 // pred_fallthru
      _
    // Predicated region
    $region26: #{lstm_hcp_forward.1} parent=1 // pred_check
      _
    $region27: #{lstm_hcp_forward.1} parent=1 // pred_check_branch
      %35 = sbr.rel (0) target = $region29
    $region28: #{lstm_hcp_forward.1} parent=1 // pred_region
      _
    $region29: #{lstm_hcp_forward.1} parent=1 // pred_fallthru
      _
    // Predicated region
    $region30: #{lstm_hcp_forward.1} parent=1 // pred_check
      _
    $region31: #{lstm_hcp_forward.1} parent=1 // pred_check_branch
      %37 = sbr.rel (0) target = $region33
    $region32: #{lstm_hcp_forward.1} parent=1 // pred_region
      %s39 = ssub.s32 8192, 8192
      %40 = vsyncadd [#allocation4], %s39
      %s41 = sshll.u32 [#allocation3], 4
      %s42 = int_to_ptr.vmem [resolvable:$true] %s41
      %47 = dma.hbm_to_vmem [thread:$0]  %s7, 8192, %s42, [#allocation4], 512, 512, 32
    $region33: #{lstm_hcp_forward.1} parent=1 // pred_fallthru
      _
    // Predicated region
    $region34: #{lstm_hcp_forward.1} parent=1 // pred_check
      _
    $region35: #{lstm_hcp_forward.1} parent=1 // pred_check_branch
      %49 = sbr.rel (0) target = $region37
    $region36: #{lstm_hcp_forward.1} parent=1 // pred_region
      %s51 = ssub.s32 8192, 8192
      %52 = vsyncadd [#allocation7], %s51
      %s53 = sshll.u32 [#allocation6], 4
      %s54 = int_to_ptr.vmem [resolvable:$true] %s53
      %59 = dma.hbm_to_vmem [thread:$0]  %s8, 8192, %s54, [#allocation7], 512, 512, 32
    $region37: #{lstm_hcp_forward.1} parent=1 // pred_fallthru
      _
    // Predicated region
    $region38: #{lstm_hcp_forward.1} parent=1 // pred_check
      _
    $region39: #{lstm_hcp_forward.1} parent=1 // pred_check_branch
      %61 = sbr.rel (0) target = $region41
    $region40: #{lstm_hcp_forward.1} parent=1 // pred_region
      _
    $region41: #{lstm_hcp_forward.1} parent=1 // pred_fallthru
      _
    // Predicated region
    $region42: #{lstm_hcp_forward.1} parent=1 // pred_check
      _
    $region43: #{lstm_hcp_forward.1} parent=1 // pred_check_branch
      %63 = sbr.rel (0) target = $region45
    $region44: #{lstm_hcp_forward.1} parent=1 // pred_region
      _
    $region45: #{lstm_hcp_forward.1} parent=1 // pred_fallthru
      _
    // Predicated region
    $region46: #{lstm_hcp_forward.1} parent=1 // pred_check
      _
    $region47: #{lstm_hcp_forward.1} parent=1 // pred_check_branch
      %65 = sbr.rel (0) target = $region49
    $region48: #{lstm_hcp_forward.1} parent=1 // pred_region
      %s67 = ssub.s32 2048, 2048
      %68 = vsyncadd [#allocation7], %s67
      %s69 = sshll.u32 [#allocation8], 4
      %s70 = int_to_ptr.vmem [resolvable:$true] %s69
      %75 = dma.hbm_to_vmem [thread:$0]  %s11, 2048, %s70, [#allocation7], 128, 128, 8
    $region49: #{lstm_hcp_forward.1} parent=1 // pred_fallthru
      _
    // Predicated region
    $region50: #{lstm_hcp_forward.1} parent=1 // pred_check
      _
    $region51: #{lstm_hcp_forward.1} parent=1 // pred_check_branch
      %77 = sbr.rel (0) target = $region53
    $region52: #{lstm_hcp_forward.1} parent=1 // pred_region
      %s79 = ssub.s32 16, 16
      %80 = vsyncadd [#allocation10], %s79
      %s82 = sshll.u32 [#allocation9], 4
      %s83 = int_to_ptr.vmem [resolvable:$true] %s82
      %85 = dma.hbm_to_vmem [thread:$0]  %s12, 16, %s83, [#allocation10]
    $region53: #{lstm_hcp_forward.1} parent=1 // pred_fallthru
      _
    // Predicated region
    $region54: #{lstm_hcp_forward.1} parent=1 // pred_check
      _
    $region55: #{lstm_hcp_forward.1} parent=1 // pred_check_branch
      %87 = sbr.rel (0) target = $region57
    $region56: #{lstm_hcp_forward.1} parent=1 // pred_region
      %88 = dma.done [#allocation4], 8192
    $region57: #{lstm_hcp_forward.1} parent=1 // pred_fallthru
      _
    // Predicated region
    $region58: #{lstm_hcp_forward.1} parent=1 // pred_check
      _
    $region59: #{lstm_hcp_forward.1} parent=1 // pred_check_branch
      %90 = sbr.rel (0) target = $region61
    $region60: #{lstm_hcp_forward.1} parent=1 // pred_region
      %91 = dma.done [#allocation7], 8192
    $region61: #{lstm_hcp_forward.1} parent=1 // pred_fallthru
      _
    // Predicated region
    $region62: #{lstm_hcp_forward.1} parent=1 // pred_check
      _
    $region63: #{lstm_hcp_forward.1} parent=1 // pred_check_branch
      %93 = sbr.rel (0) target = $region65
    $region64: #{lstm_hcp_forward.1} parent=1 // pred_region
      %94 = dma.done [#allocation7], 2048
    $region65: #{lstm_hcp_forward.1} parent=1 // pred_fallthru
      _
    // Predicated region
    $region66: #{lstm_hcp_forward.1} parent=1 // pred_check
      _
    $region67: #{lstm_hcp_forward.1} parent=1 // pred_check_branch
      %96 = sbr.rel (0) target = $region69
    $region68: #{lstm_hcp_forward.1} parent=1 // pred_region
      %97 = dma.done [#allocation10], 16
    $region69: #{lstm_hcp_forward.1} parent=1 // pred_fallthru
      _
    %v98 = vld [vmem:[%s0] sm:$0xff]
    %v99 = vld [vmem:[%s0 + $0x8] sm:$0xff]
    %v100 = vld [vmem:[%s0 + $0x10] sm:$0xff]
    %v101 = vld [vmem:[%s0 + $0x18] sm:$0xff]
    %v102 = vld [vmem:[%s0 + $0x20] sm:$0xff]
    %v103 = vld [vmem:[%s0 + $0x28] sm:$0xff]
    %v104 = vld [vmem:[%s0 + $0x30] sm:$0xff]
    %v105 = vld [vmem:[%s0 + $0x38] sm:$0xff]
    %v106 = vld [vmem:[%s0 + $0x40] sm:$0xff]
    %v107 = vld [vmem:[%s0 + $0x48] sm:$0xff]
    %v108 = vld [vmem:[%s0 + $0x50] sm:$0xff]
    %v109 = vld [vmem:[%s0 + $0x58] sm:$0xff]
    %v110 = vld [vmem:[%s0 + $0x60] sm:$0xff]
    %v111 = vld [vmem:[%s0 + $0x68] sm:$0xff]
    %v112 = vld [vmem:[%s0 + $0x70] sm:$0xff]
    %v113 = vld [vmem:[%s0 + $0x78] sm:$0xff]
    %v114 = vld [vmem:[%s0 + $0x80] sm:$0xff]
    %v115 = vld [vmem:[%s0 + $0x88] sm:$0xff]
    %v116 = vld [vmem:[%s0 + $0x90] sm:$0xff]
    %v117 = vld [vmem:[%s0 + $0x98] sm:$0xff]
    %v118 = vld [vmem:[%s0 + $0xa0] sm:$0xff]
    %v119 = vld [vmem:[%s0 + $0xa8] sm:$0xff]
    %v120 = vld [vmem:[%s0 + $0xb0] sm:$0xff]
    %v121 = vld [vmem:[%s0 + $0xb8] sm:$0xff]
    %v122 = vld [vmem:[%s2] sm:$0xff]
    %v123 = vld [vmem:[%s2 + $0x8] sm:$0xff]
    %v124 = vld [vmem:[%s2 + $0x10] sm:$0xff]
    %v125 = vld [vmem:[%s2 + $0x18] sm:$0xff]
    %v126 = vld [vmem:[%s2 + $0x20] sm:$0xff]
    %v127 = vld [vmem:[%s2 + $0x28] sm:$0xff]
    %v128 = vld [vmem:[%s2 + $0x30] sm:$0xff]
    %v129 = vld [vmem:[%s2 + $0x38] sm:$0xff]
    %v130 = vld [vmem:[%s2 + $0x40] sm:$0xff]
    %v131 = vld [vmem:[%s2 + $0x48] sm:$0xff]
    %v132 = vld [vmem:[%s2 + $0x50] sm:$0xff]
    %v133 = vld [vmem:[%s2 + $0x58] sm:$0xff]
    %v134 = vld [vmem:[%s2 + $0x60] sm:$0xff]
    %v135 = vld [vmem:[%s2 + $0x68] sm:$0xff]
    %v136 = vld [vmem:[%s2 + $0x70] sm:$0xff]
    %v137 = vld [vmem:[%s2 + $0x78] sm:$0xff]
    %v138 = vld [vmem:[%s2 + $0x80] sm:$0xff]
    %v139 = vld [vmem:[%s2 + $0x88] sm:$0xff]
    %v140 = vld [vmem:[%s2 + $0x90] sm:$0xff]
    %v141 = vld [vmem:[%s2 + $0x98] sm:$0xff]
    %v142 = vld [vmem:[%s2 + $0xa0] sm:$0xff]
    %v143 = vld [vmem:[%s2 + $0xa8] sm:$0xff]
    %v144 = vld [vmem:[%s2 + $0xb0] sm:$0xff]
    %v145 = vld [vmem:[%s2 + $0xb8] sm:$0xff]
    %v146 = vld [vmem:[%s2 + $0xc0] sm:$0xff]
    %v147 = vld [vmem:[%s2 + $0xc8] sm:$0xff]
    %v148 = vld [vmem:[%s2 + $0xd0] sm:$0xff]
    %v149 = vld [vmem:[%s2 + $0xd8] sm:$0xff]
    %v150 = vld [vmem:[%s2 + $0xe0] sm:$0xff]
    %v151 = vld [vmem:[%s2 + $0xe8] sm:$0xff]
    %v152 = vld [vmem:[%s2 + $0xf0] sm:$0xff]
    %v153 = vld [vmem:[%s2 + $0xf8] sm:$0xff]
    %v154 = vld [vmem:[%s2 + $0x100] sm:$0xff]
    %v155 = vld [vmem:[%s2 + $0x108] sm:$0xff]
    %v156 = vld [vmem:[%s2 + $0x110] sm:$0xff]
    %v157 = vld [vmem:[%s2 + $0x118] sm:$0xff]
    %v158 = vld [vmem:[%s2 + $0x120] sm:$0xff]
    %v159 = vld [vmem:[%s2 + $0x128] sm:$0xff]
    %v160 = vld [vmem:[%s2 + $0x130] sm:$0xff]
    %v161 = vld [vmem:[%s2 + $0x138] sm:$0xff]
    %v162 = vld [vmem:[%s2 + $0x140] sm:$0xff]
    %v163 = vld [vmem:[%s2 + $0x148] sm:$0xff]
    %v164 = vld [vmem:[%s2 + $0x150] sm:$0xff]
    %v165 = vld [vmem:[%s2 + $0x158] sm:$0xff]
    %v166 = vld [vmem:[%s2 + $0x160] sm:$0xff]
    %v167 = vld [vmem:[%s2 + $0x168] sm:$0xff]
    %v168 = vld [vmem:[%s2 + $0x170] sm:$0xff]
    %v169 = vld [vmem:[%s2 + $0x178] sm:$0xff]
    %v170 = vld [vmem:[%s2 + $0x180] sm:$0xff]
    %v171 = vld [vmem:[%s2 + $0x188] sm:$0xff]
    %v172 = vld [vmem:[%s2 + $0x190] sm:$0xff]
    %v173 = vld [vmem:[%s2 + $0x198] sm:$0xff]
    %v174 = vld [vmem:[%s2 + $0x1a0] sm:$0xff]
    %v175 = vld [vmem:[%s2 + $0x1a8] sm:$0xff]
    %v176 = vld [vmem:[%s2 + $0x1b0] sm:$0xff]
    %v177 = vld [vmem:[%s2 + $0x1b8] sm:$0xff]
    %v178 = vld [vmem:[%s2 + $0x1c0] sm:$0xff]
    %v179 = vld [vmem:[%s2 + $0x1c8] sm:$0xff]
    %v180 = vld [vmem:[%s2 + $0x1d0] sm:$0xff]
    %v181 = vld [vmem:[%s2 + $0x1d8] sm:$0xff]
    %v182 = vld [vmem:[%s2 + $0x1e0] sm:$0xff]
    %v183 = vld [vmem:[%s2 + $0x1e8] sm:$0xff]
    %v184 = vld [vmem:[%s2 + $0x1f0] sm:$0xff]
    %v185 = vld [vmem:[%s2 + $0x1f8] sm:$0xff]
    %v186 = vld [vmem:[%s2 + $0x200] sm:$0xff]
    %v187 = vld [vmem:[%s2 + $0x208] sm:$0xff]
    %v188 = vld [vmem:[%s2 + $0x210] sm:$0xff]
    %v189 = vld [vmem:[%s2 + $0x218] sm:$0xff]
    %v190 = vld [vmem:[%s2 + $0x220] sm:$0xff]
    %v191 = vld [vmem:[%s2 + $0x228] sm:$0xff]
    %v192 = vld [vmem:[%s2 + $0x230] sm:$0xff]
    %v193 = vld [vmem:[%s2 + $0x238] sm:$0xff]
    %v194 = vld [vmem:[%s2 + $0x240] sm:$0xff]
    %v195 = vld [vmem:[%s2 + $0x248] sm:$0xff]
    %v196 = vld [vmem:[%s2 + $0x250] sm:$0xff]
    %v197 = vld [vmem:[%s2 + $0x258] sm:$0xff]
    %v198 = vld [vmem:[%s2 + $0x260] sm:$0xff]
    %v199 = vld [vmem:[%s2 + $0x268] sm:$0xff]
    %v200 = vld [vmem:[%s2 + $0x270] sm:$0xff]
    %v201 = vld [vmem:[%s2 + $0x278] sm:$0xff]
    %v202 = vld [vmem:[%s2 + $0x280] sm:$0xff]
    %v203 = vld [vmem:[%s2 + $0x288] sm:$0xff]
    %v204 = vld [vmem:[%s2 + $0x290] sm:$0xff]
    %v205 = vld [vmem:[%s2 + $0x298] sm:$0xff]
    %v206 = vld [vmem:[%s2 + $0x2a0] sm:$0xff]
    %v207 = vld [vmem:[%s2 + $0x2a8] sm:$0xff]
    %v208 = vld [vmem:[%s2 + $0x2b0] sm:$0xff]
    %v209 = vld [vmem:[%s2 + $0x2b8] sm:$0xff]
    %v210 = vld [vmem:[%s2 + $0x2c0] sm:$0xff]
    %v211 = vld [vmem:[%s2 + $0x2c8] sm:$0xff]
    %v212 = vld [vmem:[%s2 + $0x2d0] sm:$0xff]
    %v213 = vld [vmem:[%s2 + $0x2d8] sm:$0xff]
    %v214 = vld [vmem:[%s2 + $0x2e0] sm:$0xff]
    %v215 = vld [vmem:[%s2 + $0x2e8] sm:$0xff]
    %v216 = vld [vmem:[%s2 + $0x2f0] sm:$0xff]
    %v217 = vld [vmem:[%s2 + $0x2f8] sm:$0xff]
    %v218 = vld [vmem:[%s2 + $0x300] sm:$0xff]
    %v219 = vld [vmem:[%s2 + $0x308] sm:$0xff]
    %v220 = vld [vmem:[%s2 + $0x310] sm:$0xff]
    %v221 = vld [vmem:[%s2 + $0x318] sm:$0xff]
    %v222 = vld [vmem:[%s2 + $0x320] sm:$0xff]
    %v223 = vld [vmem:[%s2 + $0x328] sm:$0xff]
    %v224 = vld [vmem:[%s2 + $0x330] sm:$0xff]
    %v225 = vld [vmem:[%s2 + $0x338] sm:$0xff]
    %v226 = vld [vmem:[%s2 + $0x340] sm:$0xff]
    %v227 = vld [vmem:[%s2 + $0x348] sm:$0xff]
    %v228 = vld [vmem:[%s2 + $0x350] sm:$0xff]
    %v229 = vld [vmem:[%s2 + $0x358] sm:$0xff]
    %v230 = vld [vmem:[%s2 + $0x360] sm:$0xff]
    %v231 = vld [vmem:[%s2 + $0x368] sm:$0xff]
    %v232 = vld [vmem:[%s2 + $0x370] sm:$0xff]
    %v233 = vld [vmem:[%s2 + $0x378] sm:$0xff]
    %v234 = vld [vmem:[%s2 + $0x380] sm:$0xff]
    %v235 = vld [vmem:[%s2 + $0x388] sm:$0xff]
    %v236 = vld [vmem:[%s2 + $0x390] sm:$0xff]
    %v237 = vld [vmem:[%s2 + $0x398] sm:$0xff]
    %v238 = vld [vmem:[%s2 + $0x3a0] sm:$0xff]
    %v239 = vld [vmem:[%s2 + $0x3a8] sm:$0xff]
    %v240 = vld [vmem:[%s2 + $0x3b0] sm:$0xff]
    %v241 = vld [vmem:[%s2 + $0x3b8] sm:$0xff]
    %v242 = vld [vmem:[%s2 + $0x3c0] sm:$0xff]
    %v243 = vld [vmem:[%s2 + $0x3c8] sm:$0xff]
    %v244 = vld [vmem:[%s2 + $0x3d0] sm:$0xff]
    %v245 = vld [vmem:[%s2 + $0x3d8] sm:$0xff]
    %v246 = vld [vmem:[%s2 + $0x3e0] sm:$0xff]
    %v247 = vld [vmem:[%s2 + $0x3e8] sm:$0xff]
    %v248 = vld [vmem:[%s2 + $0x3f0] sm:$0xff]
    %v249 = vld [vmem:[%s2 + $0x3f8] sm:$0xff]
    %v250 = vld [vmem:[%s2 + $0x400] sm:$0xff]
    %v251 = vld [vmem:[%s2 + $0x408] sm:$0xff]
    %v252 = vld [vmem:[%s2 + $0x410] sm:$0xff]
    %v253 = vld [vmem:[%s2 + $0x418] sm:$0xff]
    %v254 = vld [vmem:[%s2 + $0x420] sm:$0xff]
    %v255 = vld [vmem:[%s2 + $0x428] sm:$0xff]
    %v256 = vld [vmem:[%s2 + $0x430] sm:$0xff]
    %v257 = vld [vmem:[%s2 + $0x438] sm:$0xff]
    %v258 = vld [vmem:[%s2 + $0x440] sm:$0xff]
    %v259 = vld [vmem:[%s2 + $0x448] sm:$0xff]
    %v260 = vld [vmem:[%s2 + $0x450] sm:$0xff]
    %v261 = vld [vmem:[%s2 + $0x458] sm:$0xff]
    %v262 = vld [vmem:[%s2 + $0x460] sm:$0xff]
    %v263 = vld [vmem:[%s2 + $0x468] sm:$0xff]
    %v264 = vld [vmem:[%s2 + $0x470] sm:$0xff]
    %v265 = vld [vmem:[%s2 + $0x478] sm:$0xff]
    %v266 = vld [vmem:[%s2 + $0x480] sm:$0xff]
    %v267 = vld [vmem:[%s2 + $0x488] sm:$0xff]
    %v268 = vld [vmem:[%s2 + $0x490] sm:$0xff]
    %v269 = vld [vmem:[%s2 + $0x498] sm:$0xff]
    %v270 = vld [vmem:[%s2 + $0x4a0] sm:$0xff]
    %v271 = vld [vmem:[%s2 + $0x4a8] sm:$0xff]
    %v272 = vld [vmem:[%s2 + $0x4b0] sm:$0xff]
    %v273 = vld [vmem:[%s2 + $0x4b8] sm:$0xff]
    %v274 = vld [vmem:[%s2 + $0x4c0] sm:$0xff]
    %v275 = vld [vmem:[%s2 + $0x4c8] sm:$0xff]
    %v276 = vld [vmem:[%s2 + $0x4d0] sm:$0xff]
    %v277 = vld [vmem:[%s2 + $0x4d8] sm:$0xff]
    %v278 = vld [vmem:[%s2 + $0x4e0] sm:$0xff]
    %v279 = vld [vmem:[%s2 + $0x4e8] sm:$0xff]
    %v280 = vld [vmem:[%s2 + $0x4f0] sm:$0xff]
    %v281 = vld [vmem:[%s2 + $0x4f8] sm:$0xff]
    %v282 = vld [vmem:[%s2 + $0x500] sm:$0xff]
    %v283 = vld [vmem:[%s2 + $0x508] sm:$0xff]
    %v284 = vld [vmem:[%s2 + $0x510] sm:$0xff]
    %v285 = vld [vmem:[%s2 + $0x518] sm:$0xff]
    %v286 = vld [vmem:[%s2 + $0x520] sm:$0xff]
    %v287 = vld [vmem:[%s2 + $0x528] sm:$0xff]
    %v288 = vld [vmem:[%s2 + $0x530] sm:$0xff]
    %v289 = vld [vmem:[%s2 + $0x538] sm:$0xff]
    %v290 = vld [vmem:[%s2 + $0x540] sm:$0xff]
    %v291 = vld [vmem:[%s2 + $0x548] sm:$0xff]
    %v292 = vld [vmem:[%s2 + $0x550] sm:$0xff]
    %v293 = vld [vmem:[%s2 + $0x558] sm:$0xff]
    %v294 = vld [vmem:[%s2 + $0x560] sm:$0xff]
    %v295 = vld [vmem:[%s2 + $0x568] sm:$0xff]
    %v296 = vld [vmem:[%s2 + $0x570] sm:$0xff]
    %v297 = vld [vmem:[%s2 + $0x578] sm:$0xff]
    %v298 = vld [vmem:[%s2 + $0x580] sm:$0xff]
    %v299 = vld [vmem:[%s2 + $0x588] sm:$0xff]
    %v300 = vld [vmem:[%s2 + $0x590] sm:$0xff]
    %v301 = vld [vmem:[%s2 + $0x598] sm:$0xff]
    %v302 = vld [vmem:[%s2 + $0x5a0] sm:$0xff]
    %v303 = vld [vmem:[%s2 + $0x5a8] sm:$0xff]
    %v304 = vld [vmem:[%s2 + $0x5b0] sm:$0xff]
    %v305 = vld [vmem:[%s2 + $0x5b8] sm:$0xff]
    %v306 = vld [vmem:[%s2 + $0x5c0] sm:$0xff]
    %v307 = vld [vmem:[%s2 + $0x5c8] sm:$0xff]
    %v308 = vld [vmem:[%s2 + $0x5d0] sm:$0xff]
    %v309 = vld [vmem:[%s2 + $0x5d8] sm:$0xff]
    %v310 = vld [vmem:[%s2 + $0x5e0] sm:$0xff]
    %v311 = vld [vmem:[%s2 + $0x5e8] sm:$0xff]
    %v312 = vld [vmem:[%s2 + $0x5f0] sm:$0xff]
    %v313 = vld [vmem:[%s2 + $0x5f8] sm:$0xff]
    %v314 = vld [vmem:[%s3] sm:$0x1]
    %v316 = vlaneseq
    %v317 = vshrl.u32 %v316, 7
    %v318 = vsub.s32 0, %v317
    %v319 = vrot.slane %v314, %v318
    %321 = vmatprep.subr.mxu0 0.0
    %322 = vmatpush1.msra.mxu0 %v122
    %323 = vmatprep.subr.mxu0 0.0
    %324 = vmatpush1.msra.mxu0 %v123
    %325 = vmatprep.subr.mxu0 0.0
    %326 = vmatpush1.msra.mxu0 %v124
    %327 = vmatprep.subr.mxu0 0.0
    %328 = vmatpush1.msra.mxu0 %v125
    %329 = vmatprep.subr.mxu0 0.0
    %330 = vmatpush1.msra.mxu0 %v126
    %331 = vmatprep.subr.mxu0 0.0
    %332 = vmatpush1.msra.mxu0 %v127
    %333 = vmatprep.subr.mxu0 0.0
    %334 = vmatpush1.msra.mxu0 %v128
    %335 = vmatprep.subr.mxu0 0.0
    %336 = vmatpush1.msra.mxu0 %v129
    %337 = vmatprep.subr.mxu0 0.0
    %338 = vmatpush1.msra.mxu0 %v130
    %339 = vmatprep.subr.mxu0 0.0
    %340 = vmatpush1.msra.mxu0 %v131
    %341 = vmatprep.subr.mxu0 0.0
    %342 = vmatpush1.msra.mxu0 %v132
    %343 = vmatprep.subr.mxu0 0.0
    %344 = vmatpush1.msra.mxu0 %v133
    %345 = vmatprep.subr.mxu0 0.0
    %346 = vmatpush1.msra.mxu0 %v134
    %347 = vmatprep.subr.mxu0 0.0
    %348 = vmatpush1.msra.mxu0 %v135
    %349 = vmatprep.subr.mxu0 0.0
    %350 = vmatpush1.msra.mxu0 %v136
    %351 = vmatprep.subr.mxu0 0.0
    %352 = vmatpush1.msra.mxu0 %v137
    %353 = vmatprep.subr.mxu0 0.0
    %354 = vmatpush1.msra.mxu0 %v138
    %355 = vmatprep.subr.mxu0 0.0
    %356 = vmatpush1.msra.mxu0 %v139
    %357 = vmatprep.subr.mxu0 0.0
    %358 = vmatpush1.msra.mxu0 %v140
    %359 = vmatprep.subr.mxu0 0.0
    %360 = vmatpush1.msra.mxu0 %v141
    %361 = vmatprep.subr.mxu0 0.0
    %362 = vmatpush1.msra.mxu0 %v142
    %363 = vmatprep.subr.mxu0 0.0
    %364 = vmatpush1.msra.mxu0 %v143
    %365 = vmatprep.subr.mxu0 0.0
    %366 = vmatpush1.msra.mxu0 %v144
    %367 = vmatprep.subr.mxu0 0.0
    %368 = vmatpush1.msra.mxu0 %v145
    %369 = vmatprep.subr.mxu0 0.0
    %370 = vmatpush1.msra.mxu0 %v146
    %371 = vmatprep.subr.mxu0 0.0
    %372 = vmatpush1.msra.mxu0 %v147
    %373 = vmatprep.subr.mxu0 0.0
    %374 = vmatpush1.msra.mxu0 %v148
    %375 = vmatprep.subr.mxu0 0.0
    %376 = vmatpush1.msra.mxu0 %v149
    %377 = vmatprep.subr.mxu0 0.0
    %378 = vmatpush1.msra.mxu0 %v150
    %379 = vmatprep.subr.mxu0 0.0
    %380 = vmatpush1.msra.mxu0 %v151
    %381 = vmatprep.subr.mxu0 0.0
    %382 = vmatpush1.msra.mxu0 %v152
    %383 = vmatprep.subr.mxu0 0.0
    %384 = vmatpush1.msra.mxu0 %v153
    %385 = vmatprep.mubr.f32.mxu0 %v99
    %386 = vmatmul.mubr.f32.gmra.mrb[0].mxu0 %v98
    %v387 = vpop.f32.mrb[0].mxu0
    %v388 = vadd.f32 %v319, %v387
    %v389 = vpop.f32.mrb[0].mxu0
    %390 = vmatprep.mubr.f32.mxu0 %v111
    %391 = vmatmul.mubr.f32.gmra.mrb[0].mxu0 %v110
    %v392 = vpop.f32.mrb[0].mxu0
    %v393 = vadd.f32 %v319, %v392
    %v394 = vpop.f32.mrb[0].mxu0
    %395 = vdwg.mxu0
    %396 = vmatprep.subr.mxu0 0.0
    %397 = vmatpush1.msra.mxu0 %v154
    %398 = vmatprep.subr.mxu0 0.0
    %399 = vmatpush1.msra.mxu0 %v155
    %400 = vmatprep.subr.mxu0 0.0
    %401 = vmatpush1.msra.mxu0 %v156
    %402 = vmatprep.subr.mxu0 0.0
    %403 = vmatpush1.msra.mxu0 %v157
    %404 = vmatprep.subr.mxu0 0.0
    %405 = vmatpush1.msra.mxu0 %v158
    %406 = vmatprep.subr.mxu0 0.0
    %407 = vmatpush1.msra.mxu0 %v159
    %408 = vmatprep.subr.mxu0 0.0
    %409 = vmatpush1.msra.mxu0 %v160
    %410 = vmatprep.subr.mxu0 0.0
    %411 = vmatpush1.msra.mxu0 %v161
    %412 = vmatprep.subr.mxu0 0.0
    %413 = vmatpush1.msra.mxu0 %v162
    %414 = vmatprep.subr.mxu0 0.0
    %415 = vmatpush1.msra.mxu0 %v163
    %416 = vmatprep.subr.mxu0 0.0
    %417 = vmatpush1.msra.mxu0 %v164
    %418 = vmatprep.subr.mxu0 0.0
    %419 = vmatpush1.msra.mxu0 %v165
    %420 = vmatprep.subr.mxu0 0.0
    %421 = vmatpush1.msra.mxu0 %v166
    %422 = vmatprep.subr.mxu0 0.0
    %423 = vmatpush1.msra.mxu0 %v167
    %424 = vmatprep.subr.mxu0 0.0
    %425 = vmatpush1.msra.mxu0 %v168
    %426 = vmatprep.subr.mxu0 0.0
    %427 = vmatpush1.msra.mxu0 %v169
    %428 = vmatprep.subr.mxu0 0.0
    %429 = vmatpush1.msra.mxu0 %v170
    %430 = vmatprep.subr.mxu0 0.0
    %431 = vmatpush1.msra.mxu0 %v171
    %432 = vmatprep.subr.mxu0 0.0
    %433 = vmatpush1.msra.mxu0 %v172
    %434 = vmatprep.subr.mxu0 0.0
    %435 = vmatpush1.msra.mxu0 %v173
    %436 = vmatprep.subr.mxu0 0.0
    %437 = vmatpush1.msra.mxu0 %v174
    %438 = vmatprep.subr.mxu0 0.0
    %439 = vmatpush1.msra.mxu0 %v175
    %440 = vmatprep.subr.mxu0 0.0
    %441 = vmatpush1.msra.mxu0 %v176
    %442 = vmatprep.subr.mxu0 0.0
    %443 = vmatpush1.msra.mxu0 %v177
    %444 = vmatprep.subr.mxu0 0.0
    %445 = vmatpush1.msra.mxu0 %v178
    %446 = vmatprep.subr.mxu0 0.0
    %447 = vmatpush1.msra.mxu0 %v179
    %448 = vmatprep.subr.mxu0 0.0
    %449 = vmatpush1.msra.mxu0 %v180
    %450 = vmatprep.subr.mxu0 0.0
    %451 = vmatpush1.msra.mxu0 %v181
    %452 = vmatprep.subr.mxu0 0.0
    %453 = vmatpush1.msra.mxu0 %v182
    %454 = vmatprep.subr.mxu0 0.0
    %455 = vmatpush1.msra.mxu0 %v183
    %456 = vmatprep.subr.mxu0 0.0
    %457 = vmatpush1.msra.mxu0 %v184
    %458 = vmatprep.subr.mxu0 0.0
    %459 = vmatpush1.msra.mxu0 %v185
    %460 = vmatprep.mubr.f32.mxu0 %v101
    %461 = vmatmul.mubr.f32.gmra.mrb[0].mxu0 %v100
    %v462 = vpop.f32.mrb[0].mxu0
    %v463 = vadd.f32 %v388, %v462
    %v464 = vpop.f32.mrb[0].mxu0
    %465 = vmatprep.mubr.f32.mxu0 %v113
    %466 = vmatmul.mubr.f32.gmra.mrb[0].mxu0 %v112
    %v467 = vpop.f32.mrb[0].mxu0
    %v468 = vadd.f32 %v393, %v467
    %v469 = vpop.f32.mrb[0].mxu0
    %470 = vdwg.mxu0
    %471 = vmatprep.subr.mxu0 0.0
    %472 = vmatpush1.msra.mxu0 %v186
    %473 = vmatprep.subr.mxu0 0.0
    %474 = vmatpush1.msra.mxu0 %v187
    %475 = vmatprep.subr.mxu0 0.0
    %476 = vmatpush1.msra.mxu0 %v188
    %477 = vmatprep.subr.mxu0 0.0
    %478 = vmatpush1.msra.mxu0 %v189
    %479 = vmatprep.subr.mxu0 0.0
    %480 = vmatpush1.msra.mxu0 %v190
    %481 = vmatprep.subr.mxu0 0.0
    %482 = vmatpush1.msra.mxu0 %v191
    %483 = vmatprep.subr.mxu0 0.0
    %484 = vmatpush1.msra.mxu0 %v192
    %485 = vmatprep.subr.mxu0 0.0
    %486 = vmatpush1.msra.mxu0 %v193
    %487 = vmatprep.subr.mxu0 0.0
    %488 = vmatpush1.msra.mxu0 %v194
    %489 = vmatprep.subr.mxu0 0.0
    %490 = vmatpush1.msra.mxu0 %v195
    %491 = vmatprep.subr.mxu0 0.0
    %492 = vmatpush1.msra.mxu0 %v196
    %493 = vmatprep.subr.mxu0 0.0
    %494 = vmatpush1.msra.mxu0 %v197
    %495 = vmatprep.subr.mxu0 0.0
    %496 = vmatpush1.msra.mxu0 %v198
    %497 = vmatprep.subr.mxu0 0.0
    %498 = vmatpush1.msra.mxu0 %v199
    %499 = vmatprep.subr.mxu0 0.0
    %500 = vmatpush1.msra.mxu0 %v200
    %501 = vmatprep.subr.mxu0 0.0
    %502 = vmatpush1.msra.mxu0 %v201
    %503 = vmatprep.subr.mxu0 0.0
    %504 = vmatpush1.msra.mxu0 %v202
    %505 = vmatprep.subr.mxu0 0.0
    %506 = vmatpush1.msra.mxu0 %v203
    %507 = vmatprep.subr.mxu0 0.0
    %508 = vmatpush1.msra.mxu0 %v204
    %509 = vmatprep.subr.mxu0 0.0
    %510 = vmatpush1.msra.mxu0 %v205
    %511 = vmatprep.subr.mxu0 0.0
    %512 = vmatpush1.msra.mxu0 %v206
    %513 = vmatprep.subr.mxu0 0.0
    %514 = vmatpush1.msra.mxu0 %v207
    %515 = vmatprep.subr.mxu0 0.0
    %516 = vmatpush1.msra.mxu0 %v208
    %517 = vmatprep.subr.mxu0 0.0
    %518 = vmatpush1.msra.mxu0 %v209
    %519 = vmatprep.subr.mxu0 0.0
    %520 = vmatpush1.msra.mxu0 %v210
    %521 = vmatprep.subr.mxu0 0.0
    %522 = vmatpush1.msra.mxu0 %v211
    %523 = vmatprep.subr.mxu0 0.0
    %524 = vmatpush1.msra.mxu0 %v212
    %525 = vmatprep.subr.mxu0 0.0
    %526 = vmatpush1.msra.mxu0 %v213
    %527 = vmatprep.subr.mxu0 0.0
    %528 = vmatpush1.msra.mxu0 %v214
    %529 = vmatprep.subr.mxu0 0.0
    %530 = vmatpush1.msra.mxu0 %v215
    %531 = vmatprep.subr.mxu0 0.0
    %532 = vmatpush1.msra.mxu0 %v216
    %533 = vmatprep.subr.mxu0 0.0
    %534 = vmatpush1.msra.mxu0 %v217
    %535 = vmatprep.mubr.f32.mxu0 %v103
    %536 = vmatmul.mubr.f32.gmra.mrb[0].mxu0 %v102
    %v537 = vpop.f32.mrb[0].mxu0
    %v538 = vadd.f32 %v463, %v537
    %v539 = vpop.f32.mrb[0].mxu0
    %540 = vmatprep.mubr.f32.mxu0 %v115
    %541 = vmatmul.mubr.f32.gmra.mrb[0].mxu0 %v114
    %v542 = vpop.f32.mrb[0].mxu0
    %v543 = vadd.f32 %v468, %v542
    %v544 = vpop.f32.mrb[0].mxu0
    %545 = vdwg.mxu0
    %546 = vmatprep.subr.mxu0 0.0
    %547 = vmatpush1.msra.mxu0 %v218
    %548 = vmatprep.subr.mxu0 0.0
    %549 = vmatpush1.msra.mxu0 %v219
    %550 = vmatprep.subr.mxu0 0.0
    %551 = vmatpush1.msra.mxu0 %v220
    %552 = vmatprep.subr.mxu0 0.0
    %553 = vmatpush1.msra.mxu0 %v221
    %554 = vmatprep.subr.mxu0 0.0
    %555 = vmatpush1.msra.mxu0 %v222
    %556 = vmatprep.subr.mxu0 0.0
    %557 = vmatpush1.msra.mxu0 %v223
    %558 = vmatprep.subr.mxu0 0.0
    %559 = vmatpush1.msra.mxu0 %v224
    %560 = vmatprep.subr.mxu0 0.0
    %561 = vmatpush1.msra.mxu0 %v225
    %562 = vmatprep.subr.mxu0 0.0
    %563 = vmatpush1.msra.mxu0 %v226
    %564 = vmatprep.subr.mxu0 0.0
    %565 = vmatpush1.msra.mxu0 %v227
    %566 = vmatprep.subr.mxu0 0.0
    %567 = vmatpush1.msra.mxu0 %v228
    %568 = vmatprep.subr.mxu0 0.0
    %569 = vmatpush1.msra.mxu0 %v229
    %570 = vmatprep.subr.mxu0 0.0
    %571 = vmatpush1.msra.mxu0 %v230
    %572 = vmatprep.subr.mxu0 0.0
    %573 = vmatpush1.msra.mxu0 %v231
    %574 = vmatprep.subr.mxu0 0.0
    %575 = vmatpush1.msra.mxu0 %v232
    %576 = vmatprep.subr.mxu0 0.0
    %577 = vmatpush1.msra.mxu0 %v233
    %578 = vmatprep.subr.mxu0 0.0
    %579 = vmatpush1.msra.mxu0 %v234
    %580 = vmatprep.subr.mxu0 0.0
    %581 = vmatpush1.msra.mxu0 %v235
    %582 = vmatprep.subr.mxu0 0.0
    %583 = vmatpush1.msra.mxu0 %v236
    %584 = vmatprep.subr.mxu0 0.0
    %585 = vmatpush1.msra.mxu0 %v237
    %586 = vmatprep.subr.mxu0 0.0
    %587 = vmatpush1.msra.mxu0 %v238
    %588 = vmatprep.subr.mxu0 0.0
    %589 = vmatpush1.msra.mxu0 %v239
    %590 = vmatprep.subr.mxu0 0.0
    %591 = vmatpush1.msra.mxu0 %v240
    %592 = vmatprep.subr.mxu0 0.0
    %593 = vmatpush1.msra.mxu0 %v241
    %594 = vmatprep.subr.mxu0 0.0
    %595 = vmatpush1.msra.mxu0 %v242
    %596 = vmatprep.subr.mxu0 0.0
    %597 = vmatpush1.msra.mxu0 %v243
    %598 = vmatprep.subr.mxu0 0.0
    %599 = vmatpush1.msra.mxu0 %v244
    %600 = vmatprep.subr.mxu0 0.0
    %601 = vmatpush1.msra.mxu0 %v245
    %602 = vmatprep.subr.mxu0 0.0
    %603 = vmatpush1.msra.mxu0 %v246
    %604 = vmatprep.subr.mxu0 0.0
    %605 = vmatpush1.msra.mxu0 %v247
    %606 = vmatprep.subr.mxu0 0.0
    %607 = vmatpush1.msra.mxu0 %v248
    %608 = vmatprep.subr.mxu0 0.0
    %609 = vmatpush1.msra.mxu0 %v249
    %610 = vmatprep.mubr.f32.mxu0 %v105
    %611 = vmatmul.mubr.f32.gmra.mrb[0].mxu0 %v104
    %v612 = vpop.f32.mrb[0].mxu0
    %v613 = vadd.f32 %v538, %v612
    %v614 = vpop.f32.mrb[0].mxu0
    %615 = vmatprep.mubr.f32.mxu0 %v117
    %616 = vmatmul.mubr.f32.gmra.mrb[0].mxu0 %v116
    %v617 = vpop.f32.mrb[0].mxu0
    %v618 = vadd.f32 %v543, %v617
    %v619 = vpop.f32.mrb[0].mxu0
    %620 = vdwg.mxu0
    %621 = vmatprep.subr.mxu0 0.0
    %622 = vmatpush1.msra.mxu0 %v250
    %623 = vmatprep.subr.mxu0 0.0
    %624 = vmatpush1.msra.mxu0 %v251
    %625 = vmatprep.subr.mxu0 0.0
    %626 = vmatpush1.msra.mxu0 %v252
    %627 = vmatprep.subr.mxu0 0.0
    %628 = vmatpush1.msra.mxu0 %v253
    %629 = vmatprep.subr.mxu0 0.0
    %630 = vmatpush1.msra.mxu0 %v254
    %631 = vmatprep.subr.mxu0 0.0
    %632 = vmatpush1.msra.mxu0 %v255
    %633 = vmatprep.subr.mxu0 0.0
    %634 = vmatpush1.msra.mxu0 %v256
    %635 = vmatprep.subr.mxu0 0.0
    %636 = vmatpush1.msra.mxu0 %v257
    %637 = vmatprep.subr.mxu0 0.0
    %638 = vmatpush1.msra.mxu0 %v258
    %639 = vmatprep.subr.mxu0 0.0
    %640 = vmatpush1.msra.mxu0 %v259
    %641 = vmatprep.subr.mxu0 0.0
    %642 = vmatpush1.msra.mxu0 %v260
    %643 = vmatprep.subr.mxu0 0.0
    %644 = vmatpush1.msra.mxu0 %v261
    %645 = vmatprep.subr.mxu0 0.0
    %646 = vmatpush1.msra.mxu0 %v262
    %647 = vmatprep.subr.mxu0 0.0
    %648 = vmatpush1.msra.mxu0 %v263
    %649 = vmatprep.subr.mxu0 0.0
    %650 = vmatpush1.msra.mxu0 %v264
    %651 = vmatprep.subr.mxu0 0.0
    %652 = vmatpush1.msra.mxu0 %v265
    %653 = vmatprep.subr.mxu0 0.0
    %654 = vmatpush1.msra.mxu0 %v266
    %655 = vmatprep.subr.mxu0 0.0
    %656 = vmatpush1.msra.mxu0 %v267
    %657 = vmatprep.subr.mxu0 0.0
    %658 = vmatpush1.msra.mxu0 %v268
    %659 = vmatprep.subr.mxu0 0.0
    %660 = vmatpush1.msra.mxu0 %v269
    %661 = vmatprep.subr.mxu0 0.0
    %662 = vmatpush1.msra.mxu0 %v270
    %663 = vmatprep.subr.mxu0 0.0
    %664 = vmatpush1.msra.mxu0 %v271
    %665 = vmatprep.subr.mxu0 0.0
    %666 = vmatpush1.msra.mxu0 %v272
    %667 = vmatprep.subr.mxu0 0.0
    %668 = vmatpush1.msra.mxu0 %v273
    %669 = vmatprep.subr.mxu0 0.0
    %670 = vmatpush1.msra.mxu0 %v274
    %671 = vmatprep.subr.mxu0 0.0
    %672 = vmatpush1.msra.mxu0 %v275
    %673 = vmatprep.subr.mxu0 0.0
    %674 = vmatpush1.msra.mxu0 %v276
    %675 = vmatprep.subr.mxu0 0.0
    %676 = vmatpush1.msra.mxu0 %v277
    %677 = vmatprep.subr.mxu0 0.0
    %678 = vmatpush1.msra.mxu0 %v278
    %679 = vmatprep.subr.mxu0 0.0
    %680 = vmatpush1.msra.mxu0 %v279
    %681 = vmatprep.subr.mxu0 0.0
    %682 = vmatpush1.msra.mxu0 %v280
    %683 = vmatprep.subr.mxu0 0.0
    %684 = vmatpush1.msra.mxu0 %v281
    %685 = vmatprep.mubr.f32.mxu0 %v107
    %686 = vmatmul.mubr.f32.gmra.mrb[0].mxu0 %v106
    %v687 = vpop.f32.mrb[0].mxu0
    %v688 = vadd.f32 %v613, %v687
    %v689 = vpop.f32.mrb[0].mxu0
    %690 = vmatprep.mubr.f32.mxu0 %v119
    %691 = vmatmul.mubr.f32.gmra.mrb[0].mxu0 %v118
    %v692 = vpop.f32.mrb[0].mxu0
    %v693 = vadd.f32 %v618, %v692
    %v694 = vpop.f32.mrb[0].mxu0
    %695 = vdwg.mxu0
    %696 = vmatprep.subr.mxu0 0.0
    %697 = vmatpush1.msra.mxu0 %v282
    %698 = vmatprep.subr.mxu0 0.0
    %699 = vmatpush1.msra.mxu0 %v283
    %700 = vmatprep.subr.mxu0 0.0
    %701 = vmatpush1.msra.mxu0 %v284
    %702 = vmatprep.subr.mxu0 0.0
    %703 = vmatpush1.msra.mxu0 %v285
    %704 = vmatprep.subr.mxu0 0.0
    %705 = vmatpush1.msra.mxu0 %v286
    %706 = vmatprep.subr.mxu0 0.0
    %707 = vmatpush1.msra.mxu0 %v287
    %708 = vmatprep.subr.mxu0 0.0
    %709 = vmatpush1.msra.mxu0 %v288
    %710 = vmatprep.subr.mxu0 0.0
    %711 = vmatpush1.msra.mxu0 %v289
    %712 = vmatprep.subr.mxu0 0.0
    %713 = vmatpush1.msra.mxu0 %v290
    %714 = vmatprep.subr.mxu0 0.0
    %715 = vmatpush1.msra.mxu0 %v291
    %716 = vmatprep.subr.mxu0 0.0
    %717 = vmatpush1.msra.mxu0 %v292
    %718 = vmatprep.subr.mxu0 0.0
    %719 = vmatpush1.msra.mxu0 %v293
    %720 = vmatprep.subr.mxu0 0.0
    %721 = vmatpush1.msra.mxu0 %v294
    %722 = vmatprep.subr.mxu0 0.0
    %723 = vmatpush1.msra.mxu0 %v295
    %724 = vmatprep.subr.mxu0 0.0
    %725 = vmatpush1.msra.mxu0 %v296
    %726 = vmatprep.subr.mxu0 0.0
    %727 = vmatpush1.msra.mxu0 %v297
    %728 = vmatprep.subr.mxu0 0.0
    %729 = vmatpush1.msra.mxu0 %v298
    %730 = vmatprep.subr.mxu0 0.0
    %731 = vmatpush1.msra.mxu0 %v299
    %732 = vmatprep.subr.mxu0 0.0
    %733 = vmatpush1.msra.mxu0 %v300
    %734 = vmatprep.subr.mxu0 0.0
    %735 = vmatpush1.msra.mxu0 %v301
    %736 = vmatprep.subr.mxu0 0.0
    %737 = vmatpush1.msra.mxu0 %v302
    %738 = vmatprep.subr.mxu0 0.0
    %739 = vmatpush1.msra.mxu0 %v303
    %740 = vmatprep.subr.mxu0 0.0
    %741 = vmatpush1.msra.mxu0 %v304
    %742 = vmatprep.subr.mxu0 0.0
    %743 = vmatpush1.msra.mxu0 %v305
    %744 = vmatprep.subr.mxu0 0.0
    %745 = vmatpush1.msra.mxu0 %v306
    %746 = vmatprep.subr.mxu0 0.0
    %747 = vmatpush1.msra.mxu0 %v307
    %748 = vmatprep.subr.mxu0 0.0
    %749 = vmatpush1.msra.mxu0 %v308
    %750 = vmatprep.subr.mxu0 0.0
    %751 = vmatpush1.msra.mxu0 %v309
    %752 = vmatprep.subr.mxu0 0.0
    %753 = vmatpush1.msra.mxu0 %v310
    %754 = vmatprep.subr.mxu0 0.0
    %755 = vmatpush1.msra.mxu0 %v311
    %756 = vmatprep.subr.mxu0 0.0
    %757 = vmatpush1.msra.mxu0 %v312
    %758 = vmatprep.subr.mxu0 0.0
    %759 = vmatpush1.msra.mxu0 %v313
    %760 = vmatprep.mubr.f32.mxu0 %v109
    %761 = vmatmul.mubr.f32.gmra.mrb[0].mxu0 %v108
    %v762 = vpop.f32.mrb[0].mxu0
    %v763 = vadd.f32 %v688, %v762
    %v764 = vpop.f32.mrb[0].mxu0
    %765 = vmatprep.mubr.f32.mxu0 %v121
    %766 = vmatmul.mubr.f32.gmra.mrb[0].mxu0 %v120
    %v767 = vpop.f32.mrb[0].mxu0
    %v768 = vadd.f32 %v693, %v767
    %v769 = vpop.f32.mrb[0].mxu0
    %770 = vdwg.mxu0
    %v771 = vld [vmem:[%s1] sm:$0xff]
    %v772 = vld [vmem:[%s1 + $0x8] sm:$0xff]
    %773 = vadd.xlane.f32.xlu0 %v763
    %v774 = vpop.xlane.xlu0 %773
    %775 = vadd.xlane.f32.xlu0 %v768
    %v776 = vpop.xlane.xlu0 %775
    %777 = vadd.xlane.f32.xlu0 %v771
    %v778 = vpop.xlane.xlu0 %777
    %779 = vadd.xlane.f32.xlu0 %v772
    %v780 = vpop.xlane.xlu0 %779
    %v781 = vadd.f32 %v774, %v778
    %v782 = vadd.f32 %v776, %v780
    %v783 = vmul.f32 %v763, %v763
    %v784 = vmul.f32 %v768, %v768
    %785 = vadd.xlane.f32.xlu0 %v783
    %v786 = vpop.xlane.xlu0 %785
    %787 = vadd.xlane.f32.xlu0 %v784
    %v788 = vpop.xlane.xlu0 %787
    %v789 = vmul.f32 %v771, %v771
    %v790 = vmul.f32 %v772, %v772
    %791 = vadd.xlane.f32.xlu0 %v789
    %v792 = vpop.xlane.xlu0 %791
    %793 = vadd.xlane.f32.xlu0 %v790
    %v794 = vpop.xlane.xlu0 %793
    %v795 = vadd.f32 %v786, %v792
    %v796 = vadd.f32 %v788, %v794
    %v797 = vrcp.pop 234.0
    %v798 = vmul.f32 %v781, %v797
    %v799 = vmul.f32 %v782, %v797
    %v800 = vmul.f32 %v798, 234.0
    %v801 = vmul.f32 %v799, 234.0
    %v802 = vmul.f32 %v800, %v798
    %v803 = vmul.f32 %v801, %v799
    %v804 = vsub.f32 %v795, %v802
    %v805 = vsub.f32 %v796, %v803
    %v806 = vrcp.pop 233.0
    %v807 = vmul.f32 %v804, %v806
    %v808 = vmul.f32 %v805, %v806
    %v809 = vadd.f32 %v807, 1e-12
    %v810 = vadd.f32 %v808, 1e-12
    %v811 = vrsqrt.pop %v809
    %v812 = vrsqrt.pop %v810
    %v813 = vsub.f32 %v763, %v798
    %v814 = vsub.f32 %v768, %v799
    %v815 = vmul.f32 %v813, %v811
    %v816 = vmul.f32 %v814, %v812
    %v817 = vsub.f32 %v771, %v798
    %v818 = vsub.f32 %v772, %v799
    %v819 = vmul.f32 %v817, %v811
    %v820 = vmul.f32 %v818, %v812
    %v821 = vld [vmem:[%s4] sm:$0xff]
    %v822 = vld [vmem:[%s4 + $0x8] sm:$0xff]
    %v823 = vld [vmem:[%s4 + $0x10] sm:$0xff]
    %v824 = vld [vmem:[%s4 + $0x18] sm:$0xff]
    %v825 = vld [vmem:[%s4 + $0x20] sm:$0xff]
    %v826 = vld [vmem:[%s4 + $0x28] sm:$0xff]
    %v827 = vld [vmem:[%s4 + $0x30] sm:$0xff]
    %v828 = vld [vmem:[%s4 + $0x38] sm:$0xff]
    %v829 = vld [vmem:[%s4 + $0x40] sm:$0xff]
    %v830 = vld [vmem:[%s4 + $0x48] sm:$0xff]
    %v831 = vld [vmem:[%s4 + $0x50] sm:$0xff]
    %v832 = vld [vmem:[%s4 + $0x58] sm:$0xff]
    %v833 = vld [vmem:[%s4 + $0x60] sm:$0xff]
    %v834 = vld [vmem:[%s4 + $0x68] sm:$0xff]
    %v835 = vld [vmem:[%s4 + $0x70] sm:$0xff]
    %v836 = vld [vmem:[%s4 + $0x78] sm:$0xff]
    %v837 = vld [vmem:[%s5] sm:$0xff]
    %v838 = vld [vmem:[%s5 + $0x8] sm:$0xff]
    %v839 = vld [vmem:[%s5 + $0x10] sm:$0xff]
    %v840 = vld [vmem:[%s5 + $0x18] sm:$0xff]
    %v841 = vld [vmem:[%s5 + $0x20] sm:$0xff]
    %v842 = vld [vmem:[%s5 + $0x28] sm:$0xff]
    %v843 = vld [vmem:[%s5 + $0x30] sm:$0xff]
    %v844 = vld [vmem:[%s5 + $0x38] sm:$0xff]
    %v845 = vld [vmem:[%s5 + $0x40] sm:$0xff]
    %v846 = vld [vmem:[%s5 + $0x48] sm:$0xff]
    %v847 = vld [vmem:[%s5 + $0x50] sm:$0xff]
    %v848 = vld [vmem:[%s5 + $0x58] sm:$0xff]
    %v849 = vld [vmem:[%s5 + $0x60] sm:$0xff]
    %v850 = vld [vmem:[%s5 + $0x68] sm:$0xff]
    %v851 = vld [vmem:[%s5 + $0x70] sm:$0xff]
    %v852 = vld [vmem:[%s5 + $0x78] sm:$0xff]
    %853 = vmatprep.subr.mxu0 0.0
    %854 = vmatpush1.msra.mxu0 %v837
    %855 = vmatprep.subr.mxu0 0.0
    %856 = vmatpush1.msra.mxu0 %v838
    %857 = vmatprep.subr.mxu0 0.0
    %858 = vmatpush1.msra.mxu0 %v839
    %859 = vmatprep.subr.mxu0 0.0
    %860 = vmatpush1.msra.mxu0 %v840
    %861 = vmatprep.subr.mxu0 0.0
    %862 = vmatpush1.msra.mxu0 %v841
    %863 = vmatprep.subr.mxu0 0.0
    %864 = vmatpush1.msra.mxu0 %v842
    %865 = vmatprep.subr.mxu0 0.0
    %866 = vmatpush1.msra.mxu0 %v843
    %867 = vmatprep.subr.mxu0 0.0
    %868 = vmatpush1.msra.mxu0 %v844
    %869 = vmatprep.subr.mxu0 0.0
    %870 = vmatpush1.msra.mxu0 %v845
    %871 = vmatprep.subr.mxu0 0.0
    %872 = vmatpush1.msra.mxu0 %v846
    %873 = vmatprep.subr.mxu0 0.0
    %874 = vmatpush1.msra.mxu0 %v847
    %875 = vmatprep.subr.mxu0 0.0
    %876 = vmatpush1.msra.mxu0 %v848
    %877 = vmatprep.subr.mxu0 0.0
    %878 = vmatpush1.msra.mxu0 %v849
    %879 = vmatprep.subr.mxu0 0.0
    %880 = vmatpush1.msra.mxu0 %v850
    %881 = vmatprep.subr.mxu0 0.0
    %882 = vmatpush1.msra.mxu0 %v851
    %883 = vmatprep.subr.mxu0 0.0
    %884 = vmatpush1.msra.mxu0 %v852
    %885 = vmatprep.subr.mxu0 0.0
    %886 = vmatpush1.msra.mxu0 0.0
    %887 = vmatprep.subr.mxu0 0.0
    %888 = vmatpush1.msra.mxu0 0.0
    %889 = vmatprep.subr.mxu0 0.0
    %890 = vmatpush1.msra.mxu0 0.0
    %891 = vmatprep.subr.mxu0 0.0
    %892 = vmatpush1.msra.mxu0 0.0
    %893 = vmatprep.subr.mxu0 0.0
    %894 = vmatpush1.msra.mxu0 0.0
    %895 = vmatprep.subr.mxu0 0.0
    %896 = vmatpush1.msra.mxu0 0.0
    %897 = vmatprep.subr.mxu0 0.0
    %898 = vmatpush1.msra.mxu0 0.0
    %899 = vmatprep.subr.mxu0 0.0
    %900 = vmatpush1.msra.mxu0 0.0
    %901 = vmatprep.subr.mxu0 0.0
    %902 = vmatpush1.msra.mxu0 0.0
    %903 = vmatprep.subr.mxu0 0.0
    %904 = vmatpush1.msra.mxu0 0.0
    %905 = vmatprep.subr.mxu0 0.0
    %906 = vmatpush1.msra.mxu0 0.0
    %907 = vmatprep.subr.mxu0 0.0
    %908 = vmatpush1.msra.mxu0 0.0
    %909 = vmatprep.subr.mxu0 0.0
    %910 = vmatpush1.msra.mxu0 0.0
    %911 = vmatprep.subr.mxu0 0.0
    %912 = vmatpush1.msra.mxu0 0.0
    %913 = vmatprep.subr.mxu0 0.0
    %914 = vmatpush1.msra.mxu0 0.0
    %915 = vmatprep.subr.mxu0 0.0
    %916 = vmatpush1.msra.mxu0 0.0
    %917 = vmatprep.mubr.f32.mxu0 0.0
    %918 = vmatmul.mubr.f32.gmra.mrb[0].mxu0 %v819
    %v919 = vpop.f32.mrb[0].mxu0
    %v920 = vadd.f32 0.0, %v919
    %v921 = vpop.f32.mrb[0].mxu0
    %922 = vmatprep.mubr.f32.mxu0 0.0
    %923 = vmatmul.mubr.f32.gmra.mrb[0].mxu0 %v820
    %v924 = vpop.f32.mrb[0].mxu0
    %v925 = vadd.f32 0.0, %v924
    %v926 = vpop.f32.mrb[0].mxu0
    %927 = vdwg.mxu0
    %928 = vmatprep.subr.mxu0 0.0
    %929 = vmatpush1.msra.mxu0 %v821
    %930 = vmatprep.subr.mxu0 0.0
    %931 = vmatpush1.msra.mxu0 %v822
    %932 = vmatprep.subr.mxu0 0.0
    %933 = vmatpush1.msra.mxu0 %v823
    %934 = vmatprep.subr.mxu0 0.0
    %935 = vmatpush1.msra.mxu0 %v824
    %936 = vmatprep.subr.mxu0 0.0
    %937 = vmatpush1.msra.mxu0 %v825
    %938 = vmatprep.subr.mxu0 0.0
    %939 = vmatpush1.msra.mxu0 %v826
    %940 = vmatprep.subr.mxu0 0.0
    %941 = vmatpush1.msra.mxu0 %v827
    %942 = vmatprep.subr.mxu0 0.0
    %943 = vmatpush1.msra.mxu0 %v828
    %944 = vmatprep.subr.mxu0 0.0
    %945 = vmatpush1.msra.mxu0 %v829
    %946 = vmatprep.subr.mxu0 0.0
    %947 = vmatpush1.msra.mxu0 %v830
    %948 = vmatprep.subr.mxu0 0.0
    %949 = vmatpush1.msra.mxu0 %v831
    %950 = vmatprep.subr.mxu0 0.0
    %951 = vmatpush1.msra.mxu0 %v832
    %952 = vmatprep.subr.mxu0 0.0
    %953 = vmatpush1.msra.mxu0 %v833
    %954 = vmatprep.subr.mxu0 0.0
    %955 = vmatpush1.msra.mxu0 %v834
    %956 = vmatprep.subr.mxu0 0.0
    %957 = vmatpush1.msra.mxu0 %v835
    %958 = vmatprep.subr.mxu0 0.0
    %959 = vmatpush1.msra.mxu0 %v836
    %960 = vmatprep.subr.mxu0 0.0
    %961 = vmatpush1.msra.mxu0 0.0
    %962 = vmatprep.subr.mxu0 0.0
    %963 = vmatpush1.msra.mxu0 0.0
    %964 = vmatprep.subr.mxu0 0.0
    %965 = vmatpush1.msra.mxu0 0.0
    %966 = vmatprep.subr.mxu0 0.0
    %967 = vmatpush1.msra.mxu0 0.0
    %968 = vmatprep.subr.mxu0 0.0
    %969 = vmatpush1.msra.mxu0 0.0
    %970 = vmatprep.subr.mxu0 0.0
    %971 = vmatpush1.msra.mxu0 0.0
    %972 = vmatprep.subr.mxu0 0.0
    %973 = vmatpush1.msra.mxu0 0.0
    %974 = vmatprep.subr.mxu0 0.0
    %975 = vmatpush1.msra.mxu0 0.0
    %976 = vmatprep.subr.mxu0 0.0
    %977 = vmatpush1.msra.mxu0 0.0
    %978 = vmatprep.subr.mxu0 0.0
    %979 = vmatpush1.msra.mxu0 0.0
    %980 = vmatprep.subr.mxu0 0.0
    %981 = vmatpush1.msra.mxu0 0.0
    %982 = vmatprep.subr.mxu0 0.0
    %983 = vmatpush1.msra.mxu0 0.0
    %984 = vmatprep.subr.mxu0 0.0
    %985 = vmatpush1.msra.mxu0 0.0
    %986 = vmatprep.subr.mxu0 0.0
    %987 = vmatpush1.msra.mxu0 0.0
    %988 = vmatprep.subr.mxu0 0.0
    %989 = vmatpush1.msra.mxu0 0.0
    %990 = vmatprep.subr.mxu0 0.0
    %991 = vmatpush1.msra.mxu0 0.0
    %992 = vmatprep.mubr.f32.mxu0 0.0
    %993 = vmatmul.mubr.f32.gmra.mrb[0].mxu0 %v815
    %v994 = vpop.f32.mrb[0].mxu0
    %v995 = vadd.f32 %v920, %v994
    %v996 = vpop.f32.mrb[0].mxu0
    %997 = vmatprep.mubr.f32.mxu0 0.0
    %998 = vmatmul.mubr.f32.gmra.mrb[0].mxu0 %v816
    %v999 = vpop.f32.mrb[0].mxu0
    %v1000 = vadd.f32 %v925, %v999
    %v1001 = vpop.f32.mrb[0].mxu0
    %1002 = vdwg.mxu0
    %v1003 = vld [vmem:[%s6] sm:$0x1]
    %v1005 = vlaneseq
    %v1006 = vshrl.u32 %v1005, 7
    %v1007 = vsub.s32 0, %v1006
    %v1008 = vrot.slane %v1003, %v1007
    %v1010 = vadd.f32 %v995, %v1008
    %v1011 = vadd.f32 %v1000, %v1008
    %v1012 = vmax.f32 %v1010, 0.0
    %v1013 = vmax.f32 %v1011, 0.0
    %v1014 = vld [vmem:[#allocation3] sm:$0xff]
    %v1015 = vld [vmem:[#allocation3 + $0x8] sm:$0xff]
    %v1016 = vld [vmem:[#allocation3 + $0x10] sm:$0xff]
    %v1017 = vld [vmem:[#allocation3 + $0x18] sm:$0xff]
    %v1018 = vld [vmem:[#allocation3 + $0x20] sm:$0xff]
    %v1019 = vld [vmem:[#allocation3 + $0x28] sm:$0xff]
    %v1020 = vld [vmem:[#allocation3 + $0x30] sm:$0xff]
    %v1021 = vld [vmem:[#allocation3 + $0x38] sm:$0xff]
    %v1022 = vld [vmem:[#allocation3 + $0x40] sm:$0xff]
    %v1023 = vld [vmem:[#allocation3 + $0x48] sm:$0xff]
    %v1024 = vld [vmem:[#allocation3 + $0x50] sm:$0xff]
    %v1025 = vld [vmem:[#allocation3 + $0x58] sm:$0xff]
    %v1026 = vld [vmem:[#allocation3 + $0x60] sm:$0xff]
    %v1027 = vld [vmem:[#allocation3 + $0x68] sm:$0xff]
    %v1028 = vld [vmem:[#allocation3 + $0x70] sm:$0xff]
    %v1029 = vld [vmem:[#allocation3 + $0x78] sm:$0xff]
    %v1030 = vld [vmem:[#allocation3 + $0x80] sm:$0xff]
    %v1031 = vld [vmem:[#allocation3 + $0x88] sm:$0xff]
    %v1032 = vld [vmem:[#allocation3 + $0x90] sm:$0xff]
    %v1033 = vld [vmem:[#allocation3 + $0x98] sm:$0xff]
    %v1034 = vld [vmem:[#allocation3 + $0xa0] sm:$0xff]
    %v1035 = vld [vmem:[#allocation3 + $0xa8] sm:$0xff]
    %v1036 = vld [vmem:[#allocation3 + $0xb0] sm:$0xff]
    %v1037 = vld [vmem:[#allocation3 + $0xb8] sm:$0xff]
    %v1038 = vld [vmem:[#allocation3 + $0xc0] sm:$0xff]
    %v1039 = vld [vmem:[#allocation3 + $0xc8] sm:$0xff]
    %v1040 = vld [vmem:[#allocation3 + $0xd0] sm:$0xff]
    %v1041 = vld [vmem:[#allocation3 + $0xd8] sm:$0xff]
    %v1042 = vld [vmem:[#allocation3 + $0xe0] sm:$0xff]
    %v1043 = vld [vmem:[#allocation3 + $0xe8] sm:$0xff]
    %v1044 = vld [vmem:[#allocation3 + $0xf0] sm:$0xff]
    %v1045 = vld [vmem:[#allocation3 + $0xf8] sm:$0xff]
    %v1046 = vld [vmem:[#allocation3 + $0x100] sm:$0xff]
    %v1047 = vld [vmem:[#allocation3 + $0x108] sm:$0xff]
    %v1048 = vld [vmem:[#allocation3 + $0x110] sm:$0xff]
    %v1049 = vld [vmem:[#allocation3 + $0x118] sm:$0xff]
    %v1050 = vld [vmem:[#allocation3 + $0x120] sm:$0xff]
    %v1051 = vld [vmem:[#allocation3 + $0x128] sm:$0xff]
    %v1052 = vld [vmem:[#allocation3 + $0x130] sm:$0xff]
    %v1053 = vld [vmem:[#allocation3 + $0x138] sm:$0xff]
    %v1054 = vld [vmem:[#allocation3 + $0x140] sm:$0xff]
    %v1055 = vld [vmem:[#allocation3 + $0x148] sm:$0xff]
    %v1056 = vld [vmem:[#allocation3 + $0x150] sm:$0xff]
    %v1057 = vld [vmem:[#allocation3 + $0x158] sm:$0xff]
    %v1058 = vld [vmem:[#allocation3 + $0x160] sm:$0xff]
    %v1059 = vld [vmem:[#allocation3 + $0x168] sm:$0xff]
    %v1060 = vld [vmem:[#allocation3 + $0x170] sm:$0xff]
    %v1061 = vld [vmem:[#allocation3 + $0x178] sm:$0xff]
    %v1062 = vld [vmem:[#allocation3 + $0x180] sm:$0xff]
    %v1063 = vld [vmem:[#allocation3 + $0x188] sm:$0xff]
    %v1064 = vld [vmem:[#allocation3 + $0x190] sm:$0xff]
    %v1065 = vld [vmem:[#allocation3 + $0x198] sm:$0xff]
    %v1066 = vld [vmem:[#allocation3 + $0x1a0] sm:$0xff]
    %v1067 = vld [vmem:[#allocation3 + $0x1a8] sm:$0xff]
    %v1068 = vld [vmem:[#allocation3 + $0x1b0] sm:$0xff]
    %v1069 = vld [vmem:[#allocation3 + $0x1b8] sm:$0xff]
    %v1070 = vld [vmem:[#allocation3 + $0x1c0] sm:$0xff]
    %v1071 = vld [vmem:[#allocation3 + $0x1c8] sm:$0xff]
    %v1072 = vld [vmem:[#allocation3 + $0x1d0] sm:$0xff]
    %v1073 = vld [vmem:[#allocation3 + $0x1d8] sm:$0xff]
    %v1074 = vld [vmem:[#allocation3 + $0x1e0] sm:$0xff]
    %v1075 = vld [vmem:[#allocation3 + $0x1e8] sm:$0xff]
    %v1076 = vld [vmem:[#allocation3 + $0x1f0] sm:$0xff]
    %v1077 = vld [vmem:[#allocation3 + $0x1f8] sm:$0xff]
    %v1078 = vld [vmem:[%s9] sm:$0xf]
    %v1080 = vlaneseq
    %v1081 = vshrl.u32 %v1080, 7
    %v1082 = vsub.s32 0, %v1081
    %v1083 = vrot.slane %v1078, %v1082
    %v1084 = vlaneseq
    %v1085 = vshrl.u32 %v1084, 7
    %v1086 = vsub.s32 1, %v1085
    %v1087 = vrot.slane %v1078, %v1086
    %v1088 = vlaneseq
    %v1089 = vshrl.u32 %v1088, 7
    %v1090 = vsub.s32 2, %v1089
    %v1091 = vrot.slane %v1078, %v1090
    %v1092 = vlaneseq
    %v1093 = vshrl.u32 %v1092, 7
    %v1094 = vsub.s32 3, %v1093
    %v1095 = vrot.slane %v1078, %v1094
    %1100 = vmatprep.subr.mxu0 %v1015
    %1101 = vmatpush1.msra.mxu0 %v1014
    %1102 = vmatprep.subr.mxu0 %v1019
    %1103 = vmatpush1.msra.mxu0 %v1018
    %1104 = vmatprep.subr.mxu0 %v1023
    %1105 = vmatpush1.msra.mxu0 %v1022
    %1106 = vmatprep.subr.mxu0 %v1027
    %1107 = vmatpush1.msra.mxu0 %v1026
    %1108 = vmatprep.subr.mxu0 %v1031
    %1109 = vmatpush1.msra.mxu0 %v1030
    %1110 = vmatprep.subr.mxu0 %v1035
    %1111 = vmatpush1.msra.mxu0 %v1034
    %1112 = vmatprep.subr.mxu0 %v1039
    %1113 = vmatpush1.msra.mxu0 %v1038
    %1114 = vmatprep.subr.mxu0 %v1043
    %1115 = vmatpush1.msra.mxu0 %v1042
    %1116 = vmatprep.subr.mxu0 %v1047
    %1117 = vmatpush1.msra.mxu0 %v1046
    %1118 = vmatprep.subr.mxu0 %v1051
    %1119 = vmatpush1.msra.mxu0 %v1050
    %1120 = vmatprep.subr.mxu0 %v1055
    %1121 = vmatpush1.msra.mxu0 %v1054
    %1122 = vmatprep.subr.mxu0 %v1059
    %1123 = vmatpush1.msra.mxu0 %v1058
    %1124 = vmatprep.subr.mxu0 %v1063
    %1125 = vmatpush1.msra.mxu0 %v1062
    %1126 = vmatprep.subr.mxu0 %v1067
    %1127 = vmatpush1.msra.mxu0 %v1066
    %1128 = vmatprep.subr.mxu0 %v1071
    %1129 = vmatpush1.msra.mxu0 %v1070
    %1130 = vmatprep.subr.mxu0 %v1075
    %1131 = vmatpush1.msra.mxu0 %v1074
    %1132 = vmatprep.subr.mxu0 0.0
    %1133 = vmatpush1.msra.mxu0 0.0
    %1134 = vmatprep.subr.mxu0 0.0
    %1135 = vmatpush1.msra.mxu0 0.0
    %1136 = vmatprep.subr.mxu0 0.0
    %1137 = vmatpush1.msra.mxu0 0.0
    %1138 = vmatprep.subr.mxu0 0.0
    %1139 = vmatpush1.msra.mxu0 0.0
    %1140 = vmatprep.subr.mxu0 0.0
    %1141 = vmatpush1.msra.mxu0 0.0
    %1142 = vmatprep.subr.mxu0 0.0
    %1143 = vmatpush1.msra.mxu0 0.0
    %1144 = vmatprep.subr.mxu0 0.0
    %1145 = vmatpush1.msra.mxu0 0.0
    %1146 = vmatprep.subr.mxu0 0.0
    %1147 = vmatpush1.msra.mxu0 0.0
    %1148 = vmatprep.subr.mxu0 0.0
    %1149 = vmatpush1.msra.mxu0 0.0
    %1150 = vmatprep.subr.mxu0 0.0
    %1151 = vmatpush1.msra.mxu0 0.0
    %1152 = vmatprep.subr.mxu0 0.0
    %1153 = vmatpush1.msra.mxu0 0.0
    %1154 = vmatprep.subr.mxu0 0.0
    %1155 = vmatpush1.msra.mxu0 0.0
    %1156 = vmatprep.subr.mxu0 0.0
    %1157 = vmatpush1.msra.mxu0 0.0
    %1158 = vmatprep.subr.mxu0 0.0
    %1159 = vmatpush1.msra.mxu0 0.0
    %1160 = vmatprep.subr.mxu0 0.0
    %1161 = vmatpush1.msra.mxu0 0.0
    %1162 = vmatprep.subr.mxu0 0.0
    %1163 = vmatpush1.msra.mxu0 0.0
    %1164 = vmatprep.mubr.f32.mxu0 0.0
    %1165 = vmatmul.mubr.f32.gmra.mrb[0].mxu0 %v1012
    %v1166 = vpop.f32.mrb[0].mxu0
    %v1167 = vadd.f32 %v1083, %v1166
    %v1168 = vpop.f32.mrb[0].mxu0
    %v1169 = vadd.f32 %v1087, %v1168
    %1170 = vmatprep.mubr.f32.mxu0 0.0
    %1171 = vmatmul.mubr.f32.gmra.mrb[0].mxu0 %v1013
    %v1172 = vpop.f32.mrb[0].mxu0
    %v1173 = vadd.f32 %v1083, %v1172
    %v1174 = vpop.f32.mrb[0].mxu0
    %v1175 = vadd.f32 %v1087, %v1174
    %1176 = vdwg.mxu0
    %1177 = vmatprep.subr.mxu0 %v1017
    %1178 = vmatpush1.msra.mxu0 %v1016
    %1179 = vmatprep.subr.mxu0 %v1021
    %1180 = vmatpush1.msra.mxu0 %v1020
    %1181 = vmatprep.subr.mxu0 %v1025
    %1182 = vmatpush1.msra.mxu0 %v1024
    %1183 = vmatprep.subr.mxu0 %v1029
    %1184 = vmatpush1.msra.mxu0 %v1028
    %1185 = vmatprep.subr.mxu0 %v1033
    %1186 = vmatpush1.msra.mxu0 %v1032
    %1187 = vmatprep.subr.mxu0 %v1037
    %1188 = vmatpush1.msra.mxu0 %v1036
    %1189 = vmatprep.subr.mxu0 %v1041
    %1190 = vmatpush1.msra.mxu0 %v1040
    %1191 = vmatprep.subr.mxu0 %v1045
    %1192 = vmatpush1.msra.mxu0 %v1044
    %1193 = vmatprep.subr.mxu0 %v1049
    %1194 = vmatpush1.msra.mxu0 %v1048
    %1195 = vmatprep.subr.mxu0 %v1053
    %1196 = vmatpush1.msra.mxu0 %v1052
    %1197 = vmatprep.subr.mxu0 %v1057
    %1198 = vmatpush1.msra.mxu0 %v1056
    %1199 = vmatprep.subr.mxu0 %v1061
    %1200 = vmatpush1.msra.mxu0 %v1060
    %1201 = vmatprep.subr.mxu0 %v1065
    %1202 = vmatpush1.msra.mxu0 %v1064
    %1203 = vmatprep.subr.mxu0 %v1069
    %1204 = vmatpush1.msra.mxu0 %v1068
    %1205 = vmatprep.subr.mxu0 %v1073
    %1206 = vmatpush1.msra.mxu0 %v1072
    %1207 = vmatprep.subr.mxu0 %v1077
    %1208 = vmatpush1.msra.mxu0 %v1076
    %1209 = vmatprep.subr.mxu0 0.0
    %1210 = vmatpush1.msra.mxu0 0.0
    %1211 = vmatprep.subr.mxu0 0.0
    %1212 = vmatpush1.msra.mxu0 0.0
    %1213 = vmatprep.subr.mxu0 0.0
    %1214 = vmatpush1.msra.mxu0 0.0
    %1215 = vmatprep.subr.mxu0 0.0
    %1216 = vmatpush1.msra.mxu0 0.0
    %1217 = vmatprep.subr.mxu0 0.0
    %1218 = vmatpush1.msra.mxu0 0.0
    %1219 = vmatprep.subr.mxu0 0.0
    %1220 = vmatpush1.msra.mxu0 0.0
    %1221 = vmatprep.subr.mxu0 0.0
    %1222 = vmatpush1.msra.mxu0 0.0
    %1223 = vmatprep.subr.mxu0 0.0
    %1224 = vmatpush1.msra.mxu0 0.0
    %1225 = vmatprep.subr.mxu0 0.0
    %1226 = vmatpush1.msra.mxu0 0.0
    %1227 = vmatprep.subr.mxu0 0.0
    %1228 = vmatpush1.msra.mxu0 0.0
    %1229 = vmatprep.subr.mxu0 0.0
    %1230 = vmatpush1.msra.mxu0 0.0
    %1231 = vmatprep.subr.mxu0 0.0
    %1232 = vmatpush1.msra.mxu0 0.0
    %1233 = vmatprep.subr.mxu0 0.0
    %1234 = vmatpush1.msra.mxu0 0.0
    %1235 = vmatprep.subr.mxu0 0.0
    %1236 = vmatpush1.msra.mxu0 0.0
    %1237 = vmatprep.subr.mxu0 0.0
    %1238 = vmatpush1.msra.mxu0 0.0
    %1239 = vmatprep.subr.mxu0 0.0
    %1240 = vmatpush1.msra.mxu0 0.0
    %1241 = vmatprep.mubr.f32.mxu0 0.0
    %1242 = vmatmul.mubr.f32.gmra.mrb[0].mxu0 %v1012
    %v1243 = vpop.f32.mrb[0].mxu0
    %v1244 = vadd.f32 %v1091, %v1243
    %v1245 = vpop.f32.mrb[0].mxu0
    %v1246 = vadd.f32 %v1095, %v1245
    %1247 = vmatprep.mubr.f32.mxu0 0.0
    %1248 = vmatmul.mubr.f32.gmra.mrb[0].mxu0 %v1013
    %v1249 = vpop.f32.mrb[0].mxu0
    %v1250 = vadd.f32 %v1091, %v1249
    %v1251 = vpop.f32.mrb[0].mxu0
    %v1252 = vadd.f32 %v1095, %v1251
    %1253 = vdwg.mxu0
    %v1254 = vld [vmem:[%s10] sm:$0xf]
    %v1256 = vlaneseq
    %v1257 = vshrl.u32 %v1256, 7
    %v1258 = vsub.s32 0, %v1257
    %v1259 = vrot.slane %v1254, %v1258
    %v1260 = vlaneseq
    %v1261 = vshrl.u32 %v1260, 7
    %v1262 = vsub.s32 1, %v1261
    %v1263 = vrot.slane %v1254, %v1262
    %v1264 = vlaneseq
    %v1265 = vshrl.u32 %v1264, 7
    %v1266 = vsub.s32 2, %v1265
    %v1267 = vrot.slane %v1254, %v1266
    %v1268 = vlaneseq
    %v1269 = vshrl.u32 %v1268, 7
    %v1270 = vsub.s32 3, %v1269
    %v1271 = vrot.slane %v1254, %v1270
    %v1276 = vadd.f32 %v1167, %v1259
    %v1277 = vadd.f32 %v1169, %v1263
    %v1278 = vadd.f32 %v1244, %v1267
    %v1279 = vadd.f32 %v1246, %v1271
    %v1280 = vadd.f32 %v1173, %v1259
    %v1281 = vadd.f32 %v1175, %v1263
    %v1282 = vadd.f32 %v1250, %v1267
    %v1283 = vadd.f32 %v1252, %v1271
    %1284 = vst [vmem:[#allocation2] sm:$0xff] %v1276
    %1285 = vst [vmem:[#allocation2 + $0x8] sm:$0xff] %v1277
    %1286 = vst [vmem:[#allocation2 + $0x10] sm:$0xff] %v1278
    %1287 = vst [vmem:[#allocation2 + $0x18] sm:$0xff] %v1279
    %1288 = vst [vmem:[#allocation2 + $0x20] sm:$0xff] %v1280
    %1289 = vst [vmem:[#allocation2 + $0x28] sm:$0xff] %v1281
    %1290 = vst [vmem:[#allocation2 + $0x30] sm:$0xff] %v1282
    %1291 = vst [vmem:[#allocation2 + $0x38] sm:$0xff] %v1283
    %v1292 = vld [vmem:[#allocation2] ss:$8 sm:$0xf]
    %s1293 = scalar_lea.vmem [#allocation2], 32
    %v1294 = vld [vmem:[%s1293] ss:$8 sm:$0xf]
    %v1295 = vld [vmem:[#allocation6] sm:$0xff]
    %v1296 = vld [vmem:[#allocation6 + $0x8] sm:$0xff]
    %v1297 = vld [vmem:[#allocation6 + $0x10] sm:$0xff]
    %v1298 = vld [vmem:[#allocation6 + $0x18] sm:$0xff]
    %v1299 = vld [vmem:[#allocation6 + $0x20] sm:$0xff]
    %v1300 = vld [vmem:[#allocation6 + $0x28] sm:$0xff]
    %v1301 = vld [vmem:[#allocation6 + $0x30] sm:$0xff]
    %v1302 = vld [vmem:[#allocation6 + $0x38] sm:$0xff]
    %v1303 = vld [vmem:[#allocation6 + $0x40] sm:$0xff]
    %v1304 = vld [vmem:[#allocation6 + $0x48] sm:$0xff]
    %v1305 = vld [vmem:[#allocation6 + $0x50] sm:$0xff]
    %v1306 = vld [vmem:[#allocation6 + $0x58] sm:$0xff]
    %v1307 = vld [vmem:[#allocation6 + $0x60] sm:$0xff]
    %v1308 = vld [vmem:[#allocation6 + $0x68] sm:$0xff]
    %v1309 = vld [vmem:[#allocation6 + $0x70] sm:$0xff]
    %v1310 = vld [vmem:[#allocation6 + $0x78] sm:$0xff]
    %v1311 = vld [vmem:[#allocation6 + $0x80] sm:$0xff]
    %v1312 = vld [vmem:[#allocation6 + $0x88] sm:$0xff]
    %v1313 = vld [vmem:[#allocation6 + $0x90] sm:$0xff]
    %v1314 = vld [vmem:[#allocation6 + $0x98] sm:$0xff]
    %v1315 = vld [vmem:[#allocation6 + $0xa0] sm:$0xff]
    %v1316 = vld [vmem:[#allocation6 + $0xa8] sm:$0xff]
    %v1317 = vld [vmem:[#allocation6 + $0xb0] sm:$0xff]
    %v1318 = vld [vmem:[#allocation6 + $0xb8] sm:$0xff]
    %v1319 = vld [vmem:[#allocation6 + $0xc0] sm:$0xff]
    %v1320 = vld [vmem:[#allocation6 + $0xc8] sm:$0xff]
    %v1321 = vld [vmem:[#allocation6 + $0xd0] sm:$0xff]
    %v1322 = vld [vmem:[#allocation6 + $0xd8] sm:$0xff]
    %v1323 = vld [vmem:[#allocation6 + $0xe0] sm:$0xff]
    %v1324 = vld [vmem:[#allocation6 + $0xe8] sm:$0xff]
    %v1325 = vld [vmem:[#allocation6 + $0xf0] sm:$0xff]
    %v1326 = vld [vmem:[#allocation6 + $0xf8] sm:$0xff]
    %v1327 = vld [vmem:[#allocation6 + $0x100] sm:$0xff]
    %v1328 = vld [vmem:[#allocation6 + $0x108] sm:$0xff]
    %v1329 = vld [vmem:[#allocation6 + $0x110] sm:$0xff]
    %v1330 = vld [vmem:[#allocation6 + $0x118] sm:$0xff]
    %v1331 = vld [vmem:[#allocation6 + $0x120] sm:$0xff]
    %v1332 = vld [vmem:[#allocation6 + $0x128] sm:$0xff]
    %v1333 = vld [vmem:[#allocation6 + $0x130] sm:$0xff]
    %v1334 = vld [vmem:[#allocation6 + $0x138] sm:$0xff]
    %v1335 = vld [vmem:[#allocation6 + $0x140] sm:$0xff]
    %v1336 = vld [vmem:[#allocation6 + $0x148] sm:$0xff]
    %v1337 = vld [vmem:[#allocation6 + $0x150] sm:$0xff]
    %v1338 = vld [vmem:[#allocation6 + $0x158] sm:$0xff]
    %v1339 = vld [vmem:[#allocation6 + $0x160] sm:$0xff]
    %v1340 = vld [vmem:[#allocation6 + $0x168] sm:$0xff]
    %v1341 = vld [vmem:[#allocation6 + $0x170] sm:$0xff]
    %v1342 = vld [vmem:[#allocation6 + $0x178] sm:$0xff]
    %v1343 = vld [vmem:[#allocation6 + $0x180] sm:$0xff]
    %v1344 = vld [vmem:[#allocation6 + $0x188] sm:$0xff]
    %v1345 = vld [vmem:[#allocation6 + $0x190] sm:$0xff]
    %v1346 = vld [vmem:[#allocation6 + $0x198] sm:$0xff]
    %v1347 = vld [vmem:[#allocation6 + $0x1a0] sm:$0xff]
    %v1348 = vld [vmem:[#allocation6 + $0x1a8] sm:$0xff]
    %v1349 = vld [vmem:[#allocation6 + $0x1b0] sm:$0xff]
    %v1350 = vld [vmem:[#allocation6 + $0x1b8] sm:$0xff]
    %v1351 = vld [vmem:[#allocation6 + $0x1c0] sm:$0xff]
    %v1352 = vld [vmem:[#allocation6 + $0x1c8] sm:$0xff]
    %v1353 = vld [vmem:[#allocation6 + $0x1d0] sm:$0xff]
    %v1354 = vld [vmem:[#allocation6 + $0x1d8] sm:$0xff]
    %v1355 = vld [vmem:[#allocation6 + $0x1e0] sm:$0xff]
    %v1356 = vld [vmem:[#allocation6 + $0x1e8] sm:$0xff]
    %v1357 = vld [vmem:[#allocation6 + $0x1f0] sm:$0xff]
    %v1358 = vld [vmem:[#allocation6 + $0x1f8] sm:$0xff]
    %1359 = vmatprep.subr.mxu0 %v1296
    %1360 = vmatpush1.msra.mxu0 %v1295
    %1361 = vmatprep.subr.mxu0 %v1300
    %1362 = vmatpush1.msra.mxu0 %v1299
    %1363 = vmatprep.subr.mxu0 %v1304
    %1364 = vmatpush1.msra.mxu0 %v1303
    %1365 = vmatprep.subr.mxu0 %v1308
    %1366 = vmatpush1.msra.mxu0 %v1307
    %1367 = vmatprep.subr.mxu0 %v1312
    %1368 = vmatpush1.msra.mxu0 %v1311
    %1369 = vmatprep.subr.mxu0 %v1316
    %1370 = vmatpush1.msra.mxu0 %v1315
    %1371 = vmatprep.subr.mxu0 %v1320
    %1372 = vmatpush1.msra.mxu0 %v1319
    %1373 = vmatprep.subr.mxu0 %v1324
    %1374 = vmatpush1.msra.mxu0 %v1323
    %1375 = vmatprep.subr.mxu0 %v1328
    %1376 = vmatpush1.msra.mxu0 %v1327
    %1377 = vmatprep.subr.mxu0 %v1332
    %1378 = vmatpush1.msra.mxu0 %v1331
    %1379 = vmatprep.subr.mxu0 %v1336
    %1380 = vmatpush1.msra.mxu0 %v1335
    %1381 = vmatprep.subr.mxu0 %v1340
    %1382 = vmatpush1.msra.mxu0 %v1339
    %1383 = vmatprep.subr.mxu0 %v1344
    %1384 = vmatpush1.msra.mxu0 %v1343
    %1385 = vmatprep.subr.mxu0 %v1348
    %1386 = vmatpush1.msra.mxu0 %v1347
    %1387 = vmatprep.subr.mxu0 %v1352
    %1388 = vmatpush1.msra.mxu0 %v1351
    %1389 = vmatprep.subr.mxu0 %v1356
    %1390 = vmatpush1.msra.mxu0 %v1355
    %1391 = vmatprep.subr.mxu0 0.0
    %1392 = vmatpush1.msra.mxu0 0.0
    %1393 = vmatprep.subr.mxu0 0.0
    %1394 = vmatpush1.msra.mxu0 0.0
    %1395 = vmatprep.subr.mxu0 0.0
    %1396 = vmatpush1.msra.mxu0 0.0
    %1397 = vmatprep.subr.mxu0 0.0
    %1398 = vmatpush1.msra.mxu0 0.0
    %1399 = vmatprep.subr.mxu0 0.0
    %1400 = vmatpush1.msra.mxu0 0.0
    %1401 = vmatprep.subr.mxu0 0.0
    %1402 = vmatpush1.msra.mxu0 0.0
    %1403 = vmatprep.subr.mxu0 0.0
    %1404 = vmatpush1.msra.mxu0 0.0
    %1405 = vmatprep.subr.mxu0 0.0
    %1406 = vmatpush1.msra.mxu0 0.0
    %1407 = vmatprep.subr.mxu0 0.0
    %1408 = vmatpush1.msra.mxu0 0.0
    %1409 = vmatprep.subr.mxu0 0.0
    %1410 = vmatpush1.msra.mxu0 0.0
    %1411 = vmatprep.subr.mxu0 0.0
    %1412 = vmatpush1.msra.mxu0 0.0
    %1413 = vmatprep.subr.mxu0 0.0
    %1414 = vmatpush1.msra.mxu0 0.0
    %1415 = vmatprep.subr.mxu0 0.0
    %1416 = vmatpush1.msra.mxu0 0.0
    %1417 = vmatprep.subr.mxu0 0.0
    %1418 = vmatpush1.msra.mxu0 0.0
    %1419 = vmatprep.subr.mxu0 0.0
    %1420 = vmatpush1.msra.mxu0 0.0
    %1421 = vmatprep.subr.mxu0 0.0
    %1422 = vmatpush1.msra.mxu0 0.0
    %1423 = vmatprep.mubr.f32.mxu0 0.0
    %1424 = vmatmul.mubr.f32.gmra.mrb[0].mxu0 0.0
    %v1425 = vpop.f32.mrb[0].mxu0
    %v1426 = vadd.f32 0.0, %v1425
    %v1427 = vpop.f32.mrb[0].mxu0
    %v1428 = vadd.f32 0.0, %v1427
    %1429 = vdwg.mxu0
    %1430 = vmatprep.subr.mxu0 %v1298
    %1431 = vmatpush1.msra.mxu0 %v1297
    %1432 = vmatprep.subr.mxu0 %v1302
    %1433 = vmatpush1.msra.mxu0 %v1301
    %1434 = vmatprep.subr.mxu0 %v1306
    %1435 = vmatpush1.msra.mxu0 %v1305
    %1436 = vmatprep.subr.mxu0 %v1310
    %1437 = vmatpush1.msra.mxu0 %v1309
    %1438 = vmatprep.subr.mxu0 %v1314
    %1439 = vmatpush1.msra.mxu0 %v1313
    %1440 = vmatprep.subr.mxu0 %v1318
    %1441 = vmatpush1.msra.mxu0 %v1317
    %1442 = vmatprep.subr.mxu0 %v1322
    %1443 = vmatpush1.msra.mxu0 %v1321
    %1444 = vmatprep.subr.mxu0 %v1326
    %1445 = vmatpush1.msra.mxu0 %v1325
    %1446 = vmatprep.subr.mxu0 %v1330
    %1447 = vmatpush1.msra.mxu0 %v1329
    %1448 = vmatprep.subr.mxu0 %v1334
    %1449 = vmatpush1.msra.mxu0 %v1333
    %1450 = vmatprep.subr.mxu0 %v1338
    %1451 = vmatpush1.msra.mxu0 %v1337
    %1452 = vmatprep.subr.mxu0 %v1342
    %1453 = vmatpush1.msra.mxu0 %v1341
    %1454 = vmatprep.subr.mxu0 %v1346
    %1455 = vmatpush1.msra.mxu0 %v1345
    %1456 = vmatprep.subr.mxu0 %v1350
    %1457 = vmatpush1.msra.mxu0 %v1349
    %1458 = vmatprep.subr.mxu0 %v1354
    %1459 = vmatpush1.msra.mxu0 %v1353
    %1460 = vmatprep.subr.mxu0 %v1358
    %1461 = vmatpush1.msra.mxu0 %v1357
    %1462 = vmatprep.subr.mxu0 0.0
    %1463 = vmatpush1.msra.mxu0 0.0
    %1464 = vmatprep.subr.mxu0 0.0
    %1465 = vmatpush1.msra.mxu0 0.0
    %1466 = vmatprep.subr.mxu0 0.0
    %1467 = vmatpush1.msra.mxu0 0.0
    %1468 = vmatprep.subr.mxu0 0.0
    %1469 = vmatpush1.msra.mxu0 0.0
    %1470 = vmatprep.subr.mxu0 0.0
    %1471 = vmatpush1.msra.mxu0 0.0
    %1472 = vmatprep.subr.mxu0 0.0
    %1473 = vmatpush1.msra.mxu0 0.0
    %1474 = vmatprep.subr.mxu0 0.0
    %1475 = vmatpush1.msra.mxu0 0.0
    %1476 = vmatprep.subr.mxu0 0.0
    %1477 = vmatpush1.msra.mxu0 0.0
    %1478 = vmatprep.subr.mxu0 0.0
    %1479 = vmatpush1.msra.mxu0 0.0
    %1480 = vmatprep.subr.mxu0 0.0
    %1481 = vmatpush1.msra.mxu0 0.0
    %1482 = vmatprep.subr.mxu0 0.0
    %1483 = vmatpush1.msra.mxu0 0.0
    %1484 = vmatprep.subr.mxu0 0.0
    %1485 = vmatpush1.msra.mxu0 0.0
    %1486 = vmatprep.subr.mxu0 0.0
    %1487 = vmatpush1.msra.mxu0 0.0
    %1488 = vmatprep.subr.mxu0 0.0
    %1489 = vmatpush1.msra.mxu0 0.0
    %1490 = vmatprep.subr.mxu0 0.0
    %1491 = vmatpush1.msra.mxu0 0.0
    %1492 = vmatprep.subr.mxu0 0.0
    %1493 = vmatpush1.msra.mxu0 0.0
    %1494 = vmatprep.mubr.f32.mxu0 0.0
    %1495 = vmatmul.mubr.f32.gmra.mrb[0].mxu0 0.0
    %v1496 = vpop.f32.mrb[0].mxu0
    %v1497 = vadd.f32 0.0, %v1496
    %v1498 = vpop.f32.mrb[0].mxu0
    %v1499 = vadd.f32 0.0, %v1498
    %1500 = vdwg.mxu0
    %v1505 = vcombine.low %v1426, %v1428
    %v1506 = vcombine.low %v1497, %v1499
    %v1508 = vunpack.c.l.s4 1966171168
    %v1509 = vunpack.c.0.s8 %v1508
    %v1510 = vlaneseq
    %v1511 = vshrl.u32 %v1510, 7
    %v1512 = vsub.s32 %v1509, %v1511
    %v1513 = vrot.slane %v1505, %v1512
    %v1515 = vunpack.c.l.s4 1966171168
    %v1516 = vunpack.c.0.s8 %v1515
    %v1517 = vlaneseq
    %v1518 = vshrl.u32 %v1517, 7
    %v1519 = vsub.s32 %v1516, %v1518
    %v1520 = vrot.slane %v1506, %v1519
    %v1521 = vcombine.low %v1513, %v1520
    %v1522 = vcombine.high %v1513, %v1520
    %v1524 = vunpack.c.l.s4 1966171168
    %v1525 = vunpack.c.0.s8 %v1524
    %v1526 = vlaneseq
    %v1527 = vshrl.u32 %v1526, 7
    %v1528 = vsub.s32 %v1525, %v1527
    %v1529 = vrot.slane %v1521, %v1528
    %v1531 = vunpack.c.l.s4 1966171168
    %v1532 = vunpack.c.0.s8 %v1531
    %v1533 = vlaneseq
    %v1534 = vshrl.u32 %v1533, 7
    %v1535 = vsub.s32 %v1532, %v1534
    %v1536 = vrot.slane %v1522, %v1535
    %v1539 = vadd.f32 %v1292, %v1529
    %v1540 = vadd.f32 %v1294, %v1536
    %v1541 = vxor.u32 %v1539, 2147483648
    %v1542 = vxor.u32 %v1540, 2147483648
    %v1543 = vmul.f32 %v1541, 1.442695
    %v1544 = vpow.pop %v1543
    %v1545 = vmul.f32 %v1542, 1.442695
    %v1546 = vpow.pop %v1545
    %v1547 = vadd.f32 %v1544, 1.0
    %v1548 = vadd.f32 %v1546, 1.0
    %v1549 = vrcp.pop %v1547
    %v1550 = vmul.f32 1.0, %v1549
    %v1551 = vrcp.pop %v1548
    %v1552 = vmul.f32 1.0, %v1551
    %v1555 = vrot.slane %v1539, 1
    %v1556 = vrot.slane %v1540, 1
    %v1559 = vxor.u32 %v1555, 2147483648
    %v1560 = vxor.u32 %v1556, 2147483648
    %v1561 = vmul.f32 %v1559, 1.442695
    %v1562 = vpow.pop %v1561
    %v1563 = vmul.f32 %v1560, 1.442695
    %v1564 = vpow.pop %v1563
    %v1565 = vadd.f32 %v1562, 1.0
    %v1566 = vadd.f32 %v1564, 1.0
    %v1567 = vrcp.pop %v1565
    %v1568 = vmul.f32 1.0, %v1567
    %v1569 = vrcp.pop %v1566
    %v1570 = vmul.f32 1.0, %v1569
    %v1571 = vrot.slane %v1539, 2
    %v1572 = vrot.slane %v1540, 2
    %v1575 = vtanh.pop %v1571
    %v1576 = vtanh.pop %v1572
    %v1577 = vrot.slane %v1539, 3
    %v1578 = vrot.slane %v1540, 3
    %v1581 = vxor.u32 %v1577, 2147483648
    %v1582 = vxor.u32 %v1578, 2147483648
    %v1583 = vmul.f32 %v1581, 1.442695
    %v1584 = vpow.pop %v1583
    %v1585 = vmul.f32 %v1582, 1.442695
    %v1586 = vpow.pop %v1585
    %v1587 = vadd.f32 %v1584, 1.0
    %v1588 = vadd.f32 %v1586, 1.0
    %v1589 = vrcp.pop %v1587
    %v1590 = vmul.f32 1.0, %v1589
    %v1591 = vrcp.pop %v1588
    %v1592 = vmul.f32 1.0, %v1591
    %v1593 = vmul.f32 %v1568, 0.0
    %v1594 = vmul.f32 %v1570, 0.0
    %v1595 = vmul.f32 %v1550, %v1575
    %v1596 = vmul.f32 %v1552, %v1576
    %v1597 = vadd.f32 %v1593, %v1595
    %v1598 = vadd.f32 %v1594, %v1596
    %v1599 = vtanh.pop %v1597
    %v1600 = vtanh.pop %v1598
    %v1601 = vmul.f32 %v1590, %v1599
    %v1602 = vmul.f32 %v1592, %v1600
    %s1603 = scalar_lea.vmem [#allocation2], 1
    %v1604 = vld [vmem:[%s1603] ss:$8 sm:$0xf]
    %s1605 = scalar_lea.vmem [#allocation2], 33
    %v1606 = vld [vmem:[%s1605] ss:$8 sm:$0xf]
    %v1609 = vcombine.low %v1601, %v1602
    %v1611 = vunpack.c.l.s4 1966171168
    %v1612 = vunpack.c.0.s8 %v1611
    %v1613 = vlaneseq
    %v1614 = vshrl.u32 %v1613, 7
    %v1615 = vsub.s32 %v1612, %v1614
    %v1616 = vrot.slane %v1609, %v1615
    %v1618 = vunpack.c.l.s4 1966171168
    %v1619 = vunpack.c.0.s8 %v1618
    %v1620 = vlaneseq
    %v1621 = vshrl.u32 %v1620, 7
    %v1622 = vsub.s32 %v1619, %v1621
    %v1623 = vrot.slane %v1616, %v1622
    %1625 = vmatprep.subr.mxu0 %v1296
    %1626 = vmatpush1.msra.mxu0 %v1295
    %1627 = vmatprep.subr.mxu0 %v1300
    %1628 = vmatpush1.msra.mxu0 %v1299
    %1629 = vmatprep.subr.mxu0 %v1304
    %1630 = vmatpush1.msra.mxu0 %v1303
    %1631 = vmatprep.subr.mxu0 %v1308
    %1632 = vmatpush1.msra.mxu0 %v1307
    %1633 = vmatprep.subr.mxu0 %v1312
    %1634 = vmatpush1.msra.mxu0 %v1311
    %1635 = vmatprep.subr.mxu0 %v1316
    %1636 = vmatpush1.msra.mxu0 %v1315
    %1637 = vmatprep.subr.mxu0 %v1320
    %1638 = vmatpush1.msra.mxu0 %v1319
    %1639 = vmatprep.subr.mxu0 %v1324
    %1640 = vmatpush1.msra.mxu0 %v1323
    %1641 = vmatprep.subr.mxu0 %v1328
    %1642 = vmatpush1.msra.mxu0 %v1327
    %1643 = vmatprep.subr.mxu0 %v1332
    %1644 = vmatpush1.msra.mxu0 %v1331
    %1645 = vmatprep.subr.mxu0 %v1336
    %1646 = vmatpush1.msra.mxu0 %v1335
    %1647 = vmatprep.subr.mxu0 %v1340
    %1648 = vmatpush1.msra.mxu0 %v1339
    %1649 = vmatprep.subr.mxu0 %v1344
    %1650 = vmatpush1.msra.mxu0 %v1343
    %1651 = vmatprep.subr.mxu0 %v1348
    %1652 = vmatpush1.msra.mxu0 %v1347
    %1653 = vmatprep.subr.mxu0 %v1352
    %1654 = vmatpush1.msra.mxu0 %v1351
    %1655 = vmatprep.subr.mxu0 %v1356
    %1656 = vmatpush1.msra.mxu0 %v1355
    %1657 = vmatprep.subr.mxu0 0.0
    %1658 = vmatpush1.msra.mxu0 0.0
    %1659 = vmatprep.subr.mxu0 0.0
    %1660 = vmatpush1.msra.mxu0 0.0
    %1661 = vmatprep.subr.mxu0 0.0
    %1662 = vmatpush1.msra.mxu0 0.0
    %1663 = vmatprep.subr.mxu0 0.0
    %1664 = vmatpush1.msra.mxu0 0.0
    %1665 = vmatprep.subr.mxu0 0.0
    %1666 = vmatpush1.msra.mxu0 0.0
    %1667 = vmatprep.subr.mxu0 0.0
    %1668 = vmatpush1.msra.mxu0 0.0
    %1669 = vmatprep.subr.mxu0 0.0
    %1670 = vmatpush1.msra.mxu0 0.0
    %1671 = vmatprep.subr.mxu0 0.0
    %1672 = vmatpush1.msra.mxu0 0.0
    %1673 = vmatprep.subr.mxu0 0.0
    %1674 = vmatpush1.msra.mxu0 0.0
    %1675 = vmatprep.subr.mxu0 0.0
    %1676 = vmatpush1.msra.mxu0 0.0
    %1677 = vmatprep.subr.mxu0 0.0
    %1678 = vmatpush1.msra.mxu0 0.0
    %1679 = vmatprep.subr.mxu0 0.0
    %1680 = vmatpush1.msra.mxu0 0.0
    %1681 = vmatprep.subr.mxu0 0.0
    %1682 = vmatpush1.msra.mxu0 0.0
    %1683 = vmatprep.subr.mxu0 0.0
    %1684 = vmatpush1.msra.mxu0 0.0
    %1685 = vmatprep.subr.mxu0 0.0
    %1686 = vmatpush1.msra.mxu0 0.0
    %1687 = vmatprep.subr.mxu0 0.0
    %1688 = vmatpush1.msra.mxu0 0.0
    %1689 = vmatprep.mubr.f32.mxu0 0.0
    %1690 = vmatmul.mubr.f32.gmra.mrb[0].mxu0 %v1623
    %v1691 = vpop.f32.mrb[0].mxu0
    %v1692 = vadd.f32 0.0, %v1691
    %v1693 = vpop.f32.mrb[0].mxu0
    %v1694 = vadd.f32 0.0, %v1693
    %1695 = vdwg.mxu0
    %1696 = vmatprep.subr.mxu0 %v1298
    %1697 = vmatpush1.msra.mxu0 %v1297
    %1698 = vmatprep.subr.mxu0 %v1302
    %1699 = vmatpush1.msra.mxu0 %v1301
    %1700 = vmatprep.subr.mxu0 %v1306
    %1701 = vmatpush1.msra.mxu0 %v1305
    %1702 = vmatprep.subr.mxu0 %v1310
    %1703 = vmatpush1.msra.mxu0 %v1309
    %1704 = vmatprep.subr.mxu0 %v1314
    %1705 = vmatpush1.msra.mxu0 %v1313
    %1706 = vmatprep.subr.mxu0 %v1318
    %1707 = vmatpush1.msra.mxu0 %v1317
    %1708 = vmatprep.subr.mxu0 %v1322
    %1709 = vmatpush1.msra.mxu0 %v1321
    %1710 = vmatprep.subr.mxu0 %v1326
    %1711 = vmatpush1.msra.mxu0 %v1325
    %1712 = vmatprep.subr.mxu0 %v1330
    %1713 = vmatpush1.msra.mxu0 %v1329
    %1714 = vmatprep.subr.mxu0 %v1334
    %1715 = vmatpush1.msra.mxu0 %v1333
    %1716 = vmatprep.subr.mxu0 %v1338
    %1717 = vmatpush1.msra.mxu0 %v1337
    %1718 = vmatprep.subr.mxu0 %v1342
    %1719 = vmatpush1.msra.mxu0 %v1341
    %1720 = vmatprep.subr.mxu0 %v1346
    %1721 = vmatpush1.msra.mxu0 %v1345
    %1722 = vmatprep.subr.mxu0 %v1350
    %1723 = vmatpush1.msra.mxu0 %v1349
    %1724 = vmatprep.subr.mxu0 %v1354
    %1725 = vmatpush1.msra.mxu0 %v1353
    %1726 = vmatprep.subr.mxu0 %v1358
    %1727 = vmatpush1.msra.mxu0 %v1357
    %1728 = vmatprep.subr.mxu0 0.0
    %1729 = vmatpush1.msra.mxu0 0.0
    %1730 = vmatprep.subr.mxu0 0.0
    %1731 = vmatpush1.msra.mxu0 0.0
    %1732 = vmatprep.subr.mxu0 0.0
    %1733 = vmatpush1.msra.mxu0 0.0
    %1734 = vmatprep.subr.mxu0 0.0
    %1735 = vmatpush1.msra.mxu0 0.0
    %1736 = vmatprep.subr.mxu0 0.0
    %1737 = vmatpush1.msra.mxu0 0.0
    %1738 = vmatprep.subr.mxu0 0.0
    %1739 = vmatpush1.msra.mxu0 0.0
    %1740 = vmatprep.subr.mxu0 0.0
    %1741 = vmatpush1.msra.mxu0 0.0
    %1742 = vmatprep.subr.mxu0 0.0
    %1743 = vmatpush1.msra.mxu0 0.0
    %1744 = vmatprep.subr.mxu0 0.0
    %1745 = vmatpush1.msra.mxu0 0.0
    %1746 = vmatprep.subr.mxu0 0.0
    %1747 = vmatpush1.msra.mxu0 0.0
    %1748 = vmatprep.subr.mxu0 0.0
    %1749 = vmatpush1.msra.mxu0 0.0
    %1750 = vmatprep.subr.mxu0 0.0
    %1751 = vmatpush1.msra.mxu0 0.0
    %1752 = vmatprep.subr.mxu0 0.0
    %1753 = vmatpush1.msra.mxu0 0.0
    %1754 = vmatprep.subr.mxu0 0.0
    %1755 = vmatpush1.msra.mxu0 0.0
    %1756 = vmatprep.subr.mxu0 0.0
    %1757 = vmatpush1.msra.mxu0 0.0
    %1758 = vmatprep.subr.mxu0 0.0
    %1759 = vmatpush1.msra.mxu0 0.0
    %1760 = vmatprep.mubr.f32.mxu0 0.0
    %1761 = vmatmul.mubr.f32.gmra.mrb[0].mxu0 %v1623
    %v1762 = vpop.f32.mrb[0].mxu0
    %v1763 = vadd.f32 0.0, %v1762
    %v1764 = vpop.f32.mrb[0].mxu0
    %v1765 = vadd.f32 0.0, %v1764
    %1766 = vdwg.mxu0
    %v1771 = vcombine.low %v1692, %v1694
    %v1772 = vcombine.low %v1763, %v1765
    %v1774 = vunpack.c.l.s4 1966171168
    %v1775 = vunpack.c.0.s8 %v1774
    %v1776 = vlaneseq
    %v1777 = vshrl.u32 %v1776, 7
    %v1778 = vsub.s32 %v1775, %v1777
    %v1779 = vrot.slane %v1771, %v1778
    %v1781 = vunpack.c.l.s4 1966171168
    %v1782 = vunpack.c.0.s8 %v1781
    %v1783 = vlaneseq
    %v1784 = vshrl.u32 %v1783, 7
    %v1785 = vsub.s32 %v1782, %v1784
    %v1786 = vrot.slane %v1772, %v1785
    %v1787 = vcombine.low %v1779, %v1786
    %v1788 = vcombine.high %v1779, %v1786
    %v1790 = vunpack.c.l.s4 1966171168
    %v1791 = vunpack.c.0.s8 %v1790
    %v1792 = vlaneseq
    %v1793 = vshrl.u32 %v1792, 7
    %v1794 = vsub.s32 %v1791, %v1793
    %v1795 = vrot.slane %v1787, %v1794
    %v1797 = vunpack.c.l.s4 1966171168
    %v1798 = vunpack.c.0.s8 %v1797
    %v1799 = vlaneseq
    %v1800 = vshrl.u32 %v1799, 7
    %v1801 = vsub.s32 %v1798, %v1800
    %v1802 = vrot.slane %v1788, %v1801
    %v1805 = vadd.f32 %v1604, %v1795
    %v1806 = vadd.f32 %v1606, %v1802
    %v1807 = vxor.u32 %v1805, 2147483648
    %v1808 = vxor.u32 %v1806, 2147483648
    %v1809 = vmul.f32 %v1807, 1.442695
    %v1810 = vpow.pop %v1809
    %v1811 = vmul.f32 %v1808, 1.442695
    %v1812 = vpow.pop %v1811
    %v1813 = vadd.f32 %v1810, 1.0
    %v1814 = vadd.f32 %v1812, 1.0
    %v1815 = vrcp.pop %v1813
    %v1816 = vmul.f32 1.0, %v1815
    %v1817 = vrcp.pop %v1814
    %v1818 = vmul.f32 1.0, %v1817
    %v1821 = vrot.slane %v1805, 1
    %v1822 = vrot.slane %v1806, 1
    %v1825 = vxor.u32 %v1821, 2147483648
    %v1826 = vxor.u32 %v1822, 2147483648
    %v1827 = vmul.f32 %v1825, 1.442695
    %v1828 = vpow.pop %v1827
    %v1829 = vmul.f32 %v1826, 1.442695
    %v1830 = vpow.pop %v1829
    %v1831 = vadd.f32 %v1828, 1.0
    %v1832 = vadd.f32 %v1830, 1.0
    %v1833 = vrcp.pop %v1831
    %v1834 = vmul.f32 1.0, %v1833
    %v1835 = vrcp.pop %v1832
    %v1836 = vmul.f32 1.0, %v1835
    %v1837 = vrot.slane %v1805, 2
    %v1838 = vrot.slane %v1806, 2
    %v1841 = vtanh.pop %v1837
    %v1842 = vtanh.pop %v1838
    %v1843 = vrot.slane %v1805, 3
    %v1844 = vrot.slane %v1806, 3
    %v1847 = vxor.u32 %v1843, 2147483648
    %v1848 = vxor.u32 %v1844, 2147483648
    %v1849 = vmul.f32 %v1847, 1.442695
    %v1850 = vpow.pop %v1849
    %v1851 = vmul.f32 %v1848, 1.442695
    %v1852 = vpow.pop %v1851
    %v1853 = vadd.f32 %v1850, 1.0
    %v1854 = vadd.f32 %v1852, 1.0
    %v1855 = vrcp.pop %v1853
    %v1856 = vmul.f32 1.0, %v1855
    %v1857 = vrcp.pop %v1854
    %v1858 = vmul.f32 1.0, %v1857
    %v1859 = vmul.f32 %v1834, %v1597
    %v1860 = vmul.f32 %v1836, %v1598
    %v1861 = vmul.f32 %v1816, %v1841
    %v1862 = vmul.f32 %v1818, %v1842
    %v1863 = vadd.f32 %v1859, %v1861
    %v1864 = vadd.f32 %v1860, %v1862
    %v1865 = vtanh.pop %v1863
    %v1866 = vtanh.pop %v1864
    %v1867 = vmul.f32 %v1856, %v1865
    %v1868 = vmul.f32 %v1858, %v1866
    %s1869 = scalar_lea.vmem [#allocation2], 2
    %v1870 = vld [vmem:[%s1869] ss:$8 sm:$0xf]
    %s1871 = scalar_lea.vmem [#allocation2], 34
    %v1872 = vld [vmem:[%s1871] ss:$8 sm:$0xf]
    %v1875 = vcombine.low %v1867, %v1868
    %v1877 = vunpack.c.l.s4 1966171168
    %v1878 = vunpack.c.0.s8 %v1877
    %v1879 = vlaneseq
    %v1880 = vshrl.u32 %v1879, 7
    %v1881 = vsub.s32 %v1878, %v1880
    %v1882 = vrot.slane %v1875, %v1881
    %v1884 = vunpack.c.l.s4 1966171168
    %v1885 = vunpack.c.0.s8 %v1884
    %v1886 = vlaneseq
    %v1887 = vshrl.u32 %v1886, 7
    %v1888 = vsub.s32 %v1885, %v1887
    %v1889 = vrot.slane %v1882, %v1888
    %1891 = vmatprep.subr.mxu0 %v1296
    %1892 = vmatpush1.msra.mxu0 %v1295
    %1893 = vmatprep.subr.mxu0 %v1300
    %1894 = vmatpush1.msra.mxu0 %v1299
    %1895 = vmatprep.subr.mxu0 %v1304
    %1896 = vmatpush1.msra.mxu0 %v1303
    %1897 = vmatprep.subr.mxu0 %v1308
    %1898 = vmatpush1.msra.mxu0 %v1307
    %1899 = vmatprep.subr.mxu0 %v1312
    %1900 = vmatpush1.msra.mxu0 %v1311
    %1901 = vmatprep.subr.mxu0 %v1316
    %1902 = vmatpush1.msra.mxu0 %v1315
    %1903 = vmatprep.subr.mxu0 %v1320
    %1904 = vmatpush1.msra.mxu0 %v1319
    %1905 = vmatprep.subr.mxu0 %v1324
    %1906 = vmatpush1.msra.mxu0 %v1323
    %1907 = vmatprep.subr.mxu0 %v1328
    %1908 = vmatpush1.msra.mxu0 %v1327
    %1909 = vmatprep.subr.mxu0 %v1332
    %1910 = vmatpush1.msra.mxu0 %v1331
    %1911 = vmatprep.subr.mxu0 %v1336
    %1912 = vmatpush1.msra.mxu0 %v1335
    %1913 = vmatprep.subr.mxu0 %v1340
    %1914 = vmatpush1.msra.mxu0 %v1339
    %1915 = vmatprep.subr.mxu0 %v1344
    %1916 = vmatpush1.msra.mxu0 %v1343
    %1917 = vmatprep.subr.mxu0 %v1348
    %1918 = vmatpush1.msra.mxu0 %v1347
    %1919 = vmatprep.subr.mxu0 %v1352
    %1920 = vmatpush1.msra.mxu0 %v1351
    %1921 = vmatprep.subr.mxu0 %v1356
    %1922 = vmatpush1.msra.mxu0 %v1355
    %1923 = vmatprep.subr.mxu0 0.0
    %1924 = vmatpush1.msra.mxu0 0.0
    %1925 = vmatprep.subr.mxu0 0.0
    %1926 = vmatpush1.msra.mxu0 0.0
    %1927 = vmatprep.subr.mxu0 0.0
    %1928 = vmatpush1.msra.mxu0 0.0
    %1929 = vmatprep.subr.mxu0 0.0
    %1930 = vmatpush1.msra.mxu0 0.0
    %1931 = vmatprep.subr.mxu0 0.0
    %1932 = vmatpush1.msra.mxu0 0.0
    %1933 = vmatprep.subr.mxu0 0.0
    %1934 = vmatpush1.msra.mxu0 0.0
    %1935 = vmatprep.subr.mxu0 0.0
    %1936 = vmatpush1.msra.mxu0 0.0
    %1937 = vmatprep.subr.mxu0 0.0
    %1938 = vmatpush1.msra.mxu0 0.0
    %1939 = vmatprep.subr.mxu0 0.0
    %1940 = vmatpush1.msra.mxu0 0.0
    %1941 = vmatprep.subr.mxu0 0.0
    %1942 = vmatpush1.msra.mxu0 0.0
    %1943 = vmatprep.subr.mxu0 0.0
    %1944 = vmatpush1.msra.mxu0 0.0
    %1945 = vmatprep.subr.mxu0 0.0
    %1946 = vmatpush1.msra.mxu0 0.0
    %1947 = vmatprep.subr.mxu0 0.0
    %1948 = vmatpush1.msra.mxu0 0.0
    %1949 = vmatprep.subr.mxu0 0.0
    %1950 = vmatpush1.msra.mxu0 0.0
    %1951 = vmatprep.subr.mxu0 0.0
    %1952 = vmatpush1.msra.mxu0 0.0
    %1953 = vmatprep.subr.mxu0 0.0
    %1954 = vmatpush1.msra.mxu0 0.0
    %1955 = vmatprep.mubr.f32.mxu0 0.0
    %1956 = vmatmul.mubr.f32.gmra.mrb[0].mxu0 %v1889
    %v1957 = vpop.f32.mrb[0].mxu0
    %v1958 = vadd.f32 0.0, %v1957
    %v1959 = vpop.f32.mrb[0].mxu0
    %v1960 = vadd.f32 0.0, %v1959
    %1961 = vdwg.mxu0
    %1962 = vmatprep.subr.mxu0 %v1298
    %1963 = vmatpush1.msra.mxu0 %v1297
    %1964 = vmatprep.subr.mxu0 %v1302
    %1965 = vmatpush1.msra.mxu0 %v1301
    %1966 = vmatprep.subr.mxu0 %v1306
    %1967 = vmatpush1.msra.mxu0 %v1305
    %1968 = vmatprep.subr.mxu0 %v1310
    %1969 = vmatpush1.msra.mxu0 %v1309
    %1970 = vmatprep.subr.mxu0 %v1314
    %1971 = vmatpush1.msra.mxu0 %v1313
    %1972 = vmatprep.subr.mxu0 %v1318
    %1973 = vmatpush1.msra.mxu0 %v1317
    %1974 = vmatprep.subr.mxu0 %v1322
    %1975 = vmatpush1.msra.mxu0 %v1321
    %1976 = vmatprep.subr.mxu0 %v1326
    %1977 = vmatpush1.msra.mxu0 %v1325
    %1978 = vmatprep.subr.mxu0 %v1330
    %1979 = vmatpush1.msra.mxu0 %v1329
    %1980 = vmatprep.subr.mxu0 %v1334
    %1981 = vmatpush1.msra.mxu0 %v1333
    %1982 = vmatprep.subr.mxu0 %v1338
    %1983 = vmatpush1.msra.mxu0 %v1337
    %1984 = vmatprep.subr.mxu0 %v1342
    %1985 = vmatpush1.msra.mxu0 %v1341
    %1986 = vmatprep.subr.mxu0 %v1346
    %1987 = vmatpush1.msra.mxu0 %v1345
    %1988 = vmatprep.subr.mxu0 %v1350
    %1989 = vmatpush1.msra.mxu0 %v1349
    %1990 = vmatprep.subr.mxu0 %v1354
    %1991 = vmatpush1.msra.mxu0 %v1353
    %1992 = vmatprep.subr.mxu0 %v1358
    %1993 = vmatpush1.msra.mxu0 %v1357
    %1994 = vmatprep.subr.mxu0 0.0
    %1995 = vmatpush1.msra.mxu0 0.0
    %1996 = vmatprep.subr.mxu0 0.0
    %1997 = vmatpush1.msra.mxu0 0.0
    %1998 = vmatprep.subr.mxu0 0.0
    %1999 = vmatpush1.msra.mxu0 0.0
    %2000 = vmatprep.subr.mxu0 0.0
    %2001 = vmatpush1.msra.mxu0 0.0
    %2002 = vmatprep.subr.mxu0 0.0
    %2003 = vmatpush1.msra.mxu0 0.0
    %2004 = vmatprep.subr.mxu0 0.0
    %2005 = vmatpush1.msra.mxu0 0.0
    %2006 = vmatprep.subr.mxu0 0.0
    %2007 = vmatpush1.msra.mxu0 0.0
    %2008 = vmatprep.subr.mxu0 0.0
    %2009 = vmatpush1.msra.mxu0 0.0
    %2010 = vmatprep.subr.mxu0 0.0
    %2011 = vmatpush1.msra.mxu0 0.0
    %2012 = vmatprep.subr.mxu0 0.0
    %2013 = vmatpush1.msra.mxu0 0.0
    %2014 = vmatprep.subr.mxu0 0.0
    %2015 = vmatpush1.msra.mxu0 0.0
    %2016 = vmatprep.subr.mxu0 0.0
    %2017 = vmatpush1.msra.mxu0 0.0
    %2018 = vmatprep.subr.mxu0 0.0
    %2019 = vmatpush1.msra.mxu0 0.0
    %2020 = vmatprep.subr.mxu0 0.0
    %2021 = vmatpush1.msra.mxu0 0.0
    %2022 = vmatprep.subr.mxu0 0.0
    %2023 = vmatpush1.msra.mxu0 0.0
    %2024 = vmatprep.subr.mxu0 0.0
    %2025 = vmatpush1.msra.mxu0 0.0
    %2026 = vmatprep.mubr.f32.mxu0 0.0
    %2027 = vmatmul.mubr.f32.gmra.mrb[0].mxu0 %v1889
    %v2028 = vpop.f32.mrb[0].mxu0
    %v2029 = vadd.f32 0.0, %v2028
    %v2030 = vpop.f32.mrb[0].mxu0
    %v2031 = vadd.f32 0.0, %v2030
    %2032 = vdwg.mxu0
    %v2037 = vcombine.low %v1958, %v1960
    %v2038 = vcombine.low %v2029, %v2031
    %v2040 = vunpack.c.l.s4 1966171168
    %v2041 = vunpack.c.0.s8 %v2040
    %v2042 = vlaneseq
    %v2043 = vshrl.u32 %v2042, 7
    %v2044 = vsub.s32 %v2041, %v2043
    %v2045 = vrot.slane %v2037, %v2044
    %v2047 = vunpack.c.l.s4 1966171168
    %v2048 = vunpack.c.0.s8 %v2047
    %v2049 = vlaneseq
    %v2050 = vshrl.u32 %v2049, 7
    %v2051 = vsub.s32 %v2048, %v2050
    %v2052 = vrot.slane %v2038, %v2051
    %v2053 = vcombine.low %v2045, %v2052
    %v2054 = vcombine.high %v2045, %v2052
    %v2056 = vunpack.c.l.s4 1966171168
    %v2057 = vunpack.c.0.s8 %v2056
    %v2058 = vlaneseq
    %v2059 = vshrl.u32 %v2058, 7
    %v2060 = vsub.s32 %v2057, %v2059
    %v2061 = vrot.slane %v2053, %v2060
    %v2063 = vunpack.c.l.s4 1966171168
    %v2064 = vunpack.c.0.s8 %v2063
    %v2065 = vlaneseq
    %v2066 = vshrl.u32 %v2065, 7
    %v2067 = vsub.s32 %v2064, %v2066
    %v2068 = vrot.slane %v2054, %v2067
    %v2071 = vadd.f32 %v1870, %v2061
    %v2072 = vadd.f32 %v1872, %v2068
    %v2073 = vxor.u32 %v2071, 2147483648
    %v2074 = vxor.u32 %v2072, 2147483648
    %v2075 = vmul.f32 %v2073, 1.442695
    %v2076 = vpow.pop %v2075
    %v2077 = vmul.f32 %v2074, 1.442695
    %v2078 = vpow.pop %v2077
    %v2079 = vadd.f32 %v2076, 1.0
    %v2080 = vadd.f32 %v2078, 1.0
    %v2081 = vrcp.pop %v2079
    %v2082 = vmul.f32 1.0, %v2081
    %v2083 = vrcp.pop %v2080
    %v2084 = vmul.f32 1.0, %v2083
    %v2087 = vrot.slane %v2071, 1
    %v2088 = vrot.slane %v2072, 1
    %v2091 = vxor.u32 %v2087, 2147483648
    %v2092 = vxor.u32 %v2088, 2147483648
    %v2093 = vmul.f32 %v2091, 1.442695
    %v2094 = vpow.pop %v2093
    %v2095 = vmul.f32 %v2092, 1.442695
    %v2096 = vpow.pop %v2095
    %v2097 = vadd.f32 %v2094, 1.0
    %v2098 = vadd.f32 %v2096, 1.0
    %v2099 = vrcp.pop %v2097
    %v2100 = vmul.f32 1.0, %v2099
    %v2101 = vrcp.pop %v2098
    %v2102 = vmul.f32 1.0, %v2101
    %v2103 = vrot.slane %v2071, 2
    %v2104 = vrot.slane %v2072, 2
    %v2107 = vtanh.pop %v2103
    %v2108 = vtanh.pop %v2104
    %v2109 = vrot.slane %v2071, 3
    %v2110 = vrot.slane %v2072, 3
    %v2113 = vxor.u32 %v2109, 2147483648
    %v2114 = vxor.u32 %v2110, 2147483648
    %v2115 = vmul.f32 %v2113, 1.442695
    %v2116 = vpow.pop %v2115
    %v2117 = vmul.f32 %v2114, 1.442695
    %v2118 = vpow.pop %v2117
    %v2119 = vadd.f32 %v2116, 1.0
    %v2120 = vadd.f32 %v2118, 1.0
    %v2121 = vrcp.pop %v2119
    %v2122 = vmul.f32 1.0, %v2121
    %v2123 = vrcp.pop %v2120
    %v2124 = vmul.f32 1.0, %v2123
    %v2125 = vmul.f32 %v2100, %v1863
    %v2126 = vmul.f32 %v2102, %v1864
    %v2127 = vmul.f32 %v2082, %v2107
    %v2128 = vmul.f32 %v2084, %v2108
    %v2129 = vadd.f32 %v2125, %v2127
    %v2130 = vadd.f32 %v2126, %v2128
    %v2131 = vtanh.pop %v2129
    %v2132 = vtanh.pop %v2130
    %v2133 = vmul.f32 %v2122, %v2131
    %v2134 = vmul.f32 %v2124, %v2132
    %s2135 = scalar_lea.vmem [#allocation2], 3
    %v2136 = vld [vmem:[%s2135] ss:$8 sm:$0xf]
    %s2137 = scalar_lea.vmem [#allocation2], 35
    %v2138 = vld [vmem:[%s2137] ss:$8 sm:$0xf]
    %v2141 = vcombine.low %v2133, %v2134
    %v2143 = vunpack.c.l.s4 1966171168
    %v2144 = vunpack.c.0.s8 %v2143
    %v2145 = vlaneseq
    %v2146 = vshrl.u32 %v2145, 7
    %v2147 = vsub.s32 %v2144, %v2146
    %v2148 = vrot.slane %v2141, %v2147
    %v2150 = vunpack.c.l.s4 1966171168
    %v2151 = vunpack.c.0.s8 %v2150
    %v2152 = vlaneseq
    %v2153 = vshrl.u32 %v2152, 7
    %v2154 = vsub.s32 %v2151, %v2153
    %v2155 = vrot.slane %v2148, %v2154
    %2157 = vmatprep.subr.mxu0 %v1296
    %2158 = vmatpush1.msra.mxu0 %v1295
    %2159 = vmatprep.subr.mxu0 %v1300
    %2160 = vmatpush1.msra.mxu0 %v1299
    %2161 = vmatprep.subr.mxu0 %v1304
    %2162 = vmatpush1.msra.mxu0 %v1303
    %2163 = vmatprep.subr.mxu0 %v1308
    %2164 = vmatpush1.msra.mxu0 %v1307
    %2165 = vmatprep.subr.mxu0 %v1312
    %2166 = vmatpush1.msra.mxu0 %v1311
    %2167 = vmatprep.subr.mxu0 %v1316
    %2168 = vmatpush1.msra.mxu0 %v1315
    %2169 = vmatprep.subr.mxu0 %v1320
    %2170 = vmatpush1.msra.mxu0 %v1319
    %2171 = vmatprep.subr.mxu0 %v1324
    %2172 = vmatpush1.msra.mxu0 %v1323
    %2173 = vmatprep.subr.mxu0 %v1328
    %2174 = vmatpush1.msra.mxu0 %v1327
    %2175 = vmatprep.subr.mxu0 %v1332
    %2176 = vmatpush1.msra.mxu0 %v1331
    %2177 = vmatprep.subr.mxu0 %v1336
    %2178 = vmatpush1.msra.mxu0 %v1335
    %2179 = vmatprep.subr.mxu0 %v1340
    %2180 = vmatpush1.msra.mxu0 %v1339
    %2181 = vmatprep.subr.mxu0 %v1344
    %2182 = vmatpush1.msra.mxu0 %v1343
    %2183 = vmatprep.subr.mxu0 %v1348
    %2184 = vmatpush1.msra.mxu0 %v1347
    %2185 = vmatprep.subr.mxu0 %v1352
    %2186 = vmatpush1.msra.mxu0 %v1351
    %2187 = vmatprep.subr.mxu0 %v1356
    %2188 = vmatpush1.msra.mxu0 %v1355
    %2189 = vmatprep.subr.mxu0 0.0
    %2190 = vmatpush1.msra.mxu0 0.0
    %2191 = vmatprep.subr.mxu0 0.0
    %2192 = vmatpush1.msra.mxu0 0.0
    %2193 = vmatprep.subr.mxu0 0.0
    %2194 = vmatpush1.msra.mxu0 0.0
    %2195 = vmatprep.subr.mxu0 0.0
    %2196 = vmatpush1.msra.mxu0 0.0
    %2197 = vmatprep.subr.mxu0 0.0
    %2198 = vmatpush1.msra.mxu0 0.0
    %2199 = vmatprep.subr.mxu0 0.0
    %2200 = vmatpush1.msra.mxu0 0.0
    %2201 = vmatprep.subr.mxu0 0.0
    %2202 = vmatpush1.msra.mxu0 0.0
    %2203 = vmatprep.subr.mxu0 0.0
    %2204 = vmatpush1.msra.mxu0 0.0
    %2205 = vmatprep.subr.mxu0 0.0
    %2206 = vmatpush1.msra.mxu0 0.0
    %2207 = vmatprep.subr.mxu0 0.0
    %2208 = vmatpush1.msra.mxu0 0.0
    %2209 = vmatprep.subr.mxu0 0.0
    %2210 = vmatpush1.msra.mxu0 0.0
    %2211 = vmatprep.subr.mxu0 0.0
    %2212 = vmatpush1.msra.mxu0 0.0
    %2213 = vmatprep.subr.mxu0 0.0
    %2214 = vmatpush1.msra.mxu0 0.0
    %2215 = vmatprep.subr.mxu0 0.0
    %2216 = vmatpush1.msra.mxu0 0.0
    %2217 = vmatprep.subr.mxu0 0.0
    %2218 = vmatpush1.msra.mxu0 0.0
    %2219 = vmatprep.subr.mxu0 0.0
    %2220 = vmatpush1.msra.mxu0 0.0
    %2221 = vmatprep.mubr.f32.mxu0 0.0
    %2222 = vmatmul.mubr.f32.gmra.mrb[0].mxu0 %v2155
    %v2223 = vpop.f32.mrb[0].mxu0
    %v2224 = vadd.f32 0.0, %v2223
    %v2225 = vpop.f32.mrb[0].mxu0
    %v2226 = vadd.f32 0.0, %v2225
    %2227 = vdwg.mxu0
    %2228 = vmatprep.subr.mxu0 %v1298
    %2229 = vmatpush1.msra.mxu0 %v1297
    %2230 = vmatprep.subr.mxu0 %v1302
    %2231 = vmatpush1.msra.mxu0 %v1301
    %2232 = vmatprep.subr.mxu0 %v1306
    %2233 = vmatpush1.msra.mxu0 %v1305
    %2234 = vmatprep.subr.mxu0 %v1310
    %2235 = vmatpush1.msra.mxu0 %v1309
    %2236 = vmatprep.subr.mxu0 %v1314
    %2237 = vmatpush1.msra.mxu0 %v1313
    %2238 = vmatprep.subr.mxu0 %v1318
    %2239 = vmatpush1.msra.mxu0 %v1317
    %2240 = vmatprep.subr.mxu0 %v1322
    %2241 = vmatpush1.msra.mxu0 %v1321
    %2242 = vmatprep.subr.mxu0 %v1326
    %2243 = vmatpush1.msra.mxu0 %v1325
    %2244 = vmatprep.subr.mxu0 %v1330
    %2245 = vmatpush1.msra.mxu0 %v1329
    %2246 = vmatprep.subr.mxu0 %v1334
    %2247 = vmatpush1.msra.mxu0 %v1333
    %2248 = vmatprep.subr.mxu0 %v1338
    %2249 = vmatpush1.msra.mxu0 %v1337
    %2250 = vmatprep.subr.mxu0 %v1342
    %2251 = vmatpush1.msra.mxu0 %v1341
    %2252 = vmatprep.subr.mxu0 %v1346
    %2253 = vmatpush1.msra.mxu0 %v1345
    %2254 = vmatprep.subr.mxu0 %v1350
    %2255 = vmatpush1.msra.mxu0 %v1349
    %2256 = vmatprep.subr.mxu0 %v1354
    %2257 = vmatpush1.msra.mxu0 %v1353
    %2258 = vmatprep.subr.mxu0 %v1358
    %2259 = vmatpush1.msra.mxu0 %v1357
    %2260 = vmatprep.subr.mxu0 0.0
    %2261 = vmatpush1.msra.mxu0 0.0
    %2262 = vmatprep.subr.mxu0 0.0
    %2263 = vmatpush1.msra.mxu0 0.0
    %2264 = vmatprep.subr.mxu0 0.0
    %2265 = vmatpush1.msra.mxu0 0.0
    %2266 = vmatprep.subr.mxu0 0.0
    %2267 = vmatpush1.msra.mxu0 0.0
    %2268 = vmatprep.subr.mxu0 0.0
    %2269 = vmatpush1.msra.mxu0 0.0
    %2270 = vmatprep.subr.mxu0 0.0
    %2271 = vmatpush1.msra.mxu0 0.0
    %2272 = vmatprep.subr.mxu0 0.0
    %2273 = vmatpush1.msra.mxu0 0.0
    %2274 = vmatprep.subr.mxu0 0.0
    %2275 = vmatpush1.msra.mxu0 0.0
    %2276 = vmatprep.subr.mxu0 0.0
    %2277 = vmatpush1.msra.mxu0 0.0
    %2278 = vmatprep.subr.mxu0 0.0
    %2279 = vmatpush1.msra.mxu0 0.0
    %2280 = vmatprep.subr.mxu0 0.0
    %2281 = vmatpush1.msra.mxu0 0.0
    %2282 = vmatprep.subr.mxu0 0.0
    %2283 = vmatpush1.msra.mxu0 0.0
    %2284 = vmatprep.subr.mxu0 0.0
    %2285 = vmatpush1.msra.mxu0 0.0
    %2286 = vmatprep.subr.mxu0 0.0
    %2287 = vmatpush1.msra.mxu0 0.0
    %2288 = vmatprep.subr.mxu0 0.0
    %2289 = vmatpush1.msra.mxu0 0.0
    %2290 = vmatprep.subr.mxu0 0.0
    %2291 = vmatpush1.msra.mxu0 0.0
    %2292 = vmatprep.mubr.f32.mxu0 0.0
    %2293 = vmatmul.mubr.f32.gmra.mrb[0].mxu0 %v2155
    %v2294 = vpop.f32.mrb[0].mxu0
    %v2295 = vadd.f32 0.0, %v2294
    %v2296 = vpop.f32.mrb[0].mxu0
    %v2297 = vadd.f32 0.0, %v2296
    %2298 = vdwg.mxu0
    %v2303 = vcombine.low %v2224, %v2226
    %v2304 = vcombine.low %v2295, %v2297
    %v2306 = vunpack.c.l.s4 1966171168
    %v2307 = vunpack.c.0.s8 %v2306
    %v2308 = vlaneseq
    %v2309 = vshrl.u32 %v2308, 7
    %v2310 = vsub.s32 %v2307, %v2309
    %v2311 = vrot.slane %v2303, %v2310
    %v2313 = vunpack.c.l.s4 1966171168
    %v2314 = vunpack.c.0.s8 %v2313
    %v2315 = vlaneseq
    %v2316 = vshrl.u32 %v2315, 7
    %v2317 = vsub.s32 %v2314, %v2316
    %v2318 = vrot.slane %v2304, %v2317
    %v2319 = vcombine.low %v2311, %v2318
    %v2320 = vcombine.high %v2311, %v2318
    %v2322 = vunpack.c.l.s4 1966171168
    %v2323 = vunpack.c.0.s8 %v2322
    %v2324 = vlaneseq
    %v2325 = vshrl.u32 %v2324, 7
    %v2326 = vsub.s32 %v2323, %v2325
    %v2327 = vrot.slane %v2319, %v2326
    %v2329 = vunpack.c.l.s4 1966171168
    %v2330 = vunpack.c.0.s8 %v2329
    %v2331 = vlaneseq
    %v2332 = vshrl.u32 %v2331, 7
    %v2333 = vsub.s32 %v2330, %v2332
    %v2334 = vrot.slane %v2320, %v2333
    %v2337 = vadd.f32 %v2136, %v2327
    %v2338 = vadd.f32 %v2138, %v2334
    %v2339 = vxor.u32 %v2337, 2147483648
    %v2340 = vxor.u32 %v2338, 2147483648
    %v2341 = vmul.f32 %v2339, 1.442695
    %v2342 = vpow.pop %v2341
    %v2343 = vmul.f32 %v2340, 1.442695
    %v2344 = vpow.pop %v2343
    %v2345 = vadd.f32 %v2342, 1.0
    %v2346 = vadd.f32 %v2344, 1.0
    %v2347 = vrcp.pop %v2345
    %v2348 = vmul.f32 1.0, %v2347
    %v2349 = vrcp.pop %v2346
    %v2350 = vmul.f32 1.0, %v2349
    %v2353 = vrot.slane %v2337, 1
    %v2354 = vrot.slane %v2338, 1
    %v2357 = vxor.u32 %v2353, 2147483648
    %v2358 = vxor.u32 %v2354, 2147483648
    %v2359 = vmul.f32 %v2357, 1.442695
    %v2360 = vpow.pop %v2359
    %v2361 = vmul.f32 %v2358, 1.442695
    %v2362 = vpow.pop %v2361
    %v2363 = vadd.f32 %v2360, 1.0
    %v2364 = vadd.f32 %v2362, 1.0
    %v2365 = vrcp.pop %v2363
    %v2366 = vmul.f32 1.0, %v2365
    %v2367 = vrcp.pop %v2364
    %v2368 = vmul.f32 1.0, %v2367
    %v2369 = vrot.slane %v2337, 2
    %v2370 = vrot.slane %v2338, 2
    %v2373 = vtanh.pop %v2369
    %v2374 = vtanh.pop %v2370
    %v2375 = vrot.slane %v2337, 3
    %v2376 = vrot.slane %v2338, 3
    %v2379 = vxor.u32 %v2375, 2147483648
    %v2380 = vxor.u32 %v2376, 2147483648
    %v2381 = vmul.f32 %v2379, 1.442695
    %v2382 = vpow.pop %v2381
    %v2383 = vmul.f32 %v2380, 1.442695
    %v2384 = vpow.pop %v2383
    %v2385 = vadd.f32 %v2382, 1.0
    %v2386 = vadd.f32 %v2384, 1.0
    %v2387 = vrcp.pop %v2385
    %v2388 = vmul.f32 1.0, %v2387
    %v2389 = vrcp.pop %v2386
    %v2390 = vmul.f32 1.0, %v2389
    %v2391 = vmul.f32 %v2366, %v2129
    %v2392 = vmul.f32 %v2368, %v2130
    %v2393 = vmul.f32 %v2348, %v2373
    %v2394 = vmul.f32 %v2350, %v2374
    %v2395 = vadd.f32 %v2391, %v2393
    %v2396 = vadd.f32 %v2392, %v2394
    %v2397 = vtanh.pop %v2395
    %v2398 = vtanh.pop %v2396
    %v2399 = vmul.f32 %v2388, %v2397
    %v2400 = vmul.f32 %v2390, %v2398
    %s2401 = scalar_lea.vmem [#allocation2], 4
    %v2402 = vld [vmem:[%s2401] ss:$8 sm:$0xf]
    %s2403 = scalar_lea.vmem [#allocation2], 36
    %v2404 = vld [vmem:[%s2403] ss:$8 sm:$0xf]
    %v2407 = vcombine.low %v2399, %v2400
    %v2409 = vunpack.c.l.s4 1966171168
    %v2410 = vunpack.c.0.s8 %v2409
    %v2411 = vlaneseq
    %v2412 = vshrl.u32 %v2411, 7
    %v2413 = vsub.s32 %v2410, %v2412
    %v2414 = vrot.slane %v2407, %v2413
    %v2416 = vunpack.c.l.s4 1966171168
    %v2417 = vunpack.c.0.s8 %v2416
    %v2418 = vlaneseq
    %v2419 = vshrl.u32 %v2418, 7
    %v2420 = vsub.s32 %v2417, %v2419
    %v2421 = vrot.slane %v2414, %v2420
    %2423 = vmatprep.subr.mxu0 %v1296
    %2424 = vmatpush1.msra.mxu0 %v1295
    %2425 = vmatprep.subr.mxu0 %v1300
    %2426 = vmatpush1.msra.mxu0 %v1299
    %2427 = vmatprep.subr.mxu0 %v1304
    %2428 = vmatpush1.msra.mxu0 %v1303
    %2429 = vmatprep.subr.mxu0 %v1308
    %2430 = vmatpush1.msra.mxu0 %v1307
    %2431 = vmatprep.subr.mxu0 %v1312
    %2432 = vmatpush1.msra.mxu0 %v1311
    %2433 = vmatprep.subr.mxu0 %v1316
    %2434 = vmatpush1.msra.mxu0 %v1315
    %2435 = vmatprep.subr.mxu0 %v1320
    %2436 = vmatpush1.msra.mxu0 %v1319
    %2437 = vmatprep.subr.mxu0 %v1324
    %2438 = vmatpush1.msra.mxu0 %v1323
    %2439 = vmatprep.subr.mxu0 %v1328
    %2440 = vmatpush1.msra.mxu0 %v1327
    %2441 = vmatprep.subr.mxu0 %v1332
    %2442 = vmatpush1.msra.mxu0 %v1331
    %2443 = vmatprep.subr.mxu0 %v1336
    %2444 = vmatpush1.msra.mxu0 %v1335
    %2445 = vmatprep.subr.mxu0 %v1340
    %2446 = vmatpush1.msra.mxu0 %v1339
    %2447 = vmatprep.subr.mxu0 %v1344
    %2448 = vmatpush1.msra.mxu0 %v1343
    %2449 = vmatprep.subr.mxu0 %v1348
    %2450 = vmatpush1.msra.mxu0 %v1347
    %2451 = vmatprep.subr.mxu0 %v1352
    %2452 = vmatpush1.msra.mxu0 %v1351
    %2453 = vmatprep.subr.mxu0 %v1356
    %2454 = vmatpush1.msra.mxu0 %v1355
    %2455 = vmatprep.subr.mxu0 0.0
    %2456 = vmatpush1.msra.mxu0 0.0
    %2457 = vmatprep.subr.mxu0 0.0
    %2458 = vmatpush1.msra.mxu0 0.0
    %2459 = vmatprep.subr.mxu0 0.0
    %2460 = vmatpush1.msra.mxu0 0.0
    %2461 = vmatprep.subr.mxu0 0.0
    %2462 = vmatpush1.msra.mxu0 0.0
    %2463 = vmatprep.subr.mxu0 0.0
    %2464 = vmatpush1.msra.mxu0 0.0
    %2465 = vmatprep.subr.mxu0 0.0
    %2466 = vmatpush1.msra.mxu0 0.0
    %2467 = vmatprep.subr.mxu0 0.0
    %2468 = vmatpush1.msra.mxu0 0.0
    %2469 = vmatprep.subr.mxu0 0.0
    %2470 = vmatpush1.msra.mxu0 0.0
    %2471 = vmatprep.subr.mxu0 0.0
    %2472 = vmatpush1.msra.mxu0 0.0
    %2473 = vmatprep.subr.mxu0 0.0
    %2474 = vmatpush1.msra.mxu0 0.0
    %2475 = vmatprep.subr.mxu0 0.0
    %2476 = vmatpush1.msra.mxu0 0.0
    %2477 = vmatprep.subr.mxu0 0.0
    %2478 = vmatpush1.msra.mxu0 0.0
    %2479 = vmatprep.subr.mxu0 0.0
    %2480 = vmatpush1.msra.mxu0 0.0
    %2481 = vmatprep.subr.mxu0 0.0
    %2482 = vmatpush1.msra.mxu0 0.0
    %2483 = vmatprep.subr.mxu0 0.0
    %2484 = vmatpush1.msra.mxu0 0.0
    %2485 = vmatprep.subr.mxu0 0.0
    %2486 = vmatpush1.msra.mxu0 0.0
    %2487 = vmatprep.mubr.f32.mxu0 0.0
    %2488 = vmatmul.mubr.f32.gmra.mrb[0].mxu0 %v2421
    %v2489 = vpop.f32.mrb[0].mxu0
    %v2490 = vadd.f32 0.0, %v2489
    %v2491 = vpop.f32.mrb[0].mxu0
    %v2492 = vadd.f32 0.0, %v2491
    %2493 = vdwg.mxu0
    %2494 = vmatprep.subr.mxu0 %v1298
    %2495 = vmatpush1.msra.mxu0 %v1297
    %2496 = vmatprep.subr.mxu0 %v1302
    %2497 = vmatpush1.msra.mxu0 %v1301
    %2498 = vmatprep.subr.mxu0 %v1306
    %2499 = vmatpush1.msra.mxu0 %v1305
    %2500 = vmatprep.subr.mxu0 %v1310
    %2501 = vmatpush1.msra.mxu0 %v1309
    %2502 = vmatprep.subr.mxu0 %v1314
    %2503 = vmatpush1.msra.mxu0 %v1313
    %2504 = vmatprep.subr.mxu0 %v1318
    %2505 = vmatpush1.msra.mxu0 %v1317
    %2506 = vmatprep.subr.mxu0 %v1322
    %2507 = vmatpush1.msra.mxu0 %v1321
    %2508 = vmatprep.subr.mxu0 %v1326
    %2509 = vmatpush1.msra.mxu0 %v1325
    %2510 = vmatprep.subr.mxu0 %v1330
    %2511 = vmatpush1.msra.mxu0 %v1329
    %2512 = vmatprep.subr.mxu0 %v1334
    %2513 = vmatpush1.msra.mxu0 %v1333
    %2514 = vmatprep.subr.mxu0 %v1338
    %2515 = vmatpush1.msra.mxu0 %v1337
    %2516 = vmatprep.subr.mxu0 %v1342
    %2517 = vmatpush1.msra.mxu0 %v1341
    %2518 = vmatprep.subr.mxu0 %v1346
    %2519 = vmatpush1.msra.mxu0 %v1345
    %2520 = vmatprep.subr.mxu0 %v1350
    %2521 = vmatpush1.msra.mxu0 %v1349
    %2522 = vmatprep.subr.mxu0 %v1354
    %2523 = vmatpush1.msra.mxu0 %v1353
    %2524 = vmatprep.subr.mxu0 %v1358
    %2525 = vmatpush1.msra.mxu0 %v1357
    %2526 = vmatprep.subr.mxu0 0.0
    %2527 = vmatpush1.msra.mxu0 0.0
    %2528 = vmatprep.subr.mxu0 0.0
    %2529 = vmatpush1.msra.mxu0 0.0
    %2530 = vmatprep.subr.mxu0 0.0
    %2531 = vmatpush1.msra.mxu0 0.0
    %2532 = vmatprep.subr.mxu0 0.0
    %2533 = vmatpush1.msra.mxu0 0.0
    %2534 = vmatprep.subr.mxu0 0.0
    %2535 = vmatpush1.msra.mxu0 0.0
    %2536 = vmatprep.subr.mxu0 0.0
    %2537 = vmatpush1.msra.mxu0 0.0
    %2538 = vmatprep.subr.mxu0 0.0
    %2539 = vmatpush1.msra.mxu0 0.0
    %2540 = vmatprep.subr.mxu0 0.0
    %2541 = vmatpush1.msra.mxu0 0.0
    %2542 = vmatprep.subr.mxu0 0.0
    %2543 = vmatpush1.msra.mxu0 0.0
    %2544 = vmatprep.subr.mxu0 0.0
    %2545 = vmatpush1.msra.mxu0 0.0
    %2546 = vmatprep.subr.mxu0 0.0
    %2547 = vmatpush1.msra.mxu0 0.0
    %2548 = vmatprep.subr.mxu0 0.0
    %2549 = vmatpush1.msra.mxu0 0.0
    %2550 = vmatprep.subr.mxu0 0.0
    %2551 = vmatpush1.msra.mxu0 0.0
    %2552 = vmatprep.subr.mxu0 0.0
    %2553 = vmatpush1.msra.mxu0 0.0
    %2554 = vmatprep.subr.mxu0 0.0
    %2555 = vmatpush1.msra.mxu0 0.0
    %2556 = vmatprep.subr.mxu0 0.0
    %2557 = vmatpush1.msra.mxu0 0.0
    %2558 = vmatprep.mubr.f32.mxu0 0.0
    %2559 = vmatmul.mubr.f32.gmra.mrb[0].mxu0 %v2421
    %v2560 = vpop.f32.mrb[0].mxu0
    %v2561 = vadd.f32 0.0, %v2560
    %v2562 = vpop.f32.mrb[0].mxu0
    %v2563 = vadd.f32 0.0, %v2562
    %2564 = vdwg.mxu0
    %v2569 = vcombine.low %v2490, %v2492
    %v2570 = vcombine.low %v2561, %v2563
    %v2572 = vunpack.c.l.s4 1966171168
    %v2573 = vunpack.c.0.s8 %v2572
    %v2574 = vlaneseq
    %v2575 = vshrl.u32 %v2574, 7
    %v2576 = vsub.s32 %v2573, %v2575
    %v2577 = vrot.slane %v2569, %v2576
    %v2579 = vunpack.c.l.s4 1966171168
    %v2580 = vunpack.c.0.s8 %v2579
    %v2581 = vlaneseq
    %v2582 = vshrl.u32 %v2581, 7
    %v2583 = vsub.s32 %v2580, %v2582
    %v2584 = vrot.slane %v2570, %v2583
    %v2585 = vcombine.low %v2577, %v2584
    %v2586 = vcombine.high %v2577, %v2584
    %v2588 = vunpack.c.l.s4 1966171168
    %v2589 = vunpack.c.0.s8 %v2588
    %v2590 = vlaneseq
    %v2591 = vshrl.u32 %v2590, 7
    %v2592 = vsub.s32 %v2589, %v2591
    %v2593 = vrot.slane %v2585, %v2592
    %v2595 = vunpack.c.l.s4 1966171168
    %v2596 = vunpack.c.0.s8 %v2595
    %v2597 = vlaneseq
    %v2598 = vshrl.u32 %v2597, 7
    %v2599 = vsub.s32 %v2596, %v2598
    %v2600 = vrot.slane %v2586, %v2599
    %v2603 = vadd.f32 %v2402, %v2593
    %v2604 = vadd.f32 %v2404, %v2600
    %v2605 = vxor.u32 %v2603, 2147483648
    %v2606 = vxor.u32 %v2604, 2147483648
    %v2607 = vmul.f32 %v2605, 1.442695
    %v2608 = vpow.pop %v2607
    %v2609 = vmul.f32 %v2606, 1.442695
    %v2610 = vpow.pop %v2609
    %v2611 = vadd.f32 %v2608, 1.0
    %v2612 = vadd.f32 %v2610, 1.0
    %v2613 = vrcp.pop %v2611
    %v2614 = vmul.f32 1.0, %v2613
    %v2615 = vrcp.pop %v2612
    %v2616 = vmul.f32 1.0, %v2615
    %v2619 = vrot.slane %v2603, 1
    %v2620 = vrot.slane %v2604, 1
    %v2623 = vxor.u32 %v2619, 2147483648
    %v2624 = vxor.u32 %v2620, 2147483648
    %v2625 = vmul.f32 %v2623, 1.442695
    %v2626 = vpow.pop %v2625
    %v2627 = vmul.f32 %v2624, 1.442695
    %v2628 = vpow.pop %v2627
    %v2629 = vadd.f32 %v2626, 1.0
    %v2630 = vadd.f32 %v2628, 1.0
    %v2631 = vrcp.pop %v2629
    %v2632 = vmul.f32 1.0, %v2631
    %v2633 = vrcp.pop %v2630
    %v2634 = vmul.f32 1.0, %v2633
    %v2635 = vrot.slane %v2603, 2
    %v2636 = vrot.slane %v2604, 2
    %v2639 = vtanh.pop %v2635
    %v2640 = vtanh.pop %v2636
    %v2641 = vrot.slane %v2603, 3
    %v2642 = vrot.slane %v2604, 3
    %v2645 = vxor.u32 %v2641, 2147483648
    %v2646 = vxor.u32 %v2642, 2147483648
    %v2647 = vmul.f32 %v2645, 1.442695
    %v2648 = vpow.pop %v2647
    %v2649 = vmul.f32 %v2646, 1.442695
    %v2650 = vpow.pop %v2649
    %v2651 = vadd.f32 %v2648, 1.0
    %v2652 = vadd.f32 %v2650, 1.0
    %v2653 = vrcp.pop %v2651
    %v2654 = vmul.f32 1.0, %v2653
    %v2655 = vrcp.pop %v2652
    %v2656 = vmul.f32 1.0, %v2655
    %v2657 = vmul.f32 %v2632, %v2395
    %v2658 = vmul.f32 %v2634, %v2396
    %v2659 = vmul.f32 %v2614, %v2639
    %v2660 = vmul.f32 %v2616, %v2640
    %v2661 = vadd.f32 %v2657, %v2659
    %v2662 = vadd.f32 %v2658, %v2660
    %v2663 = vtanh.pop %v2661
    %v2664 = vtanh.pop %v2662
    %v2665 = vmul.f32 %v2654, %v2663
    %v2666 = vmul.f32 %v2656, %v2664
    %s2667 = scalar_lea.vmem [#allocation2], 5
    %v2668 = vld [vmem:[%s2667] ss:$8 sm:$0xf]
    %s2669 = scalar_lea.vmem [#allocation2], 37
    %v2670 = vld [vmem:[%s2669] ss:$8 sm:$0xf]
    %v2673 = vcombine.low %v2665, %v2666
    %v2675 = vunpack.c.l.s4 1966171168
    %v2676 = vunpack.c.0.s8 %v2675
    %v2677 = vlaneseq
    %v2678 = vshrl.u32 %v2677, 7
    %v2679 = vsub.s32 %v2676, %v2678
    %v2680 = vrot.slane %v2673, %v2679
    %v2682 = vunpack.c.l.s4 1966171168
    %v2683 = vunpack.c.0.s8 %v2682
    %v2684 = vlaneseq
    %v2685 = vshrl.u32 %v2684, 7
    %v2686 = vsub.s32 %v2683, %v2685
    %v2687 = vrot.slane %v2680, %v2686
    %2689 = vmatprep.subr.mxu0 %v1296
    %2690 = vmatpush1.msra.mxu0 %v1295
    %2691 = vmatprep.subr.mxu0 %v1300
    %2692 = vmatpush1.msra.mxu0 %v1299
    %2693 = vmatprep.subr.mxu0 %v1304
    %2694 = vmatpush1.msra.mxu0 %v1303
    %2695 = vmatprep.subr.mxu0 %v1308
    %2696 = vmatpush1.msra.mxu0 %v1307
    %2697 = vmatprep.subr.mxu0 %v1312
    %2698 = vmatpush1.msra.mxu0 %v1311
    %2699 = vmatprep.subr.mxu0 %v1316
    %2700 = vmatpush1.msra.mxu0 %v1315
    %2701 = vmatprep.subr.mxu0 %v1320
    %2702 = vmatpush1.msra.mxu0 %v1319
    %2703 = vmatprep.subr.mxu0 %v1324
    %2704 = vmatpush1.msra.mxu0 %v1323
    %2705 = vmatprep.subr.mxu0 %v1328
    %2706 = vmatpush1.msra.mxu0 %v1327
    %2707 = vmatprep.subr.mxu0 %v1332
    %2708 = vmatpush1.msra.mxu0 %v1331
    %2709 = vmatprep.subr.mxu0 %v1336
    %2710 = vmatpush1.msra.mxu0 %v1335
    %2711 = vmatprep.subr.mxu0 %v1340
    %2712 = vmatpush1.msra.mxu0 %v1339
    %2713 = vmatprep.subr.mxu0 %v1344
    %2714 = vmatpush1.msra.mxu0 %v1343
    %2715 = vmatprep.subr.mxu0 %v1348
    %2716 = vmatpush1.msra.mxu0 %v1347
    %2717 = vmatprep.subr.mxu0 %v1352
    %2718 = vmatpush1.msra.mxu0 %v1351
    %2719 = vmatprep.subr.mxu0 %v1356
    %2720 = vmatpush1.msra.mxu0 %v1355
    %2721 = vmatprep.subr.mxu0 0.0
    %2722 = vmatpush1.msra.mxu0 0.0
    %2723 = vmatprep.subr.mxu0 0.0
    %2724 = vmatpush1.msra.mxu0 0.0
    %2725 = vmatprep.subr.mxu0 0.0
    %2726 = vmatpush1.msra.mxu0 0.0
    %2727 = vmatprep.subr.mxu0 0.0
    %2728 = vmatpush1.msra.mxu0 0.0
    %2729 = vmatprep.subr.mxu0 0.0
    %2730 = vmatpush1.msra.mxu0 0.0
    %2731 = vmatprep.subr.mxu0 0.0
    %2732 = vmatpush1.msra.mxu0 0.0
    %2733 = vmatprep.subr.mxu0 0.0
    %2734 = vmatpush1.msra.mxu0 0.0
    %2735 = vmatprep.subr.mxu0 0.0
    %2736 = vmatpush1.msra.mxu0 0.0
    %2737 = vmatprep.subr.mxu0 0.0
    %2738 = vmatpush1.msra.mxu0 0.0
    %2739 = vmatprep.subr.mxu0 0.0
    %2740 = vmatpush1.msra.mxu0 0.0
    %2741 = vmatprep.subr.mxu0 0.0
    %2742 = vmatpush1.msra.mxu0 0.0
    %2743 = vmatprep.subr.mxu0 0.0
    %2744 = vmatpush1.msra.mxu0 0.0
    %2745 = vmatprep.subr.mxu0 0.0
    %2746 = vmatpush1.msra.mxu0 0.0
    %2747 = vmatprep.subr.mxu0 0.0
    %2748 = vmatpush1.msra.mxu0 0.0
    %2749 = vmatprep.subr.mxu0 0.0
    %2750 = vmatpush1.msra.mxu0 0.0
    %2751 = vmatprep.subr.mxu0 0.0
    %2752 = vmatpush1.msra.mxu0 0.0
    %2753 = vmatprep.mubr.f32.mxu0 0.0
    %2754 = vmatmul.mubr.f32.gmra.mrb[0].mxu0 %v2687
    %v2755 = vpop.f32.mrb[0].mxu0
    %v2756 = vadd.f32 0.0, %v2755
    %v2757 = vpop.f32.mrb[0].mxu0
    %v2758 = vadd.f32 0.0, %v2757
    %2759 = vdwg.mxu0
    %2760 = vmatprep.subr.mxu0 %v1298
    %2761 = vmatpush1.msra.mxu0 %v1297
    %2762 = vmatprep.subr.mxu0 %v1302
    %2763 = vmatpush1.msra.mxu0 %v1301
    %2764 = vmatprep.subr.mxu0 %v1306
    %2765 = vmatpush1.msra.mxu0 %v1305
    %2766 = vmatprep.subr.mxu0 %v1310
    %2767 = vmatpush1.msra.mxu0 %v1309
    %2768 = vmatprep.subr.mxu0 %v1314
    %2769 = vmatpush1.msra.mxu0 %v1313
    %2770 = vmatprep.subr.mxu0 %v1318
    %2771 = vmatpush1.msra.mxu0 %v1317
    %2772 = vmatprep.subr.mxu0 %v1322
    %2773 = vmatpush1.msra.mxu0 %v1321
    %2774 = vmatprep.subr.mxu0 %v1326
    %2775 = vmatpush1.msra.mxu0 %v1325
    %2776 = vmatprep.subr.mxu0 %v1330
    %2777 = vmatpush1.msra.mxu0 %v1329
    %2778 = vmatprep.subr.mxu0 %v1334
    %2779 = vmatpush1.msra.mxu0 %v1333
    %2780 = vmatprep.subr.mxu0 %v1338
    %2781 = vmatpush1.msra.mxu0 %v1337
    %2782 = vmatprep.subr.mxu0 %v1342
    %2783 = vmatpush1.msra.mxu0 %v1341
    %2784 = vmatprep.subr.mxu0 %v1346
    %2785 = vmatpush1.msra.mxu0 %v1345
    %2786 = vmatprep.subr.mxu0 %v1350
    %2787 = vmatpush1.msra.mxu0 %v1349
    %2788 = vmatprep.subr.mxu0 %v1354
    %2789 = vmatpush1.msra.mxu0 %v1353
    %2790 = vmatprep.subr.mxu0 %v1358
    %2791 = vmatpush1.msra.mxu0 %v1357
    %2792 = vmatprep.subr.mxu0 0.0
    %2793 = vmatpush1.msra.mxu0 0.0
    %2794 = vmatprep.subr.mxu0 0.0
    %2795 = vmatpush1.msra.mxu0 0.0
    %2796 = vmatprep.subr.mxu0 0.0
    %2797 = vmatpush1.msra.mxu0 0.0
    %2798 = vmatprep.subr.mxu0 0.0
    %2799 = vmatpush1.msra.mxu0 0.0
    %2800 = vmatprep.subr.mxu0 0.0
    %2801 = vmatpush1.msra.mxu0 0.0
    %2802 = vmatprep.subr.mxu0 0.0
    %2803 = vmatpush1.msra.mxu0 0.0
    %2804 = vmatprep.subr.mxu0 0.0
    %2805 = vmatpush1.msra.mxu0 0.0
    %2806 = vmatprep.subr.mxu0 0.0
    %2807 = vmatpush1.msra.mxu0 0.0
    %2808 = vmatprep.subr.mxu0 0.0
    %2809 = vmatpush1.msra.mxu0 0.0
    %2810 = vmatprep.subr.mxu0 0.0
    %2811 = vmatpush1.msra.mxu0 0.0
    %2812 = vmatprep.subr.mxu0 0.0
    %2813 = vmatpush1.msra.mxu0 0.0
    %2814 = vmatprep.subr.mxu0 0.0
    %2815 = vmatpush1.msra.mxu0 0.0
    %2816 = vmatprep.subr.mxu0 0.0
    %2817 = vmatpush1.msra.mxu0 0.0
    %2818 = vmatprep.subr.mxu0 0.0
    %2819 = vmatpush1.msra.mxu0 0.0
    %2820 = vmatprep.subr.mxu0 0.0
    %2821 = vmatpush1.msra.mxu0 0.0
    %2822 = vmatprep.subr.mxu0 0.0
    %2823 = vmatpush1.msra.mxu0 0.0
    %2824 = vmatprep.mubr.f32.mxu0 0.0
    %2825 = vmatmul.mubr.f32.gmra.mrb[0].mxu0 %v2687
    %v2826 = vpop.f32.mrb[0].mxu0
    %v2827 = vadd.f32 0.0, %v2826
    %v2828 = vpop.f32.mrb[0].mxu0
    %v2829 = vadd.f32 0.0, %v2828
    %2830 = vdwg.mxu0
    %v2835 = vcombine.low %v2756, %v2758
    %v2836 = vcombine.low %v2827, %v2829
    %v2838 = vunpack.c.l.s4 1966171168
    %v2839 = vunpack.c.0.s8 %v2838
    %v2840 = vlaneseq
    %v2841 = vshrl.u32 %v2840, 7
    %v2842 = vsub.s32 %v2839, %v2841
    %v2843 = vrot.slane %v2835, %v2842
    %v2845 = vunpack.c.l.s4 1966171168
    %v2846 = vunpack.c.0.s8 %v2845
    %v2847 = vlaneseq
    %v2848 = vshrl.u32 %v2847, 7
    %v2849 = vsub.s32 %v2846, %v2848
    %v2850 = vrot.slane %v2836, %v2849
    %v2851 = vcombine.low %v2843, %v2850
    %v2852 = vcombine.high %v2843, %v2850
    %v2854 = vunpack.c.l.s4 1966171168
    %v2855 = vunpack.c.0.s8 %v2854
    %v2856 = vlaneseq
    %v2857 = vshrl.u32 %v2856, 7
    %v2858 = vsub.s32 %v2855, %v2857
    %v2859 = vrot.slane %v2851, %v2858
    %v2861 = vunpack.c.l.s4 1966171168
    %v2862 = vunpack.c.0.s8 %v2861
    %v2863 = vlaneseq
    %v2864 = vshrl.u32 %v2863, 7
    %v2865 = vsub.s32 %v2862, %v2864
    %v2866 = vrot.slane %v2852, %v2865
    %v2869 = vadd.f32 %v2668, %v2859
    %v2870 = vadd.f32 %v2670, %v2866
    %v2871 = vxor.u32 %v2869, 2147483648
    %v2872 = vxor.u32 %v2870, 2147483648
    %v2873 = vmul.f32 %v2871, 1.442695
    %v2874 = vpow.pop %v2873
    %v2875 = vmul.f32 %v2872, 1.442695
    %v2876 = vpow.pop %v2875
    %v2877 = vadd.f32 %v2874, 1.0
    %v2878 = vadd.f32 %v2876, 1.0
    %v2879 = vrcp.pop %v2877
    %v2880 = vmul.f32 1.0, %v2879
    %v2881 = vrcp.pop %v2878
    %v2882 = vmul.f32 1.0, %v2881
    %v2885 = vrot.slane %v2869, 1
    %v2886 = vrot.slane %v2870, 1
    %v2889 = vxor.u32 %v2885, 2147483648
    %v2890 = vxor.u32 %v2886, 2147483648
    %v2891 = vmul.f32 %v2889, 1.442695
    %v2892 = vpow.pop %v2891
    %v2893 = vmul.f32 %v2890, 1.442695
    %v2894 = vpow.pop %v2893
    %v2895 = vadd.f32 %v2892, 1.0
    %v2896 = vadd.f32 %v2894, 1.0
    %v2897 = vrcp.pop %v2895
    %v2898 = vmul.f32 1.0, %v2897
    %v2899 = vrcp.pop %v2896
    %v2900 = vmul.f32 1.0, %v2899
    %v2901 = vrot.slane %v2869, 2
    %v2902 = vrot.slane %v2870, 2
    %v2905 = vtanh.pop %v2901
    %v2906 = vtanh.pop %v2902
    %v2907 = vrot.slane %v2869, 3
    %v2908 = vrot.slane %v2870, 3
    %v2911 = vxor.u32 %v2907, 2147483648
    %v2912 = vxor.u32 %v2908, 2147483648
    %v2913 = vmul.f32 %v2911, 1.442695
    %v2914 = vpow.pop %v2913
    %v2915 = vmul.f32 %v2912, 1.442695
    %v2916 = vpow.pop %v2915
    %v2917 = vadd.f32 %v2914, 1.0
    %v2918 = vadd.f32 %v2916, 1.0
    %v2919 = vrcp.pop %v2917
    %v2920 = vmul.f32 1.0, %v2919
    %v2921 = vrcp.pop %v2918
    %v2922 = vmul.f32 1.0, %v2921
    %v2923 = vmul.f32 %v2898, %v2661
    %v2924 = vmul.f32 %v2900, %v2662
    %v2925 = vmul.f32 %v2880, %v2905
    %v2926 = vmul.f32 %v2882, %v2906
    %v2927 = vadd.f32 %v2923, %v2925
    %v2928 = vadd.f32 %v2924, %v2926
    %v2929 = vtanh.pop %v2927
    %v2930 = vtanh.pop %v2928
    %v2931 = vmul.f32 %v2920, %v2929
    %v2932 = vmul.f32 %v2922, %v2930
    %s2933 = scalar_lea.vmem [#allocation2], 6
    %v2934 = vld [vmem:[%s2933] ss:$8 sm:$0xf]
    %s2935 = scalar_lea.vmem [#allocation2], 38
    %v2936 = vld [vmem:[%s2935] ss:$8 sm:$0xf]
    %v2939 = vcombine.low %v2931, %v2932
    %v2941 = vunpack.c.l.s4 1966171168
    %v2942 = vunpack.c.0.s8 %v2941
    %v2943 = vlaneseq
    %v2944 = vshrl.u32 %v2943, 7
    %v2945 = vsub.s32 %v2942, %v2944
    %v2946 = vrot.slane %v2939, %v2945
    %v2948 = vunpack.c.l.s4 1966171168
    %v2949 = vunpack.c.0.s8 %v2948
    %v2950 = vlaneseq
    %v2951 = vshrl.u32 %v2950, 7
    %v2952 = vsub.s32 %v2949, %v2951
    %v2953 = vrot.slane %v2946, %v2952
    %2955 = vmatprep.subr.mxu0 %v1296
    %2956 = vmatpush1.msra.mxu0 %v1295
    %2957 = vmatprep.subr.mxu0 %v1300
    %2958 = vmatpush1.msra.mxu0 %v1299
    %2959 = vmatprep.subr.mxu0 %v1304
    %2960 = vmatpush1.msra.mxu0 %v1303
    %2961 = vmatprep.subr.mxu0 %v1308
    %2962 = vmatpush1.msra.mxu0 %v1307
    %2963 = vmatprep.subr.mxu0 %v1312
    %2964 = vmatpush1.msra.mxu0 %v1311
    %2965 = vmatprep.subr.mxu0 %v1316
    %2966 = vmatpush1.msra.mxu0 %v1315
    %2967 = vmatprep.subr.mxu0 %v1320
    %2968 = vmatpush1.msra.mxu0 %v1319
    %2969 = vmatprep.subr.mxu0 %v1324
    %2970 = vmatpush1.msra.mxu0 %v1323
    %2971 = vmatprep.subr.mxu0 %v1328
    %2972 = vmatpush1.msra.mxu0 %v1327
    %2973 = vmatprep.subr.mxu0 %v1332
    %2974 = vmatpush1.msra.mxu0 %v1331
    %2975 = vmatprep.subr.mxu0 %v1336
    %2976 = vmatpush1.msra.mxu0 %v1335
    %2977 = vmatprep.subr.mxu0 %v1340
    %2978 = vmatpush1.msra.mxu0 %v1339
    %2979 = vmatprep.subr.mxu0 %v1344
    %2980 = vmatpush1.msra.mxu0 %v1343
    %2981 = vmatprep.subr.mxu0 %v1348
    %2982 = vmatpush1.msra.mxu0 %v1347
    %2983 = vmatprep.subr.mxu0 %v1352
    %2984 = vmatpush1.msra.mxu0 %v1351
    %2985 = vmatprep.subr.mxu0 %v1356
    %2986 = vmatpush1.msra.mxu0 %v1355
    %2987 = vmatprep.subr.mxu0 0.0
    %2988 = vmatpush1.msra.mxu0 0.0
    %2989 = vmatprep.subr.mxu0 0.0
    %2990 = vmatpush1.msra.mxu0 0.0
    %2991 = vmatprep.subr.mxu0 0.0
    %2992 = vmatpush1.msra.mxu0 0.0
    %2993 = vmatprep.subr.mxu0 0.0
    %2994 = vmatpush1.msra.mxu0 0.0
    %2995 = vmatprep.subr.mxu0 0.0
    %2996 = vmatpush1.msra.mxu0 0.0
    %2997 = vmatprep.subr.mxu0 0.0
    %2998 = vmatpush1.msra.mxu0 0.0
    %2999 = vmatprep.subr.mxu0 0.0
    %3000 = vmatpush1.msra.mxu0 0.0
    %3001 = vmatprep.subr.mxu0 0.0
    %3002 = vmatpush1.msra.mxu0 0.0
    %3003 = vmatprep.subr.mxu0 0.0
    %3004 = vmatpush1.msra.mxu0 0.0
    %3005 = vmatprep.subr.mxu0 0.0
    %3006 = vmatpush1.msra.mxu0 0.0
    %3007 = vmatprep.subr.mxu0 0.0
    %3008 = vmatpush1.msra.mxu0 0.0
    %3009 = vmatprep.subr.mxu0 0.0
    %3010 = vmatpush1.msra.mxu0 0.0
    %3011 = vmatprep.subr.mxu0 0.0
    %3012 = vmatpush1.msra.mxu0 0.0
    %3013 = vmatprep.subr.mxu0 0.0
    %3014 = vmatpush1.msra.mxu0 0.0
    %3015 = vmatprep.subr.mxu0 0.0
    %3016 = vmatpush1.msra.mxu0 0.0
    %3017 = vmatprep.subr.mxu0 0.0
    %3018 = vmatpush1.msra.mxu0 0.0
    %3019 = vmatprep.mubr.f32.mxu0 0.0
    %3020 = vmatmul.mubr.f32.gmra.mrb[0].mxu0 %v2953
    %v3021 = vpop.f32.mrb[0].mxu0
    %v3022 = vadd.f32 0.0, %v3021
    %v3023 = vpop.f32.mrb[0].mxu0
    %v3024 = vadd.f32 0.0, %v3023
    %3025 = vdwg.mxu0
    %3026 = vmatprep.subr.mxu0 %v1298
    %3027 = vmatpush1.msra.mxu0 %v1297
    %3028 = vmatprep.subr.mxu0 %v1302
    %3029 = vmatpush1.msra.mxu0 %v1301
    %3030 = vmatprep.subr.mxu0 %v1306
    %3031 = vmatpush1.msra.mxu0 %v1305
    %3032 = vmatprep.subr.mxu0 %v1310
    %3033 = vmatpush1.msra.mxu0 %v1309
    %3034 = vmatprep.subr.mxu0 %v1314
    %3035 = vmatpush1.msra.mxu0 %v1313
    %3036 = vmatprep.subr.mxu0 %v1318
    %3037 = vmatpush1.msra.mxu0 %v1317
    %3038 = vmatprep.subr.mxu0 %v1322
    %3039 = vmatpush1.msra.mxu0 %v1321
    %3040 = vmatprep.subr.mxu0 %v1326
    %3041 = vmatpush1.msra.mxu0 %v1325
    %3042 = vmatprep.subr.mxu0 %v1330
    %3043 = vmatpush1.msra.mxu0 %v1329
    %3044 = vmatprep.subr.mxu0 %v1334
    %3045 = vmatpush1.msra.mxu0 %v1333
    %3046 = vmatprep.subr.mxu0 %v1338
    %3047 = vmatpush1.msra.mxu0 %v1337
    %3048 = vmatprep.subr.mxu0 %v1342
    %3049 = vmatpush1.msra.mxu0 %v1341
    %3050 = vmatprep.subr.mxu0 %v1346
    %3051 = vmatpush1.msra.mxu0 %v1345
    %3052 = vmatprep.subr.mxu0 %v1350
    %3053 = vmatpush1.msra.mxu0 %v1349
    %3054 = vmatprep.subr.mxu0 %v1354
    %3055 = vmatpush1.msra.mxu0 %v1353
    %3056 = vmatprep.subr.mxu0 %v1358
    %3057 = vmatpush1.msra.mxu0 %v1357
    %3058 = vmatprep.subr.mxu0 0.0
    %3059 = vmatpush1.msra.mxu0 0.0
    %3060 = vmatprep.subr.mxu0 0.0
    %3061 = vmatpush1.msra.mxu0 0.0
    %3062 = vmatprep.subr.mxu0 0.0
    %3063 = vmatpush1.msra.mxu0 0.0
    %3064 = vmatprep.subr.mxu0 0.0
    %3065 = vmatpush1.msra.mxu0 0.0
    %3066 = vmatprep.subr.mxu0 0.0
    %3067 = vmatpush1.msra.mxu0 0.0
    %3068 = vmatprep.subr.mxu0 0.0
    %3069 = vmatpush1.msra.mxu0 0.0
    %3070 = vmatprep.subr.mxu0 0.0
    %3071 = vmatpush1.msra.mxu0 0.0
    %3072 = vmatprep.subr.mxu0 0.0
    %3073 = vmatpush1.msra.mxu0 0.0
    %3074 = vmatprep.subr.mxu0 0.0
    %3075 = vmatpush1.msra.mxu0 0.0
    %3076 = vmatprep.subr.mxu0 0.0
    %3077 = vmatpush1.msra.mxu0 0.0
    %3078 = vmatprep.subr.mxu0 0.0
    %3079 = vmatpush1.msra.mxu0 0.0
    %3080 = vmatprep.subr.mxu0 0.0
    %3081 = vmatpush1.msra.mxu0 0.0
    %3082 = vmatprep.subr.mxu0 0.0
    %3083 = vmatpush1.msra.mxu0 0.0
    %3084 = vmatprep.subr.mxu0 0.0
    %3085 = vmatpush1.msra.mxu0 0.0
    %3086 = vmatprep.subr.mxu0 0.0
    %3087 = vmatpush1.msra.mxu0 0.0
    %3088 = vmatprep.subr.mxu0 0.0
    %3089 = vmatpush1.msra.mxu0 0.0
    %3090 = vmatprep.mubr.f32.mxu0 0.0
    %3091 = vmatmul.mubr.f32.gmra.mrb[0].mxu0 %v2953
    %v3092 = vpop.f32.mrb[0].mxu0
    %v3093 = vadd.f32 0.0, %v3092
    %v3094 = vpop.f32.mrb[0].mxu0
    %v3095 = vadd.f32 0.0, %v3094
    %3096 = vdwg.mxu0
    %v3101 = vcombine.low %v3022, %v3024
    %v3102 = vcombine.low %v3093, %v3095
    %v3104 = vunpack.c.l.s4 1966171168
    %v3105 = vunpack.c.0.s8 %v3104
    %v3106 = vlaneseq
    %v3107 = vshrl.u32 %v3106, 7
    %v3108 = vsub.s32 %v3105, %v3107
    %v3109 = vrot.slane %v3101, %v3108
    %v3111 = vunpack.c.l.s4 1966171168
    %v3112 = vunpack.c.0.s8 %v3111
    %v3113 = vlaneseq
    %v3114 = vshrl.u32 %v3113, 7
    %v3115 = vsub.s32 %v3112, %v3114
    %v3116 = vrot.slane %v3102, %v3115
    %v3117 = vcombine.low %v3109, %v3116
    %v3118 = vcombine.high %v3109, %v3116
    %v3120 = vunpack.c.l.s4 1966171168
    %v3121 = vunpack.c.0.s8 %v3120
    %v3122 = vlaneseq
    %v3123 = vshrl.u32 %v3122, 7
    %v3124 = vsub.s32 %v3121, %v3123
    %v3125 = vrot.slane %v3117, %v3124
    %v3127 = vunpack.c.l.s4 1966171168
    %v3128 = vunpack.c.0.s8 %v3127
    %v3129 = vlaneseq
    %v3130 = vshrl.u32 %v3129, 7
    %v3131 = vsub.s32 %v3128, %v3130
    %v3132 = vrot.slane %v3118, %v3131
    %v3135 = vadd.f32 %v2934, %v3125
    %v3136 = vadd.f32 %v2936, %v3132
    %v3137 = vxor.u32 %v3135, 2147483648
    %v3138 = vxor.u32 %v3136, 2147483648
    %v3139 = vmul.f32 %v3137, 1.442695
    %v3140 = vpow.pop %v3139
    %v3141 = vmul.f32 %v3138, 1.442695
    %v3142 = vpow.pop %v3141
    %v3143 = vadd.f32 %v3140, 1.0
    %v3144 = vadd.f32 %v3142, 1.0
    %v3145 = vrcp.pop %v3143
    %v3146 = vmul.f32 1.0, %v3145
    %v3147 = vrcp.pop %v3144
    %v3148 = vmul.f32 1.0, %v3147
    %v3151 = vrot.slane %v3135, 1
    %v3152 = vrot.slane %v3136, 1
    %v3155 = vxor.u32 %v3151, 2147483648
    %v3156 = vxor.u32 %v3152, 2147483648
    %v3157 = vmul.f32 %v3155, 1.442695
    %v3158 = vpow.pop %v3157
    %v3159 = vmul.f32 %v3156, 1.442695
    %v3160 = vpow.pop %v3159
    %v3161 = vadd.f32 %v3158, 1.0
    %v3162 = vadd.f32 %v3160, 1.0
    %v3163 = vrcp.pop %v3161
    %v3164 = vmul.f32 1.0, %v3163
    %v3165 = vrcp.pop %v3162
    %v3166 = vmul.f32 1.0, %v3165
    %v3167 = vrot.slane %v3135, 2
    %v3168 = vrot.slane %v3136, 2
    %v3171 = vtanh.pop %v3167
    %v3172 = vtanh.pop %v3168
    %v3173 = vrot.slane %v3135, 3
    %v3174 = vrot.slane %v3136, 3
    %v3177 = vxor.u32 %v3173, 2147483648
    %v3178 = vxor.u32 %v3174, 2147483648
    %v3179 = vmul.f32 %v3177, 1.442695
    %v3180 = vpow.pop %v3179
    %v3181 = vmul.f32 %v3178, 1.442695
    %v3182 = vpow.pop %v3181
    %v3183 = vadd.f32 %v3180, 1.0
    %v3184 = vadd.f32 %v3182, 1.0
    %v3185 = vrcp.pop %v3183
    %v3186 = vmul.f32 1.0, %v3185
    %v3187 = vrcp.pop %v3184
    %v3188 = vmul.f32 1.0, %v3187
    %v3189 = vmul.f32 %v3164, %v2927
    %v3190 = vmul.f32 %v3166, %v2928
    %v3191 = vmul.f32 %v3146, %v3171
    %v3192 = vmul.f32 %v3148, %v3172
    %v3193 = vadd.f32 %v3189, %v3191
    %v3194 = vadd.f32 %v3190, %v3192
    %v3195 = vtanh.pop %v3193
    %v3196 = vtanh.pop %v3194
    %v3197 = vmul.f32 %v3186, %v3195
    %v3198 = vmul.f32 %v3188, %v3196
    %s3199 = scalar_lea.vmem [#allocation2], 7
    %v3200 = vld [vmem:[%s3199] ss:$8 sm:$0xf]
    %s3201 = scalar_lea.vmem [#allocation2], 39
    %v3202 = vld [vmem:[%s3201] ss:$8 sm:$0xf]
    %v3205 = vcombine.low %v3197, %v3198
    %v3207 = vunpack.c.l.s4 1966171168
    %v3208 = vunpack.c.0.s8 %v3207
    %v3209 = vlaneseq
    %v3210 = vshrl.u32 %v3209, 7
    %v3211 = vsub.s32 %v3208, %v3210
    %v3212 = vrot.slane %v3205, %v3211
    %v3214 = vunpack.c.l.s4 1966171168
    %v3215 = vunpack.c.0.s8 %v3214
    %v3216 = vlaneseq
    %v3217 = vshrl.u32 %v3216, 7
    %v3218 = vsub.s32 %v3215, %v3217
    %v3219 = vrot.slane %v3212, %v3218
    %3221 = vmatprep.subr.mxu0 %v1296
    %3222 = vmatpush1.msra.mxu0 %v1295
    %3223 = vmatprep.subr.mxu0 %v1300
    %3224 = vmatpush1.msra.mxu0 %v1299
    %3225 = vmatprep.subr.mxu0 %v1304
    %3226 = vmatpush1.msra.mxu0 %v1303
    %3227 = vmatprep.subr.mxu0 %v1308
    %3228 = vmatpush1.msra.mxu0 %v1307
    %3229 = vmatprep.subr.mxu0 %v1312
    %3230 = vmatpush1.msra.mxu0 %v1311
    %3231 = vmatprep.subr.mxu0 %v1316
    %3232 = vmatpush1.msra.mxu0 %v1315
    %3233 = vmatprep.subr.mxu0 %v1320
    %3234 = vmatpush1.msra.mxu0 %v1319
    %3235 = vmatprep.subr.mxu0 %v1324
    %3236 = vmatpush1.msra.mxu0 %v1323
    %3237 = vmatprep.subr.mxu0 %v1328
    %3238 = vmatpush1.msra.mxu0 %v1327
    %3239 = vmatprep.subr.mxu0 %v1332
    %3240 = vmatpush1.msra.mxu0 %v1331
    %3241 = vmatprep.subr.mxu0 %v1336
    %3242 = vmatpush1.msra.mxu0 %v1335
    %3243 = vmatprep.subr.mxu0 %v1340
    %3244 = vmatpush1.msra.mxu0 %v1339
    %3245 = vmatprep.subr.mxu0 %v1344
    %3246 = vmatpush1.msra.mxu0 %v1343
    %3247 = vmatprep.subr.mxu0 %v1348
    %3248 = vmatpush1.msra.mxu0 %v1347
    %3249 = vmatprep.subr.mxu0 %v1352
    %3250 = vmatpush1.msra.mxu0 %v1351
    %3251 = vmatprep.subr.mxu0 %v1356
    %3252 = vmatpush1.msra.mxu0 %v1355
    %3253 = vmatprep.subr.mxu0 0.0
    %3254 = vmatpush1.msra.mxu0 0.0
    %3255 = vmatprep.subr.mxu0 0.0
    %3256 = vmatpush1.msra.mxu0 0.0
    %3257 = vmatprep.subr.mxu0 0.0
    %3258 = vmatpush1.msra.mxu0 0.0
    %3259 = vmatprep.subr.mxu0 0.0
    %3260 = vmatpush1.msra.mxu0 0.0
    %3261 = vmatprep.subr.mxu0 0.0
    %3262 = vmatpush1.msra.mxu0 0.0
    %3263 = vmatprep.subr.mxu0 0.0
    %3264 = vmatpush1.msra.mxu0 0.0
    %3265 = vmatprep.subr.mxu0 0.0
    %3266 = vmatpush1.msra.mxu0 0.0
    %3267 = vmatprep.subr.mxu0 0.0
    %3268 = vmatpush1.msra.mxu0 0.0
    %3269 = vmatprep.subr.mxu0 0.0
    %3270 = vmatpush1.msra.mxu0 0.0
    %3271 = vmatprep.subr.mxu0 0.0
    %3272 = vmatpush1.msra.mxu0 0.0
    %3273 = vmatprep.subr.mxu0 0.0
    %3274 = vmatpush1.msra.mxu0 0.0
    %3275 = vmatprep.subr.mxu0 0.0
    %3276 = vmatpush1.msra.mxu0 0.0
    %3277 = vmatprep.subr.mxu0 0.0
    %3278 = vmatpush1.msra.mxu0 0.0
    %3279 = vmatprep.subr.mxu0 0.0
    %3280 = vmatpush1.msra.mxu0 0.0
    %3281 = vmatprep.subr.mxu0 0.0
    %3282 = vmatpush1.msra.mxu0 0.0
    %3283 = vmatprep.subr.mxu0 0.0
    %3284 = vmatpush1.msra.mxu0 0.0
    %3285 = vmatprep.mubr.f32.mxu0 0.0
    %3286 = vmatmul.mubr.f32.gmra.mrb[0].mxu0 %v3219
    %v3287 = vpop.f32.mrb[0].mxu0
    %v3288 = vadd.f32 0.0, %v3287
    %v3289 = vpop.f32.mrb[0].mxu0
    %v3290 = vadd.f32 0.0, %v3289
    %3291 = vdwg.mxu0
    %3292 = vmatprep.subr.mxu0 %v1298
    %3293 = vmatpush1.msra.mxu0 %v1297
    %3294 = vmatprep.subr.mxu0 %v1302
    %3295 = vmatpush1.msra.mxu0 %v1301
    %3296 = vmatprep.subr.mxu0 %v1306
    %3297 = vmatpush1.msra.mxu0 %v1305
    %3298 = vmatprep.subr.mxu0 %v1310
    %3299 = vmatpush1.msra.mxu0 %v1309
    %3300 = vmatprep.subr.mxu0 %v1314
    %3301 = vmatpush1.msra.mxu0 %v1313
    %3302 = vmatprep.subr.mxu0 %v1318
    %3303 = vmatpush1.msra.mxu0 %v1317
    %3304 = vmatprep.subr.mxu0 %v1322
    %3305 = vmatpush1.msra.mxu0 %v1321
    %3306 = vmatprep.subr.mxu0 %v1326
    %3307 = vmatpush1.msra.mxu0 %v1325
    %3308 = vmatprep.subr.mxu0 %v1330
    %3309 = vmatpush1.msra.mxu0 %v1329
    %3310 = vmatprep.subr.mxu0 %v1334
    %3311 = vmatpush1.msra.mxu0 %v1333
    %3312 = vmatprep.subr.mxu0 %v1338
    %3313 = vmatpush1.msra.mxu0 %v1337
    %3314 = vmatprep.subr.mxu0 %v1342
    %3315 = vmatpush1.msra.mxu0 %v1341
    %3316 = vmatprep.subr.mxu0 %v1346
    %3317 = vmatpush1.msra.mxu0 %v1345
    %3318 = vmatprep.subr.mxu0 %v1350
    %3319 = vmatpush1.msra.mxu0 %v1349
    %3320 = vmatprep.subr.mxu0 %v1354
    %3321 = vmatpush1.msra.mxu0 %v1353
    %3322 = vmatprep.subr.mxu0 %v1358
    %3323 = vmatpush1.msra.mxu0 %v1357
    %3324 = vmatprep.subr.mxu0 0.0
    %3325 = vmatpush1.msra.mxu0 0.0
    %3326 = vmatprep.subr.mxu0 0.0
    %3327 = vmatpush1.msra.mxu0 0.0
    %3328 = vmatprep.subr.mxu0 0.0
    %3329 = vmatpush1.msra.mxu0 0.0
    %3330 = vmatprep.subr.mxu0 0.0
    %3331 = vmatpush1.msra.mxu0 0.0
    %3332 = vmatprep.subr.mxu0 0.0
    %3333 = vmatpush1.msra.mxu0 0.0
    %3334 = vmatprep.subr.mxu0 0.0
    %3335 = vmatpush1.msra.mxu0 0.0
    %3336 = vmatprep.subr.mxu0 0.0
    %3337 = vmatpush1.msra.mxu0 0.0
    %3338 = vmatprep.subr.mxu0 0.0
    %3339 = vmatpush1.msra.mxu0 0.0
    %3340 = vmatprep.subr.mxu0 0.0
    %3341 = vmatpush1.msra.mxu0 0.0
    %3342 = vmatprep.subr.mxu0 0.0
    %3343 = vmatpush1.msra.mxu0 0.0
    %3344 = vmatprep.subr.mxu0 0.0
    %3345 = vmatpush1.msra.mxu0 0.0
    %3346 = vmatprep.subr.mxu0 0.0
    %3347 = vmatpush1.msra.mxu0 0.0
    %3348 = vmatprep.subr.mxu0 0.0
    %3349 = vmatpush1.msra.mxu0 0.0
    %3350 = vmatprep.subr.mxu0 0.0
    %3351 = vmatpush1.msra.mxu0 0.0
    %3352 = vmatprep.subr.mxu0 0.0
    %3353 = vmatpush1.msra.mxu0 0.0
    %3354 = vmatprep.subr.mxu0 0.0
    %3355 = vmatpush1.msra.mxu0 0.0
    %3356 = vmatprep.mubr.f32.mxu0 0.0
    %3357 = vmatmul.mubr.f32.gmra.mrb[0].mxu0 %v3219
    %v3358 = vpop.f32.mrb[0].mxu0
    %v3359 = vadd.f32 0.0, %v3358
    %v3360 = vpop.f32.mrb[0].mxu0
    %v3361 = vadd.f32 0.0, %v3360
    %3362 = vdwg.mxu0
    %v3367 = vcombine.low %v3288, %v3290
    %v3368 = vcombine.low %v3359, %v3361
    %v3370 = vunpack.c.l.s4 1966171168
    %v3371 = vunpack.c.0.s8 %v3370
    %v3372 = vlaneseq
    %v3373 = vshrl.u32 %v3372, 7
    %v3374 = vsub.s32 %v3371, %v3373
    %v3375 = vrot.slane %v3367, %v3374
    %v3377 = vunpack.c.l.s4 1966171168
    %v3378 = vunpack.c.0.s8 %v3377
    %v3379 = vlaneseq
    %v3380 = vshrl.u32 %v3379, 7
    %v3381 = vsub.s32 %v3378, %v3380
    %v3382 = vrot.slane %v3368, %v3381
    %v3383 = vcombine.low %v3375, %v3382
    %v3384 = vcombine.high %v3375, %v3382
    %v3386 = vunpack.c.l.s4 1966171168
    %v3387 = vunpack.c.0.s8 %v3386
    %v3388 = vlaneseq
    %v3389 = vshrl.u32 %v3388, 7
    %v3390 = vsub.s32 %v3387, %v3389
    %v3391 = vrot.slane %v3383, %v3390
    %v3393 = vunpack.c.l.s4 1966171168
    %v3394 = vunpack.c.0.s8 %v3393
    %v3395 = vlaneseq
    %v3396 = vshrl.u32 %v3395, 7
    %v3397 = vsub.s32 %v3394, %v3396
    %v3398 = vrot.slane %v3384, %v3397
    %v3401 = vadd.f32 %v3200, %v3391
    %v3402 = vadd.f32 %v3202, %v3398
    %v3403 = vxor.u32 %v3401, 2147483648
    %v3404 = vxor.u32 %v3402, 2147483648
    %v3405 = vmul.f32 %v3403, 1.442695
    %v3406 = vpow.pop %v3405
    %v3407 = vmul.f32 %v3404, 1.442695
    %v3408 = vpow.pop %v3407
    %v3409 = vadd.f32 %v3406, 1.0
    %v3410 = vadd.f32 %v3408, 1.0
    %v3411 = vrcp.pop %v3409
    %v3412 = vmul.f32 1.0, %v3411
    %v3413 = vrcp.pop %v3410
    %v3414 = vmul.f32 1.0, %v3413
    %v3417 = vrot.slane %v3401, 1
    %v3418 = vrot.slane %v3402, 1
    %v3421 = vxor.u32 %v3417, 2147483648
    %v3422 = vxor.u32 %v3418, 2147483648
    %v3423 = vmul.f32 %v3421, 1.442695
    %v3424 = vpow.pop %v3423
    %v3425 = vmul.f32 %v3422, 1.442695
    %v3426 = vpow.pop %v3425
    %v3427 = vadd.f32 %v3424, 1.0
    %v3428 = vadd.f32 %v3426, 1.0
    %v3429 = vrcp.pop %v3427
    %v3430 = vmul.f32 1.0, %v3429
    %v3431 = vrcp.pop %v3428
    %v3432 = vmul.f32 1.0, %v3431
    %v3433 = vrot.slane %v3401, 2
    %v3434 = vrot.slane %v3402, 2
    %v3437 = vtanh.pop %v3433
    %v3438 = vtanh.pop %v3434
    %v3439 = vrot.slane %v3401, 3
    %v3440 = vrot.slane %v3402, 3
    %v3443 = vxor.u32 %v3439, 2147483648
    %v3444 = vxor.u32 %v3440, 2147483648
    %v3445 = vmul.f32 %v3443, 1.442695
    %v3446 = vpow.pop %v3445
    %v3447 = vmul.f32 %v3444, 1.442695
    %v3448 = vpow.pop %v3447
    %v3449 = vadd.f32 %v3446, 1.0
    %v3450 = vadd.f32 %v3448, 1.0
    %v3451 = vrcp.pop %v3449
    %v3452 = vmul.f32 1.0, %v3451
    %v3453 = vrcp.pop %v3450
    %v3454 = vmul.f32 1.0, %v3453
    %v3455 = vmul.f32 %v3430, %v3193
    %v3456 = vmul.f32 %v3432, %v3194
    %v3457 = vmul.f32 %v3412, %v3437
    %v3458 = vmul.f32 %v3414, %v3438
    %v3459 = vadd.f32 %v3455, %v3457
    %v3460 = vadd.f32 %v3456, %v3458
    %v3461 = vtanh.pop %v3459
    %v3462 = vtanh.pop %v3460
    %v3463 = vmul.f32 %v3452, %v3461
    %v3464 = vmul.f32 %v3454, %v3462
    %v3465 = vld [vmem:[#allocation8] sm:$0xff]
    %v3466 = vld [vmem:[#allocation8 + $0x8] sm:$0xff]
    %v3467 = vld [vmem:[#allocation8 + $0x10] sm:$0xff]
    %v3468 = vld [vmem:[#allocation8 + $0x18] sm:$0xff]
    %v3469 = vld [vmem:[#allocation8 + $0x20] sm:$0xff]
    %v3470 = vld [vmem:[#allocation8 + $0x28] sm:$0xff]
    %v3471 = vld [vmem:[#allocation8 + $0x30] sm:$0xff]
    %v3472 = vld [vmem:[#allocation8 + $0x38] sm:$0xff]
    %v3473 = vld [vmem:[#allocation8 + $0x40] sm:$0xff]
    %v3474 = vld [vmem:[#allocation8 + $0x48] sm:$0xff]
    %v3475 = vld [vmem:[#allocation8 + $0x50] sm:$0xff]
    %v3476 = vld [vmem:[#allocation8 + $0x58] sm:$0xff]
    %v3477 = vld [vmem:[#allocation8 + $0x60] sm:$0xff]
    %v3478 = vld [vmem:[#allocation8 + $0x68] sm:$0xff]
    %v3479 = vld [vmem:[#allocation8 + $0x70] sm:$0xff]
    %v3480 = vld [vmem:[#allocation8 + $0x78] sm:$0xff]
    %v3481 = vld [vmem:[#allocation9] sm:$0x1]
    %v3483 = vlaneseq
    %v3484 = vshrl.u32 %v3483, 7
    %v3485 = vsub.s32 0, %v3484
    %v3486 = vrot.slane %v3481, %v3485
    %v3490 = vcombine.low %v3463, %v3464
    %v3492 = vunpack.c.l.s4 1966171168
    %v3493 = vunpack.c.0.s8 %v3492
    %v3494 = vlaneseq
    %v3495 = vshrl.u32 %v3494, 7
    %v3496 = vsub.s32 %v3493, %v3495
    %v3497 = vrot.slane %v3490, %v3496
    %v3499 = vunpack.c.l.s4 1966171168
    %v3500 = vunpack.c.0.s8 %v3499
    %v3501 = vlaneseq
    %v3502 = vshrl.u32 %v3501, 7
    %v3503 = vsub.s32 %v3500, %v3502
    %v3504 = vrot.slane %v3497, %v3503
    %3506 = vmatprep.subr.mxu0 0.0
    %3507 = vmatpush1.msra.mxu0 %v3465
    %3508 = vmatprep.subr.mxu0 0.0
    %3509 = vmatpush1.msra.mxu0 %v3466
    %3510 = vmatprep.subr.mxu0 0.0
    %3511 = vmatpush1.msra.mxu0 %v3467
    %3512 = vmatprep.subr.mxu0 0.0
    %3513 = vmatpush1.msra.mxu0 %v3468
    %3514 = vmatprep.subr.mxu0 0.0
    %3515 = vmatpush1.msra.mxu0 %v3469
    %3516 = vmatprep.subr.mxu0 0.0
    %3517 = vmatpush1.msra.mxu0 %v3470
    %3518 = vmatprep.subr.mxu0 0.0
    %3519 = vmatpush1.msra.mxu0 %v3471
    %3520 = vmatprep.subr.mxu0 0.0
    %3521 = vmatpush1.msra.mxu0 %v3472
    %3522 = vmatprep.subr.mxu0 0.0
    %3523 = vmatpush1.msra.mxu0 %v3473
    %3524 = vmatprep.subr.mxu0 0.0
    %3525 = vmatpush1.msra.mxu0 %v3474
    %3526 = vmatprep.subr.mxu0 0.0
    %3527 = vmatpush1.msra.mxu0 %v3475
    %3528 = vmatprep.subr.mxu0 0.0
    %3529 = vmatpush1.msra.mxu0 %v3476
    %3530 = vmatprep.subr.mxu0 0.0
    %3531 = vmatpush1.msra.mxu0 %v3477
    %3532 = vmatprep.subr.mxu0 0.0
    %3533 = vmatpush1.msra.mxu0 %v3478
    %3534 = vmatprep.subr.mxu0 0.0
    %3535 = vmatpush1.msra.mxu0 %v3479
    %3536 = vmatprep.subr.mxu0 0.0
    %3537 = vmatpush1.msra.mxu0 %v3480
    %3538 = vmatprep.subr.mxu0 0.0
    %3539 = vmatpush1.msra.mxu0 0.0
    %3540 = vmatprep.subr.mxu0 0.0
    %3541 = vmatpush1.msra.mxu0 0.0
    %3542 = vmatprep.subr.mxu0 0.0
    %3543 = vmatpush1.msra.mxu0 0.0
    %3544 = vmatprep.subr.mxu0 0.0
    %3545 = vmatpush1.msra.mxu0 0.0
    %3546 = vmatprep.subr.mxu0 0.0
    %3547 = vmatpush1.msra.mxu0 0.0
    %3548 = vmatprep.subr.mxu0 0.0
    %3549 = vmatpush1.msra.mxu0 0.0
    %3550 = vmatprep.subr.mxu0 0.0
    %3551 = vmatpush1.msra.mxu0 0.0
    %3552 = vmatprep.subr.mxu0 0.0
    %3553 = vmatpush1.msra.mxu0 0.0
    %3554 = vmatprep.subr.mxu0 0.0
    %3555 = vmatpush1.msra.mxu0 0.0
    %3556 = vmatprep.subr.mxu0 0.0
    %3557 = vmatpush1.msra.mxu0 0.0
    %3558 = vmatprep.subr.mxu0 0.0
    %3559 = vmatpush1.msra.mxu0 0.0
    %3560 = vmatprep.subr.mxu0 0.0
    %3561 = vmatpush1.msra.mxu0 0.0
    %3562 = vmatprep.subr.mxu0 0.0
    %3563 = vmatpush1.msra.mxu0 0.0
    %3564 = vmatprep.subr.mxu0 0.0
    %3565 = vmatpush1.msra.mxu0 0.0
    %3566 = vmatprep.subr.mxu0 0.0
    %3567 = vmatpush1.msra.mxu0 0.0
    %3568 = vmatprep.subr.mxu0 0.0
    %3569 = vmatpush1.msra.mxu0 0.0
    %3570 = vmatprep.mubr.f32.mxu0 0.0
    %3571 = vmatmul.mubr.f32.gmra.mrb[0].mxu0 %v3504
    %v3572 = vpop.f32.mrb[0].mxu0
    %v3573 = vadd.f32 %v3486, %v3572
    %v3574 = vpop.f32.mrb[0].mxu0
    %3575 = vdwg.mxu0
    %3576 = vst [vmem:[#allocation11] sm:$0x3] %v3573
    // Predicated region
    $region70: #{lstm_hcp_forward.1} parent=1 // pred_check
      _
    $region71: #{lstm_hcp_forward.1} parent=1 // pred_check_branch
      %3578 = sbr.rel (0) target = $region73
    $region72: #{lstm_hcp_forward.1} parent=1 // pred_region
      %s3580 = ssub.s32 32, 32
      %3581 = vsyncadd [#allocation5], %s3580
      %s3583 = sshll.u32 [#allocation11], 4
      %s3584 = int_to_ptr.vmem [resolvable:$true] %s3583
      %3586 = dma.vmem_to_hbm [thread:$0]  %s3584, 32, %s13, [#allocation5]
    $region73: #{lstm_hcp_forward.1} parent=1 // pred_fallthru
      _
    // Predicated region
    $region74: #{lstm_hcp_forward.1} parent=1 // pred_check
      _
    $region75: #{lstm_hcp_forward.1} parent=1 // pred_check_branch
      %3588 = sbr.rel (0) target = $region77
    $region76: #{lstm_hcp_forward.1} parent=1 // pred_region
      %3589 = dma.done [#allocation5], 32
    $region77: #{lstm_hcp_forward.1} parent=1 // pred_fallthru
      _
    %3590 = vsyncpa [#allocation4], 1
    %3591 = vsyncpa [#allocation7], 1
    %3592 = vsyncpa [#allocation10], 1
    %3593 = vsyncpa [#allocation5], 1

</llo_original>
